<compile_context>
chip_gen: v5e
topology: v5e:2x2
jax: 0.10.0
libtpu: 0.0.40
codegen_flags: <defaults>
</compile_context>

<pallas_src>
import jax
import jax.numpy as jnp
from jax.experimental import pallas as pl
from jax.experimental.pallas import tpu as pltpu


# ----------------------------------------------------------------------------
# Pallas kernel: whole NeRF MLP for one row-tile of samples.
# ----------------------------------------------------------------------------
def nerf_kernel(in_ref, wfront_ref, wt_ref, bt_ref, wfs_ref, bfs_ref,
                wc1f_ref, wrgb_ref, bcol_ref, out_ref):
    bf16 = jnp.bfloat16
    F = wt_ref.shape[1]          # feature width
    C = wrgb_ref.shape[0]        # color hidden / packed-output width (128)

    relu = lambda v: jnp.maximum(v, 0.0)

    def mx(a_bf, w_bf):          # bf16 operands, f32 accumulation on the MXU
        return jnp.dot(a_bf, w_bf, preferred_element_type=jnp.float32)

    inp = in_ref[...]                                   # (tm, pos+view) bf16

    # Fused front projection: [pos | view] @ [[w0 | w4p | 0], [0 | 0 | wc1v]]
    front = mx(inp, wfront_ref[...])                    # (tm, 2F + C) f32
    p0 = front[:, :F]                                   # layer-0 pre-activation
    p4 = front[:, F:2 * F].astype(bf16)                 # layer-4 skip term
    pv = front[:, 2 * F:].astype(bf16)                  # view @ Wc1v term

    # Trunk layers 0..8 (layer 4 uses split-weight concat: x@w4x + pos@w4p).
    # Bias-add + ReLU in bf16 keeps VALU passes halved on v6e/v7x.
    x = relu(p0.astype(bf16) + bt_ref[0])
    for l in range(8):
        x = mx(x, wt_ref[l]).astype(bf16) + bt_ref[l + 1]
        if l == 3:                                      # layer 4 skip connection
            x = x + p4
        x = relu(x)

    # Fused feature + sigma head: cols 0..F-1 = feature_head(x),
    # col F = sigma logit, cols F+1.. = 0.
    fs = mx(x, wfs_ref[...]).astype(bf16) + bfs_ref[...]   # (tm, F + C)
    feat = fs[:, :F]
    sig_half = fs[:, F:]                                    # sigma at lane 0

    # Color layer 1: cat([feat, view]) @ Wc1 == feat @ Wc1f + view @ Wc1v.
    h = relu(mx(feat, wc1f_ref[...]).astype(bf16) + pv + bcol_ref[0])

    # rgb head padded into lanes 1..3 of a C-wide slab (lane 0 is sigma's slot).
    rgb_half = mx(h, wrgb_ref[...]).astype(bf16) + bcol_ref[1]

    lane = jax.lax.broadcasted_iota(jnp.int32, sig_half.shape, 1)
    # lane 0: relu(sigma); lanes 1..3: sigmoid(rgb); lanes 4..C-1 hold the
    # padding value sigmoid(0)=0.5 and are sliced away by the wrapper.
    out = jnp.where(lane == 0, relu(sig_half), jax.nn.sigmoid(rgb_half))
    out_ref[...] = out.astype(out_ref.dtype)


# ----------------------------------------------------------------------------
# Parameter preparation (run ONCE, outside the per-call path).
# ----------------------------------------------------------------------------
def prepare_kernel_params(params):
    (w0, b0, w1, b1, w2, b2, w3, b3,
     w4x, w4p, b4,
     w5, b5, w6, b6, w7, b7, w8, b8,
     wsig, bsig, wfeat, bfeat,
     wc1f, wc1v, bc1, wc2, bc2) = params

    bf = lambda a: a.astype(jnp.bfloat16)
    pos_dim, F = w0.shape
    view_dim = wc1v.shape[0]
    C = wc2.shape[0]                      # color hidden width (128)
    assert F % 128 == 0 and C % 128 == 0, "feat/color widths must be lane-aligned"

    # Block-diagonal front projection: packed [pos|view] @ wfront = [p0|p4|pv].
    wfront = jnp.zeros((pos_dim + view_dim, 2 * F + C), jnp.float32)
    wfront = wfront.at[:pos_dim, :F].set(w0)
    wfront = wfront.at[:pos_dim, F:2 * F].set(w4p)
    wfront = wfront.at[pos_dim:, 2 * F:].set(wc1v)

    # Trunk weight / bias stacks (one DMA descriptor each).
    wt = jnp.stack([w1, w2, w3, w4x, w5, w6, w7, w8], axis=0)            # (8,F,F)
    bt = jnp.concatenate([b0, b1, b2, b3, b4, b5, b6, b7, b8], axis=0)   # (9,F)

    # Fused feature + sigma head: [wfeat | wsig | 0] so the 256-wide MXUs on
    # v6e/v7x compute sigma for free (neutral on v5e's 128-wide MXU).
    wfs = jnp.zeros((F, F + C), jnp.float32)
    wfs = wfs.at[:, :F].set(wfeat).at[:, F:F + 1].set(wsig)
    bfs = jnp.zeros((1, F + C), jnp.float32)
    bfs = bfs.at[:, :F].set(bfeat).at[:, F:F + 1].set(bsig)

    # rgb head padded to lanes 1..3 of the C-wide output slab.
    wrgb = jnp.zeros((C, C), jnp.float32).at[:, 1:4].set(wc2)
    brgb = jnp.zeros((1, C), jnp.float32).at[:, 1:4].set(bc2)
    bcol = jnp.concatenate([bc1, brgb], axis=0)                          # (2,C)

    return (bf(wfront), bf(wt), bf(bt), bf(wfs), bf(bfs),
            bf(wc1f), bf(wrgb), bf(bcol))


# ----------------------------------------------------------------------------
# Wrapper
# ----------------------------------------------------------------------------
def nerf_forward(pos, view_dir, kparams, *, tile_m=None):
    """pos: [N, pos_dim] f32, view_dir: [N, view_dim] f32 -> (sigma [N,1], rgb [N,3])."""
    wfront, wt, bt, wfs, bfs, wc1f, wrgb, bcol = kparams
    n, pos_dim = pos.shape
    view_dim = view_dir.shape[1]
    C = wrgb.shape[0]

    if tile_m is None:
        # Keep >= ~4 grid steps per TensorCore for pipelining; go big only
        # when N is large enough to amortize per-step overhead.
        tile_m = 1024 if n >= 8192 else 256
    assert tile_m % 16 == 0, "tile_m must be a multiple of 16 (bf16 sublanes)"

    n_pad = ((n + tile_m - 1) // tile_m) * tile_m
    grid = n_pad // tile_m

    # Lane-dense packed bf16 input: pos in lanes [0,pos_dim), view after it.
    packed = jnp.concatenate([pos, view_dir], axis=1).astype(jnp.bfloat16)
    if n_pad != n:
        packed = jnp.pad(packed, ((0, n_pad - n), (0, 0)))
    in_w = pos_dim + view_dim

    row_spec = lambda d: pl.BlockSpec((tile_m, d), lambda i: (i, 0))
    full_spec = lambda a: pl.BlockSpec(a.shape, lambda i: (0,) * a.ndim)

    out = pl.pallas_call(
        nerf_kernel,
        out_shape=jax.ShapeDtypeStruct((n_pad, C), jnp.bfloat16),
        grid=(grid,),
        in_specs=[row_spec(in_w), full_spec(wfront), full_spec(wt),
                  full_spec(bt), full_spec(wfs), full_spec(bfs),
                  full_spec(wc1f), full_spec(wrgb), full_spec(bcol)],
        out_specs=row_spec(C),
        compiler_params=pltpu.CompilerParams(
            dimension_semantics=("parallel",),
        ),
    )(packed, wfront, wt, bt, wfs, bfs, wc1f, wrgb, bcol)

    sigma = out[:n, 0:1].astype(jnp.float32)
    rgb = out[:n, 1:4].astype(jnp.float32)
    return sigma, rgb


# ----------------------------------------------------------------------------
# Deterministic parameter init (PyTorch nn.Linear style: U(-1/sqrt(fan_in), ..))
# ----------------------------------------------------------------------------
def init_linear(key, in_dim, out_dim):
    kw, kb = jax.random.split(key)
    bound = 1.0 / jnp.sqrt(float(in_dim))
    w = jax.random.uniform(kw, (in_dim, out_dim), jnp.float32, -bound, bound)
    b = jax.random.uniform(kb, (1, out_dim), jnp.float32, -bound, bound)
    return w, b


def make_params(key, pos_dim, view_dim, feat_dim):
    keys = jax.random.split(key, 14)
    w0, b0 = init_linear(keys[0], pos_dim, feat_dim)
    w1, b1 = init_linear(keys[1], feat_dim, feat_dim)
    w2, b2 = init_linear(keys[2], feat_dim, feat_dim)
    w3, b3 = init_linear(keys[3], feat_dim, feat_dim)
    # layers[4]: Linear(feat_dim + pos_dim, feat_dim), split weight for the concat
    w4, b4 = init_linear(keys[4], feat_dim + pos_dim, feat_dim)
    w4x, w4p = w4[:feat_dim], w4[feat_dim:]
    w5, b5 = init_linear(keys[5], feat_dim, feat_dim)
    w6, b6 = init_linear(keys[6], feat_dim, feat_dim)
    w7, b7 = init_linear(keys[7], feat_dim, feat_dim)
    w8, b8 = init_linear(keys[8], feat_dim, feat_dim)
    wsig, bsig = init_linear(keys[9], feat_dim, 1)
    wfeat, bfeat = init_linear(keys[10], feat_dim, feat_dim)
    # color_layer1: Linear(feat_dim + view_dim, 128), split for the concat
    wc1, bc1 = init_linear(keys[11], feat_dim + view_dim, 128)
    wc1f, wc1v = wc1[:feat_dim], wc1[feat_dim:]
    wc2, bc2 = init_linear(keys[12], 128, 3)

    return (
        w0, b0, w1, b1, w2, b2, w3, b3,
        w4x, w4p, b4,
        w5, b5, w6, b6, w7, b7, w8, b8,
        wsig, bsig, wfeat, bfeat,
        wc1f, wc1v, bc1, wc2, bc2,
    )


# ----------------------------------------------------------------------------
# References.
#   nerf_reference_matched mirrors the kernel's math (bf16 MXU operands,
#   f32 accumulation, bf16 bias-add/ReLU) -> tight check.
#   nerf_reference_f32 is the straight PyTorch-equivalent f32 forward -> loose
#   sanity check (bf16 math loosens tolerances).
# ----------------------------------------------------------------------------
def nerf_reference_matched(pos, view_dir, params):
    (w0, b0, w1, b1, w2, b2, w3, b3,
     w4x, w4p, b4,
     w5, b5, w6, b6, w7, b7, w8, b8,
     wsig, bsig, wfeat, bfeat,
     wc1f, wc1v, bc1, wc2, bc2) = params

    bf = jnp.bfloat16
    c = lambda a: a.astype(bf)
    relu = lambda v: jnp.maximum(v, 0.0)

    def mm(a, w):
        return jnp.dot(a.astype(bf), c(w), preferred_element_type=jnp.float32)

    p4 = c(mm(pos, w4p))
    pv = c(mm(view_dir, wc1v))

    x = relu(c(mm(pos, w0)) + c(b0))
    x = relu(c(mm(x, w1)) + c(b1))
    x = relu(c(mm(x, w2)) + c(b2))
    x = relu(c(mm(x, w3)) + c(b3))
    x = relu(c(mm(x, w4x)) + p4 + c(b4))
    x = relu(c(mm(x, w5)) + c(b5))
    x = relu(c(mm(x, w6)) + c(b6))
    x = relu(c(mm(x, w7)) + c(b7))
    x = relu(c(mm(x, w8)) + c(b8))

    sigma = relu((c(mm(x, wsig)) + c(bsig)).astype(jnp.float32))
    feat = c(mm(x, wfeat)) + c(bfeat)
    h = relu(c(mm(feat, wc1f)) + pv + c(bc1))
    rgb = jax.nn.sigmoid((c(mm(h, wc2)) + c(bc2)).astype(jnp.float32))
    return sigma, rgb


def nerf_reference_f32(pos, view_dir, params):
    (w0, b0, w1, b1, w2, b2, w3, b3,
     w4x, w4p, b4,
     w5, b5, w6, b6, w7, b7, w8, b8,
     wsig, bsig, wfeat, bfeat,
     wc1f, wc1v, bc1, wc2, bc2) = params
    relu = lambda v: jnp.maximum(v, 0.0)

    x = relu(pos @ w0 + b0)
    x = relu(x @ w1 + b1)
    x = relu(x @ w2 + b2)
    x = relu(x @ w3 + b3)
    x = relu(x @ w4x + pos @ w4p + b4)     # cat([x, pos]) @ W4
    x = relu(x @ w5 + b5)
    x = relu(x @ w6 + b6)
    x = relu(x @ w7 + b7)
    x = relu(x @ w8 + b8)
    sigma = relu(x @ wsig + bsig)
    feat = x @ wfeat + bfeat
    h = relu(feat @ wc1f + view_dir @ wc1v + bc1)   # cat([feat, view]) @ Wc1
    rgb = jax.nn.sigmoid(h @ wc2 + bc2)
    return sigma, rgb


if __name__ == "__main__":
    pos_dim, view_dim, feat_dim = 16, 8, 128      # small synthetic sizes
    num_sample = 2048                              # -> tile_m=256, grid=8

    key = jax.random.PRNGKey(0)
    k_pos, k_view, k_par = jax.random.split(key, 3)
    pos = jax.random.normal(k_pos, (num_sample, pos_dim), jnp.float32)
    view_dir = jax.random.normal(k_view, (num_sample, view_dim), jnp.float32)
    params = make_params(k_par, pos_dim, view_dim, feat_dim)

    # Hoisted out of the per-call path: weight fusion/padding/bf16 cast once.
    kparams = prepare_kernel_params(params)
    forward = jax.jit(nerf_forward, static_argnames=("tile_m",))

    sigma, rgb = forward(pos, view_dir, kparams)
    jax.block_until_ready((sigma, rgb))

    assert sigma.shape == (num_sample, 1) and rgb.shape == (num_sample, 3)

    # Tight check against a reference with the same bf16/f32 math as the kernel.
    sigma_m, rgb_m = nerf_reference_matched(pos, view_dir, params)
    assert jnp.allclose(sigma, sigma_m, atol=2e-2, rtol=5e-2), \
        float(jnp.max(jnp.abs(sigma - sigma_m)))
    assert jnp.allclose(rgb, rgb_m, atol=2e-2, rtol=5e-2), \
        float(jnp.max(jnp.abs(rgb - rgb_m)))

    # Loose end-to-end sanity check against the full-f32 reference.
    sigma_f, rgb_f = nerf_reference_f32(pos, view_dir, params)
    assert jnp.allclose(sigma, sigma_f, atol=1e-1, rtol=1e-1)
    assert jnp.allclose(rgb, rgb_f, atol=1e-1, rtol=1e-1)

    print("KERNEL_OK")
</pallas_src>

<mosaic_0001>
module attributes {stable_mosaic.version = 11 : i64} {
  func.func @nerf_kernel(%arg0: i32, %arg1: memref<256x24xbf16, #tpu.memory_space<vmem>>, %arg2: memref<24x384xbf16, #tpu.memory_space<vmem>>, %arg3: memref<8x128x128xbf16, #tpu.memory_space<vmem>>, %arg4: memref<9x128xbf16, #tpu.memory_space<vmem>>, %arg5: memref<128x256xbf16, #tpu.memory_space<vmem>>, %arg6: memref<1x256xbf16, #tpu.memory_space<vmem>>, %arg7: memref<128x128xbf16, #tpu.memory_space<vmem>>, %arg8: memref<128x128xbf16, #tpu.memory_space<vmem>>, %arg9: memref<2x128xbf16, #tpu.memory_space<vmem>>, %arg10: memref<256x128xbf16, #tpu.memory_space<vmem>>) attributes {dimension_semantics = [#tpu.dimension_semantics<parallel>], iteration_bounds = array<i64: 8>, scalar_prefetch = 0 : i64, scratch_operands = 0 : i64, tpu.core_type = #tpu.core_type<tc>, window_params = [{transform_indices = @transform_0, window_bounds = array<i64: 256, 24>}, {pipeline_mode = #tpu.pipeline_mode<synchronous>, transform_indices = @transform_1, window_bounds = array<i64: 24, 384>}, {pipeline_mode = #tpu.pipeline_mode<synchronous>, transform_indices = @transform_2, window_bounds = array<i64: 8, 128, 128>}, {pipeline_mode = #tpu.pipeline_mode<synchronous>, transform_indices = @transform_3, window_bounds = array<i64: 9, 128>}, {pipeline_mode = #tpu.pipeline_mode<synchronous>, transform_indices = @transform_4, window_bounds = array<i64: 128, 256>}, {pipeline_mode = #tpu.pipeline_mode<synchronous>, transform_indices = @transform_5, window_bounds = array<i64: 1, 256>}, {pipeline_mode = #tpu.pipeline_mode<synchronous>, transform_indices = @transform_6, window_bounds = array<i64: 128, 128>}, {pipeline_mode = #tpu.pipeline_mode<synchronous>, transform_indices = @transform_7, window_bounds = array<i64: 128, 128>}, {pipeline_mode = #tpu.pipeline_mode<synchronous>, transform_indices = @transform_8, window_bounds = array<i64: 2, 128>}, {transform_indices = @transform_9, window_bounds = array<i64: 256, 128>}]} {
    %c0 = arith.constant 0 : index
    %c0_0 = arith.constant 0 : index
    %0 = vector.load %arg1[%c0, %c0_0] : memref<256x24xbf16, #tpu.memory_space<vmem>>, vector<256x24xbf16>
    %c0_1 = arith.constant 0 : index
    %c0_2 = arith.constant 0 : index
    %1 = vector.load %arg2[%c0_1, %c0_2] : memref<24x384xbf16, #tpu.memory_space<vmem>>, vector<24x384xbf16>
    %cst = arith.constant dense<0.000000e+00> : vector<256x384xf32>
    %2 = tpu.matmul %0, %1, %cst {dimension_numbers = #tpu.dot_dimension_numbers<[1], [0], [0], [1], [0, 0, 1, 1], [], []>} : vector<256x24xbf16>, vector<24x384xbf16>, vector<256x384xf32> -> vector<256x384xf32>
    %3 = vector.extract_strided_slice %2 {offsets = [0, 0], sizes = [256, 128], strides = [1, 1]} : vector<256x384xf32> to vector<256x128xf32>
    %4 = vector.extract_strided_slice %2 {offsets = [0, 128], sizes = [256, 128], strides = [1, 1]} : vector<256x384xf32> to vector<256x128xf32>
    %5 = arith.truncf %4 : vector<256x128xf32> to vector<256x128xbf16>
    %6 = vector.extract_strided_slice %2 {offsets = [0, 256], sizes = [256, 128], strides = [1, 1]} : vector<256x384xf32> to vector<256x128xf32>
    %7 = arith.truncf %6 : vector<256x128xf32> to vector<256x128xbf16>
    %8 = arith.truncf %3 : vector<256x128xf32> to vector<256x128xbf16>
    %c0_3 = arith.constant 0 : index
    %c0_4 = arith.constant 0 : index
    %9 = vector.load %arg4[%c0_3, %c0_4] : memref<9x128xbf16, #tpu.memory_space<vmem>>, vector<1x128xbf16>
    %10 = vector.shape_cast %9 : vector<1x128xbf16> to vector<128xbf16>
    %11 = vector.shape_cast %10 : vector<128xbf16> to vector<1x128xbf16>
    %12 = vector.broadcast %11 : vector<1x128xbf16> to vector<256x128xbf16>
    %13 = arith.addf %8, %12 : vector<256x128xbf16>
    %cst_5 = arith.constant 0.000000e+00 : bf16
    %14 = vector.broadcast %cst_5 : bf16 to vector<256x128xbf16>
    %15 = arith.maximumf %13, %14 : vector<256x128xbf16>
    %c0_6 = arith.constant 0 : index
    %c0_7 = arith.constant 0 : index
    %c0_8 = arith.constant 0 : index
    %16 = vector.load %arg3[%c0_6, %c0_7, %c0_8] : memref<8x128x128xbf16, #tpu.memory_space<vmem>>, vector<1x128x128xbf16>
    %17 = vector.shape_cast %16 : vector<1x128x128xbf16> to vector<128x128xbf16>
    %cst_9 = arith.constant dense<0.000000e+00> : vector<256x128xf32>
    %18 = tpu.matmul %15, %17, %cst_9 {dimension_numbers = #tpu.dot_dimension_numbers<[1], [0], [0], [1], [0, 0, 1, 1], [], []>} : vector<256x128xbf16>, vector<128x128xbf16>, vector<256x128xf32> -> vector<256x128xf32>
    %19 = arith.truncf %18 : vector<256x128xf32> to vector<256x128xbf16>
    %c1 = arith.constant 1 : index
    %c0_10 = arith.constant 0 : index
    %20 = vector.load %arg4[%c1, %c0_10] : memref<9x128xbf16, #tpu.memory_space<vmem>>, vector<1x128xbf16>
    %21 = vector.shape_cast %20 : vector<1x128xbf16> to vector<128xbf16>
    %22 = vector.shape_cast %21 : vector<128xbf16> to vector<1x128xbf16>
    %23 = vector.broadcast %22 : vector<1x128xbf16> to vector<256x128xbf16>
    %24 = arith.addf %19, %23 : vector<256x128xbf16>
    %cst_11 = arith.constant 0.000000e+00 : bf16
    %25 = vector.broadcast %cst_11 : bf16 to vector<256x128xbf16>
    %26 = arith.maximumf %24, %25 : vector<256x128xbf16>
    %c1_12 = arith.constant 1 : index
    %c0_13 = arith.constant 0 : index
    %c0_14 = arith.constant 0 : index
    %27 = vector.load %arg3[%c1_12, %c0_13, %c0_14] : memref<8x128x128xbf16, #tpu.memory_space<vmem>>, vector<1x128x128xbf16>
    %28 = vector.shape_cast %27 : vector<1x128x128xbf16> to vector<128x128xbf16>
    %cst_15 = arith.constant dense<0.000000e+00> : vector<256x128xf32>
    %29 = tpu.matmul %26, %28, %cst_15 {dimension_numbers = #tpu.dot_dimension_numbers<[1], [0], [0], [1], [0, 0, 1, 1], [], []>} : vector<256x128xbf16>, vector<128x128xbf16>, vector<256x128xf32> -> vector<256x128xf32>
    %30 = arith.truncf %29 : vector<256x128xf32> to vector<256x128xbf16>
    %c2 = arith.constant 2 : index
    %c0_16 = arith.constant 0 : index
    %31 = vector.load %arg4[%c2, %c0_16] : memref<9x128xbf16, #tpu.memory_space<vmem>>, vector<1x128xbf16>
    %32 = vector.shape_cast %31 : vector<1x128xbf16> to vector<128xbf16>
    %33 = vector.shape_cast %32 : vector<128xbf16> to vector<1x128xbf16>
    %34 = vector.broadcast %33 : vector<1x128xbf16> to vector<256x128xbf16>
    %35 = arith.addf %30, %34 : vector<256x128xbf16>
    %cst_17 = arith.constant 0.000000e+00 : bf16
    %36 = vector.broadcast %cst_17 : bf16 to vector<256x128xbf16>
    %37 = arith.maximumf %35, %36 : vector<256x128xbf16>
    %c2_18 = arith.constant 2 : index
    %c0_19 = arith.constant 0 : index
    %c0_20 = arith.constant 0 : index
    %38 = vector.load %arg3[%c2_18, %c0_19, %c0_20] : memref<8x128x128xbf16, #tpu.memory_space<vmem>>, vector<1x128x128xbf16>
    %39 = vector.shape_cast %38 : vector<1x128x128xbf16> to vector<128x128xbf16>
    %cst_21 = arith.constant dense<0.000000e+00> : vector<256x128xf32>
    %40 = tpu.matmul %37, %39, %cst_21 {dimension_numbers = #tpu.dot_dimension_numbers<[1], [0], [0], [1], [0, 0, 1, 1], [], []>} : vector<256x128xbf16>, vector<128x128xbf16>, vector<256x128xf32> -> vector<256x128xf32>
    %41 = arith.truncf %40 : vector<256x128xf32> to vector<256x128xbf16>
    %c3 = arith.constant 3 : index
    %c0_22 = arith.constant 0 : index
    %42 = vector.load %arg4[%c3, %c0_22] : memref<9x128xbf16, #tpu.memory_space<vmem>>, vector<1x128xbf16>
    %43 = vector.shape_cast %42 : vector<1x128xbf16> to vector<128xbf16>
    %44 = vector.shape_cast %43 : vector<128xbf16> to vector<1x128xbf16>
    %45 = vector.broadcast %44 : vector<1x128xbf16> to vector<256x128xbf16>
    %46 = arith.addf %41, %45 : vector<256x128xbf16>
    %cst_23 = arith.constant 0.000000e+00 : bf16
    %47 = vector.broadcast %cst_23 : bf16 to vector<256x128xbf16>
    %48 = arith.maximumf %46, %47 : vector<256x128xbf16>
    %c3_24 = arith.constant 3 : index
    %c0_25 = arith.constant 0 : index
    %c0_26 = arith.constant 0 : index
    %49 = vector.load %arg3[%c3_24, %c0_25, %c0_26] : memref<8x128x128xbf16, #tpu.memory_space<vmem>>, vector<1x128x128xbf16>
    %50 = vector.shape_cast %49 : vector<1x128x128xbf16> to vector<128x128xbf16>
    %cst_27 = arith.constant dense<0.000000e+00> : vector<256x128xf32>
    %51 = tpu.matmul %48, %50, %cst_27 {dimension_numbers = #tpu.dot_dimension_numbers<[1], [0], [0], [1], [0, 0, 1, 1], [], []>} : vector<256x128xbf16>, vector<128x128xbf16>, vector<256x128xf32> -> vector<256x128xf32>
    %52 = arith.truncf %51 : vector<256x128xf32> to vector<256x128xbf16>
    %c4 = arith.constant 4 : index
    %c0_28 = arith.constant 0 : index
    %53 = vector.load %arg4[%c4, %c0_28] : memref<9x128xbf16, #tpu.memory_space<vmem>>, vector<1x128xbf16>
    %54 = vector.shape_cast %53 : vector<1x128xbf16> to vector<128xbf16>
    %55 = vector.shape_cast %54 : vector<128xbf16> to vector<1x128xbf16>
    %56 = vector.broadcast %55 : vector<1x128xbf16> to vector<256x128xbf16>
    %57 = arith.addf %52, %56 : vector<256x128xbf16>
    %58 = arith.addf %57, %5 : vector<256x128xbf16>
    %cst_29 = arith.constant 0.000000e+00 : bf16
    %59 = vector.broadcast %cst_29 : bf16 to vector<256x128xbf16>
    %60 = arith.maximumf %58, %59 : vector<256x128xbf16>
    %c4_30 = arith.constant 4 : index
    %c0_31 = arith.constant 0 : index
    %c0_32 = arith.constant 0 : index
    %61 = vector.load %arg3[%c4_30, %c0_31, %c0_32] : memref<8x128x128xbf16, #tpu.memory_space<vmem>>, vector<1x128x128xbf16>
    %62 = vector.shape_cast %61 : vector<1x128x128xbf16> to vector<128x128xbf16>
    %cst_33 = arith.constant dense<0.000000e+00> : vector<256x128xf32>
    %63 = tpu.matmul %60, %62, %cst_33 {dimension_numbers = #tpu.dot_dimension_numbers<[1], [0], [0], [1], [0, 0, 1, 1], [], []>} : vector<256x128xbf16>, vector<128x128xbf16>, vector<256x128xf32> -> vector<256x128xf32>
    %64 = arith.truncf %63 : vector<256x128xf32> to vector<256x128xbf16>
    %c5 = arith.constant 5 : index
    %c0_34 = arith.constant 0 : index
    %65 = vector.load %arg4[%c5, %c0_34] : memref<9x128xbf16, #tpu.memory_space<vmem>>, vector<1x128xbf16>
    %66 = vector.shape_cast %65 : vector<1x128xbf16> to vector<128xbf16>
    %67 = vector.shape_cast %66 : vector<128xbf16> to vector<1x128xbf16>
    %68 = vector.broadcast %67 : vector<1x128xbf16> to vector<256x128xbf16>
    %69 = arith.addf %64, %68 : vector<256x128xbf16>
    %cst_35 = arith.constant 0.000000e+00 : bf16
    %70 = vector.broadcast %cst_35 : bf16 to vector<256x128xbf16>
    %71 = arith.maximumf %69, %70 : vector<256x128xbf16>
    %c5_36 = arith.constant 5 : index
    %c0_37 = arith.constant 0 : index
    %c0_38 = arith.constant 0 : index
    %72 = vector.load %arg3[%c5_36, %c0_37, %c0_38] : memref<8x128x128xbf16, #tpu.memory_space<vmem>>, vector<1x128x128xbf16>
    %73 = vector.shape_cast %72 : vector<1x128x128xbf16> to vector<128x128xbf16>
    %cst_39 = arith.constant dense<0.000000e+00> : vector<256x128xf32>
    %74 = tpu.matmul %71, %73, %cst_39 {dimension_numbers = #tpu.dot_dimension_numbers<[1], [0], [0], [1], [0, 0, 1, 1], [], []>} : vector<256x128xbf16>, vector<128x128xbf16>, vector<256x128xf32> -> vector<256x128xf32>
    %75 = arith.truncf %74 : vector<256x128xf32> to vector<256x128xbf16>
    %c6 = arith.constant 6 : index
    %c0_40 = arith.constant 0 : index
    %76 = vector.load %arg4[%c6, %c0_40] : memref<9x128xbf16, #tpu.memory_space<vmem>>, vector<1x128xbf16>
    %77 = vector.shape_cast %76 : vector<1x128xbf16> to vector<128xbf16>
    %78 = vector.shape_cast %77 : vector<128xbf16> to vector<1x128xbf16>
    %79 = vector.broadcast %78 : vector<1x128xbf16> to vector<256x128xbf16>
    %80 = arith.addf %75, %79 : vector<256x128xbf16>
    %cst_41 = arith.constant 0.000000e+00 : bf16
    %81 = vector.broadcast %cst_41 : bf16 to vector<256x128xbf16>
    %82 = arith.maximumf %80, %81 : vector<256x128xbf16>
    %c6_42 = arith.constant 6 : index
    %c0_43 = arith.constant 0 : index
    %c0_44 = arith.constant 0 : index
    %83 = vector.load %arg3[%c6_42, %c0_43, %c0_44] : memref<8x128x128xbf16, #tpu.memory_space<vmem>>, vector<1x128x128xbf16>
    %84 = vector.shape_cast %83 : vector<1x128x128xbf16> to vector<128x128xbf16>
    %cst_45 = arith.constant dense<0.000000e+00> : vector<256x128xf32>
    %85 = tpu.matmul %82, %84, %cst_45 {dimension_numbers = #tpu.dot_dimension_numbers<[1], [0], [0], [1], [0, 0, 1, 1], [], []>} : vector<256x128xbf16>, vector<128x128xbf16>, vector<256x128xf32> -> vector<256x128xf32>
    %86 = arith.truncf %85 : vector<256x128xf32> to vector<256x128xbf16>
    %c7 = arith.constant 7 : index
    %c0_46 = arith.constant 0 : index
    %87 = vector.load %arg4[%c7, %c0_46] : memref<9x128xbf16, #tpu.memory_space<vmem>>, vector<1x128xbf16>
    %88 = vector.shape_cast %87 : vector<1x128xbf16> to vector<128xbf16>
    %89 = vector.shape_cast %88 : vector<128xbf16> to vector<1x128xbf16>
    %90 = vector.broadcast %89 : vector<1x128xbf16> to vector<256x128xbf16>
    %91 = arith.addf %86, %90 : vector<256x128xbf16>
    %cst_47 = arith.constant 0.000000e+00 : bf16
    %92 = vector.broadcast %cst_47 : bf16 to vector<256x128xbf16>
    %93 = arith.maximumf %91, %92 : vector<256x128xbf16>
    %c7_48 = arith.constant 7 : index
    %c0_49 = arith.constant 0 : index
    %c0_50 = arith.constant 0 : index
    %94 = vector.load %arg3[%c7_48, %c0_49, %c0_50] : memref<8x128x128xbf16, #tpu.memory_space<vmem>>, vector<1x128x128xbf16>
    %95 = vector.shape_cast %94 : vector<1x128x128xbf16> to vector<128x128xbf16>
    %cst_51 = arith.constant dense<0.000000e+00> : vector<256x128xf32>
    %96 = tpu.matmul %93, %95, %cst_51 {dimension_numbers = #tpu.dot_dimension_numbers<[1], [0], [0], [1], [0, 0, 1, 1], [], []>} : vector<256x128xbf16>, vector<128x128xbf16>, vector<256x128xf32> -> vector<256x128xf32>
    %97 = arith.truncf %96 : vector<256x128xf32> to vector<256x128xbf16>
    %c8 = arith.constant 8 : index
    %c0_52 = arith.constant 0 : index
    %98 = vector.load %arg4[%c8, %c0_52] : memref<9x128xbf16, #tpu.memory_space<vmem>>, vector<1x128xbf16>
    %99 = vector.shape_cast %98 : vector<1x128xbf16> to vector<128xbf16>
    %100 = vector.shape_cast %99 : vector<128xbf16> to vector<1x128xbf16>
    %101 = vector.broadcast %100 : vector<1x128xbf16> to vector<256x128xbf16>
    %102 = arith.addf %97, %101 : vector<256x128xbf16>
    %cst_53 = arith.constant 0.000000e+00 : bf16
    %103 = vector.broadcast %cst_53 : bf16 to vector<256x128xbf16>
    %104 = arith.maximumf %102, %103 : vector<256x128xbf16>
    %c0_54 = arith.constant 0 : index
    %c0_55 = arith.constant 0 : index
    %105 = vector.load %arg5[%c0_54, %c0_55] : memref<128x256xbf16, #tpu.memory_space<vmem>>, vector<128x256xbf16>
    %cst_56 = arith.constant dense<0.000000e+00> : vector<256x256xf32>
    %106 = tpu.matmul %104, %105, %cst_56 {dimension_numbers = #tpu.dot_dimension_numbers<[1], [0], [0], [1], [0, 0, 1, 1], [], []>} : vector<256x128xbf16>, vector<128x256xbf16>, vector<256x256xf32> -> vector<256x256xf32>
    %107 = arith.truncf %106 : vector<256x256xf32> to vector<256x256xbf16>
    %c0_57 = arith.constant 0 : index
    %c0_58 = arith.constant 0 : index
    %108 = vector.load %arg6[%c0_57, %c0_58] : memref<1x256xbf16, #tpu.memory_space<vmem>>, vector<1x256xbf16>
    %109 = vector.broadcast %108 : vector<1x256xbf16> to vector<256x256xbf16>
    %110 = arith.addf %107, %109 : vector<256x256xbf16>
    %111 = vector.extract_strided_slice %110 {offsets = [0, 0], sizes = [256, 128], strides = [1, 1]} : vector<256x256xbf16> to vector<256x128xbf16>
    %112 = vector.extract_strided_slice %110 {offsets = [0, 128], sizes = [256, 128], strides = [1, 1]} : vector<256x256xbf16> to vector<256x128xbf16>
    %c0_59 = arith.constant 0 : index
    %c0_60 = arith.constant 0 : index
    %113 = vector.load %arg7[%c0_59, %c0_60] : memref<128x128xbf16, #tpu.memory_space<vmem>>, vector<128x128xbf16>
    %cst_61 = arith.constant dense<0.000000e+00> : vector<256x128xf32>
    %114 = tpu.matmul %111, %113, %cst_61 {dimension_numbers = #tpu.dot_dimension_numbers<[1], [0], [0], [1], [0, 0, 1, 1], [], []>} : vector<256x128xbf16>, vector<128x128xbf16>, vector<256x128xf32> -> vector<256x128xf32>
    %115 = arith.truncf %114 : vector<256x128xf32> to vector<256x128xbf16>
    %116 = arith.addf %115, %7 : vector<256x128xbf16>
    %c0_62 = arith.constant 0 : index
    %c0_63 = arith.constant 0 : index
    %117 = vector.load %arg9[%c0_62, %c0_63] : memref<2x128xbf16, #tpu.memory_space<vmem>>, vector<1x128xbf16>
    %118 = vector.shape_cast %117 : vector<1x128xbf16> to vector<128xbf16>
    %119 = vector.shape_cast %118 : vector<128xbf16> to vector<1x128xbf16>
    %120 = vector.broadcast %119 : vector<1x128xbf16> to vector<256x128xbf16>
    %121 = arith.addf %116, %120 : vector<256x128xbf16>
    %cst_64 = arith.constant 0.000000e+00 : bf16
    %122 = vector.broadcast %cst_64 : bf16 to vector<256x128xbf16>
    %123 = arith.maximumf %121, %122 : vector<256x128xbf16>
    %c0_65 = arith.constant 0 : index
    %c0_66 = arith.constant 0 : index
    %124 = vector.load %arg8[%c0_65, %c0_66] : memref<128x128xbf16, #tpu.memory_space<vmem>>, vector<128x128xbf16>
    %cst_67 = arith.constant dense<0.000000e+00> : vector<256x128xf32>
    %125 = tpu.matmul %123, %124, %cst_67 {dimension_numbers = #tpu.dot_dimension_numbers<[1], [0], [0], [1], [0, 0, 1, 1], [], []>} : vector<256x128xbf16>, vector<128x128xbf16>, vector<256x128xf32> -> vector<256x128xf32>
    %126 = arith.truncf %125 : vector<256x128xf32> to vector<256x128xbf16>
    %c1_68 = arith.constant 1 : index
    %c0_69 = arith.constant 0 : index
    %127 = vector.load %arg9[%c1_68, %c0_69] : memref<2x128xbf16, #tpu.memory_space<vmem>>, vector<1x128xbf16>
    %128 = vector.shape_cast %127 : vector<1x128xbf16> to vector<128xbf16>
    %129 = vector.shape_cast %128 : vector<128xbf16> to vector<1x128xbf16>
    %130 = vector.broadcast %129 : vector<1x128xbf16> to vector<256x128xbf16>
    %131 = arith.addf %126, %130 : vector<256x128xbf16>
    %132 = tpu.iota {dimensions = array<i32: 1>} : vector<256x128xi32>
    %c0_i32 = arith.constant 0 : i32
    %133 = vector.broadcast %c0_i32 : i32 to vector<256x128xi32>
    %134 = arith.cmpi eq, %132, %133 : vector<256x128xi32>
    %cst_70 = arith.constant 0.000000e+00 : bf16
    %135 = vector.broadcast %cst_70 : bf16 to vector<256x128xbf16>
    %136 = arith.maximumf %112, %135 : vector<256x128xbf16>
    %137 = arith.negf %131 : vector<256x128xbf16>
    %138 = math.exp %137 : vector<256x128xbf16>
    %cst_71 = arith.constant 1.000000e+00 : bf16
    %139 = vector.broadcast %cst_71 : bf16 to vector<256x128xbf16>
    %140 = arith.addf %139, %138 : vector<256x128xbf16>
    %141 = arith.divf %139, %140 : vector<256x128xbf16>
    %142 = arith.select %134, %136, %141 : vector<256x128xi1>, vector<256x128xbf16>
    %c0_72 = arith.constant 0 : index
    %c0_73 = arith.constant 0 : index
    %143 = vector.load %arg10[%c0_72, %c0_73] : memref<256x128xbf16, #tpu.memory_space<vmem>>, vector<256x128xbf16>
    tpu.vector_store %arg10[%c0_72, %c0_73], %142 {strides = array<i32>} : memref<256x128xbf16, #tpu.memory_space<vmem>>, vector<256x128xbf16>,
    return
  }
  func.func @transform_0(%arg0: i32) -> (i32, i32) {
    %c0_i32 = arith.constant 0 : i32
    %c0_i32_0 = arith.constant 0 : i32
    return %arg0, %c0_i32 : i32, i32
  }
  func.func @transform_1(%arg0: i32) -> (i32, i32) {
    %c0_i32 = arith.constant 0 : i32
    %c0_i32_0 = arith.constant 0 : i32
    %c0_i32_1 = arith.constant 0 : i32
    return %c0_i32, %c0_i32_0 : i32, i32
  }
  func.func @transform_2(%arg0: i32) -> (i32, i32, i32) {
    %c0_i32 = arith.constant 0 : i32
    %c0_i32_0 = arith.constant 0 : i32
    %c0_i32_1 = arith.constant 0 : i32
    %c0_i32_2 = arith.constant 0 : i32
    return %c0_i32, %c0_i32_0, %c0_i32_1 : i32, i32, i32
  }
  func.func @transform_3(%arg0: i32) -> (i32, i32) {
    %c0_i32 = arith.constant 0 : i32
    %c0_i32_0 = arith.constant 0 : i32
    %c0_i32_1 = arith.constant 0 : i32
    return %c0_i32, %c0_i32_0 : i32, i32
  }
  func.func @transform_4(%arg0: i32) -> (i32, i32) {
    %c0_i32 = arith.constant 0 : i32
    %c0_i32_0 = arith.constant 0 : i32
    %c0_i32_1 = arith.constant 0 : i32
    return %c0_i32, %c0_i32_0 : i32, i32
  }
  func.func @transform_5(%arg0: i32) -> (i32, i32) {
    %c0_i32 = arith.constant 0 : i32
    %c0_i32_0 = arith.constant 0 : i32
    %c0_i32_1 = arith.constant 0 : i32
    return %c0_i32, %c0_i32_0 : i32, i32
  }
  func.func @transform_6(%arg0: i32) -> (i32, i32) {
    %c0_i32 = arith.constant 0 : i32
    %c0_i32_0 = arith.constant 0 : i32
    %c0_i32_1 = arith.constant 0 : i32
    return %c0_i32, %c0_i32_0 : i32, i32
  }
  func.func @transform_7(%arg0: i32) -> (i32, i32) {
    %c0_i32 = arith.constant 0 : i32
    %c0_i32_0 = arith.constant 0 : i32
    %c0_i32_1 = arith.constant 0 : i32
    return %c0_i32, %c0_i32_0 : i32, i32
  }
  func.func @transform_8(%arg0: i32) -> (i32, i32) {
    %c0_i32 = arith.constant 0 : i32
    %c0_i32_0 = arith.constant 0 : i32
    %c0_i32_1 = arith.constant 0 : i32
    return %c0_i32, %c0_i32_0 : i32, i32
  }
  func.func @transform_9(%arg0: i32) -> (i32, i32) {
    %c0_i32 = arith.constant 0 : i32
    %c0_i32_0 = arith.constant 0 : i32
    return %arg0, %c0_i32 : i32, i32
  }
}

</mosaic_0001>

<llo_original>
// kernel: nerf_forward.1
$region0: #{nerf_forward.1}
  #allocation0 [shape = 'u32[]', space=smem, size = 0x4, offset = 0x4, fixed_abs, tag = 'smem constant byte address 0x4 - core index']
  #allocation1 [shape = 'u32[72,128]{1,0:T(1,128)}', space=vmem, size = 0x9000, scoped, tag = 'internal scratch']
  %s0 = inlined_call_operand.vmem [shape: bf16[2048,24], index: 0, kind: input, shape index: {}]
  %s1 = inlined_call_operand.vmem [shape: bf16[24,384], index: 1, kind: input, shape index: {}]
  %s2 = inlined_call_operand.vmem [shape: bf16[8,128,128], index: 2, kind: input, shape index: {}]
  %s3 = inlined_call_operand.vmem [shape: bf16[9,128], index: 3, kind: input, shape index: {}]
  %s4 = inlined_call_operand.vmem [shape: bf16[128,256], index: 4, kind: input, shape index: {}]
  %s5 = inlined_call_operand.vmem [shape: bf16[1,256], index: 5, kind: input, shape index: {}]
  %s6 = inlined_call_operand.vmem [shape: bf16[128,128], index: 6, kind: input, shape index: {}]
  %s7 = inlined_call_operand.vmem [shape: bf16[128,128], index: 7, kind: input, shape index: {}]
  %s8 = inlined_call_operand.vmem [shape: bf16[2,128], index: 8, kind: input, shape index: {}]
  %s9 = inlined_call_operand.vmem [shape: bf16[2048,128], index: 9, kind: output, shape index: {}]
  %s10 = sld [smem:[#allocation0]]
  $region69: #{nerf_forward.1} parent=0
    _
  %s12 = ssub.s32 1, %s10
  %s13 = scalar_select 0, %s12, %s10
  loop: start=0, step=1, limit=10
  $region2: #{nerf_forward.1} parent=0 // loop_pre_header
    _
  $region3: #{nerf_forward.1} parent=0 // loop_header
    %s15 = sphi 0, %s19
    %p16 = scmp.ge.s32.totalorder %s15, 10
    %s25 = sphi 0, %s27
    %s28 = sphi 0, %s25
    %s29 = sphi 0, %s28
    %s45 = sphi 0, %s29
    %s49 = sphi 0, %s49
    %s51 = sphi 0, %s49
    %s52 = sphi 0, %s51
    %s66 = sphi 0, %s52
    %s70 = sphi 0, %s70
    %s72 = sphi 0, %s70
    %s73 = sphi 0, %s72
    %s87 = sphi 0, %s73
    %s91 = sphi 0, %s91
    %s93 = sphi 0, %s91
    %s94 = sphi 0, %s93
    %s108 = sphi 0, %s94
    %s112 = sphi 0, %s112
    %s114 = sphi 0, %s112
    %s115 = sphi 0, %s114
    %s129 = sphi 0, %s115
    %s133 = sphi 0, %s133
    %s135 = sphi 0, %s133
    %s136 = sphi 0, %s135
    %s150 = sphi 0, %s136
    %s154 = sphi 0, %s154
    %s156 = sphi 0, %s154
    %s157 = sphi 0, %s156
    %s171 = sphi 0, %s157
    %s175 = sphi 0, %s175
    %s177 = sphi 0, %s175
    %s178 = sphi 0, %s177
    %s192 = sphi 0, %s178
    %s196 = sphi 0, %s196
    %s198 = sphi 0, %s196
    %s199 = sphi 0, %s198
    %s213 = sphi 0, %s199
    %s219 = sphi 0, %s221
    %s222 = sphi 0, %s219
    %s223 = sphi 0, %s222
    %s239 = sphi 0, %s223
  $region4: #{nerf_forward.1} parent=0 // loop_header_branch
    %18 = sbr.rel (%p16) target = $region8
  $region5: #{nerf_forward.1} parent=0 // loop_body
    %s20 = ssub.s32 %s15, 1
    %s21 = ssub.s32 %s15, 2
    %s22 = sadd.s32 %s15, 1
    %s23 = ssub.s32 %s15, %s22
    %p24 = scmp.eq.s32.totalorder %s23, 0
    %s26 = sadd.s32 %s25, 1
    %s27 = scalar_select %p24, %s25, %s26
    %p30 = pneg %p24
    %p31 = scmp.eq.s32.totalorder %s15, 7
    %p32 = por %p30, %p31
    %p33 = scmp.ne.s32.totalorder %s25, %s28
    %p34 = scmp.eq.s32.totalorder %s15, 0
    %p35 = por %p33, %p34
    %p36 = scmp.ne.s32.totalorder %s25, %s28
    %p37 = scmp.eq.s32.totalorder %s20, 7
    %p38 = por %p36, %p37
    %p39 = scmp.ne.s32.totalorder %s28, %s29
    %p40 = scmp.eq.s32.totalorder %s20, 0
    %p41 = por %p39, %p40
    %p42 = scmp.ne.s32.totalorder %s28, %s29
    %p43 = scmp.eq.s32.totalorder %s21, 7
    %p44 = por %p42, %p43
    %p46 = scmp.ne.s32.totalorder %s29, %s45
    %p47 = scmp.eq.s32.totalorder %s21, 0
    %p48 = por %p46, %p47
    %s50 = sadd.s32 %s49, 1
    %p53 = scmp.eq.s32.totalorder %s15, 7
    %p54 = scmp.ne.s32.totalorder %s49, %s51
    %p55 = scmp.eq.s32.totalorder %s15, 0
    %p56 = por %p54, %p55
    %p57 = scmp.ne.s32.totalorder %s49, %s51
    %p58 = scmp.eq.s32.totalorder %s20, 7
    %p59 = por %p57, %p58
    %p60 = scmp.ne.s32.totalorder %s51, %s52
    %p61 = scmp.eq.s32.totalorder %s20, 0
    %p62 = por %p60, %p61
    %p63 = scmp.ne.s32.totalorder %s51, %s52
    %p64 = scmp.eq.s32.totalorder %s21, 7
    %p65 = por %p63, %p64
    %p67 = scmp.ne.s32.totalorder %s52, %s66
    %p68 = scmp.eq.s32.totalorder %s21, 0
    %p69 = por %p67, %p68
    %s71 = sadd.s32 %s70, 1
    %p74 = scmp.eq.s32.totalorder %s15, 7
    %p75 = scmp.ne.s32.totalorder %s70, %s72
    %p76 = scmp.eq.s32.totalorder %s15, 0
    %p77 = por %p75, %p76
    %p78 = scmp.ne.s32.totalorder %s70, %s72
    %p79 = scmp.eq.s32.totalorder %s20, 7
    %p80 = por %p78, %p79
    %p81 = scmp.ne.s32.totalorder %s72, %s73
    %p82 = scmp.eq.s32.totalorder %s20, 0
    %p83 = por %p81, %p82
    %p84 = scmp.ne.s32.totalorder %s72, %s73
    %p85 = scmp.eq.s32.totalorder %s21, 7
    %p86 = por %p84, %p85
    %p88 = scmp.ne.s32.totalorder %s73, %s87
    %p89 = scmp.eq.s32.totalorder %s21, 0
    %p90 = por %p88, %p89
    %s92 = sadd.s32 %s91, 1
    %p95 = scmp.eq.s32.totalorder %s15, 7
    %p96 = scmp.ne.s32.totalorder %s91, %s93
    %p97 = scmp.eq.s32.totalorder %s15, 0
    %p98 = por %p96, %p97
    %p99 = scmp.ne.s32.totalorder %s91, %s93
    %p100 = scmp.eq.s32.totalorder %s20, 7
    %p101 = por %p99, %p100
    %p102 = scmp.ne.s32.totalorder %s93, %s94
    %p103 = scmp.eq.s32.totalorder %s20, 0
    %p104 = por %p102, %p103
    %p105 = scmp.ne.s32.totalorder %s93, %s94
    %p106 = scmp.eq.s32.totalorder %s21, 7
    %p107 = por %p105, %p106
    %p109 = scmp.ne.s32.totalorder %s94, %s108
    %p110 = scmp.eq.s32.totalorder %s21, 0
    %p111 = por %p109, %p110
    %s113 = sadd.s32 %s112, 1
    %p116 = scmp.eq.s32.totalorder %s15, 7
    %p117 = scmp.ne.s32.totalorder %s112, %s114
    %p118 = scmp.eq.s32.totalorder %s15, 0
    %p119 = por %p117, %p118
    %p120 = scmp.ne.s32.totalorder %s112, %s114
    %p121 = scmp.eq.s32.totalorder %s20, 7
    %p122 = por %p120, %p121
    %p123 = scmp.ne.s32.totalorder %s114, %s115
    %p124 = scmp.eq.s32.totalorder %s20, 0
    %p125 = por %p123, %p124
    %p126 = scmp.ne.s32.totalorder %s114, %s115
    %p127 = scmp.eq.s32.totalorder %s21, 7
    %p128 = por %p126, %p127
    %p130 = scmp.ne.s32.totalorder %s115, %s129
    %p131 = scmp.eq.s32.totalorder %s21, 0
    %p132 = por %p130, %p131
    %s134 = sadd.s32 %s133, 1
    %p137 = scmp.eq.s32.totalorder %s15, 7
    %p138 = scmp.ne.s32.totalorder %s133, %s135
    %p139 = scmp.eq.s32.totalorder %s15, 0
    %p140 = por %p138, %p139
    %p141 = scmp.ne.s32.totalorder %s133, %s135
    %p142 = scmp.eq.s32.totalorder %s20, 7
    %p143 = por %p141, %p142
    %p144 = scmp.ne.s32.totalorder %s135, %s136
    %p145 = scmp.eq.s32.totalorder %s20, 0
    %p146 = por %p144, %p145
    %p147 = scmp.ne.s32.totalorder %s135, %s136
    %p148 = scmp.eq.s32.totalorder %s21, 7
    %p149 = por %p147, %p148
    %p151 = scmp.ne.s32.totalorder %s136, %s150
    %p152 = scmp.eq.s32.totalorder %s21, 0
    %p153 = por %p151, %p152
    %s155 = sadd.s32 %s154, 1
    %p158 = scmp.eq.s32.totalorder %s15, 7
    %p159 = scmp.ne.s32.totalorder %s154, %s156
    %p160 = scmp.eq.s32.totalorder %s15, 0
    %p161 = por %p159, %p160
    %p162 = scmp.ne.s32.totalorder %s154, %s156
    %p163 = scmp.eq.s32.totalorder %s20, 7
    %p164 = por %p162, %p163
    %p165 = scmp.ne.s32.totalorder %s156, %s157
    %p166 = scmp.eq.s32.totalorder %s20, 0
    %p167 = por %p165, %p166
    %p168 = scmp.ne.s32.totalorder %s156, %s157
    %p169 = scmp.eq.s32.totalorder %s21, 7
    %p170 = por %p168, %p169
    %p172 = scmp.ne.s32.totalorder %s157, %s171
    %p173 = scmp.eq.s32.totalorder %s21, 0
    %p174 = por %p172, %p173
    %s176 = sadd.s32 %s175, 1
    %p179 = scmp.eq.s32.totalorder %s15, 7
    %p180 = scmp.ne.s32.totalorder %s175, %s177
    %p181 = scmp.eq.s32.totalorder %s15, 0
    %p182 = por %p180, %p181
    %p183 = scmp.ne.s32.totalorder %s175, %s177
    %p184 = scmp.eq.s32.totalorder %s20, 7
    %p185 = por %p183, %p184
    %p186 = scmp.ne.s32.totalorder %s177, %s178
    %p187 = scmp.eq.s32.totalorder %s20, 0
    %p188 = por %p186, %p187
    %p189 = scmp.ne.s32.totalorder %s177, %s178
    %p190 = scmp.eq.s32.totalorder %s21, 7
    %p191 = por %p189, %p190
    %p193 = scmp.ne.s32.totalorder %s178, %s192
    %p194 = scmp.eq.s32.totalorder %s21, 0
    %p195 = por %p193, %p194
    %s197 = sadd.s32 %s196, 1
    %p200 = scmp.eq.s32.totalorder %s15, 7
    %p201 = scmp.ne.s32.totalorder %s196, %s198
    %p202 = scmp.eq.s32.totalorder %s15, 0
    %p203 = por %p201, %p202
    %p204 = scmp.ne.s32.totalorder %s196, %s198
    %p205 = scmp.eq.s32.totalorder %s20, 7
    %p206 = por %p204, %p205
    %p207 = scmp.ne.s32.totalorder %s198, %s199
    %p208 = scmp.eq.s32.totalorder %s20, 0
    %p209 = por %p207, %p208
    %p210 = scmp.ne.s32.totalorder %s198, %s199
    %p211 = scmp.eq.s32.totalorder %s21, 7
    %p212 = por %p210, %p211
    %p214 = scmp.ne.s32.totalorder %s199, %s213
    %p215 = scmp.eq.s32.totalorder %s21, 0
    %p216 = por %p214, %p215
    %s217 = ssub.s32 %s15, %s22
    %p218 = scmp.eq.s32.totalorder %s217, 0
    %s220 = sadd.s32 %s219, 1
    %s221 = scalar_select %p218, %s219, %s220
    %p224 = pneg %p218
    %p225 = scmp.eq.s32.totalorder %s15, 7
    %p226 = por %p224, %p225
    %p227 = scmp.ne.s32.totalorder %s219, %s222
    %p228 = scmp.eq.s32.totalorder %s15, 0
    %p229 = por %p227, %p228
    %p230 = scmp.ne.s32.totalorder %s219, %s222
    %p231 = scmp.eq.s32.totalorder %s20, 7
    %p232 = por %p230, %p231
    %p233 = scmp.ne.s32.totalorder %s222, %s223
    %p234 = scmp.eq.s32.totalorder %s20, 0
    %p235 = por %p233, %p234
    %p236 = scmp.ne.s32.totalorder %s222, %s223
    %p237 = scmp.eq.s32.totalorder %s21, 7
    %p238 = por %p236, %p237
    %p240 = scmp.ne.s32.totalorder %s223, %s239
    %p241 = scmp.eq.s32.totalorder %s21, 0
    %p242 = por %p240, %p241
    %p243 = scmp.le.s32.totalorder 1, %s15
    %p244 = scmp.lt.s32.totalorder %s15, 9
    %p245 = pnand %p243, %p244
    %p246 = pneg %p245
    // Predicated region
    $region9: #{nerf_forward.1} parent=5 // pred_check
      _
    $region10: #{nerf_forward.1} parent=5 // pred_check_branch
      %248 = sbr.rel (%p245) target = $region12
    $region11: #{nerf_forward.1} parent=5 // pred_region
      %s249 = ssub.s32 %s15, 1
      // Predicated region
      $region13: #{nerf_forward.1} parent=11 // pred_check
        %p250 = pneg %p62
      $region14: #{nerf_forward.1} parent=11 // pred_check_branch
        %252 = sbr.rel (%p250) target = $region16
      $region15: #{nerf_forward.1} parent=11 // pred_region
        _
      $region16: #{nerf_forward.1} parent=11 // pred_fallthru
        _
      // Predicated region
      $region17: #{nerf_forward.1} parent=11 // pred_check
        %p253 = pneg %p83
      $region18: #{nerf_forward.1} parent=11 // pred_check_branch
        %255 = sbr.rel (%p253) target = $region20
      $region19: #{nerf_forward.1} parent=11 // pred_region
        _
      $region20: #{nerf_forward.1} parent=11 // pred_fallthru
        _
      // Predicated region
      $region21: #{nerf_forward.1} parent=11 // pred_check
        %p256 = pneg %p104
      $region22: #{nerf_forward.1} parent=11 // pred_check_branch
        %258 = sbr.rel (%p256) target = $region24
      $region23: #{nerf_forward.1} parent=11 // pred_region
        _
      $region24: #{nerf_forward.1} parent=11 // pred_fallthru
        _
      // Predicated region
      $region25: #{nerf_forward.1} parent=11 // pred_check
        %p259 = pneg %p125
      $region26: #{nerf_forward.1} parent=11 // pred_check_branch
        %261 = sbr.rel (%p259) target = $region28
      $region27: #{nerf_forward.1} parent=11 // pred_region
        _
      $region28: #{nerf_forward.1} parent=11 // pred_fallthru
        _
      // Predicated region
      $region29: #{nerf_forward.1} parent=11 // pred_check
        %p262 = pneg %p146
      $region30: #{nerf_forward.1} parent=11 // pred_check_branch
        %264 = sbr.rel (%p262) target = $region32
      $region31: #{nerf_forward.1} parent=11 // pred_region
        _
      $region32: #{nerf_forward.1} parent=11 // pred_fallthru
        _
      // Predicated region
      $region33: #{nerf_forward.1} parent=11 // pred_check
        %p265 = pneg %p167
      $region34: #{nerf_forward.1} parent=11 // pred_check_branch
        %267 = sbr.rel (%p265) target = $region36
      $region35: #{nerf_forward.1} parent=11 // pred_region
        _
      $region36: #{nerf_forward.1} parent=11 // pred_fallthru
        _
      // Predicated region
      $region37: #{nerf_forward.1} parent=11 // pred_check
        %p268 = pneg %p188
      $region38: #{nerf_forward.1} parent=11 // pred_check_branch
        %270 = sbr.rel (%p268) target = $region40
      $region39: #{nerf_forward.1} parent=11 // pred_region
        _
      $region40: #{nerf_forward.1} parent=11 // pred_fallthru
        _
      // Predicated region
      $region41: #{nerf_forward.1} parent=11 // pred_check
        %p271 = pneg %p209
      $region42: #{nerf_forward.1} parent=11 // pred_check_branch
        %273 = sbr.rel (%p271) target = $region44
      $region43: #{nerf_forward.1} parent=11 // pred_region
        _
      $region44: #{nerf_forward.1} parent=11 // pred_fallthru
        _
    $region12: #{nerf_forward.1} parent=5 // pred_fallthru
      _
    %p274 = scmp.lt.s32.totalorder %s15, 8
    // Predicated region
    $region45: #{nerf_forward.1} parent=5 // pred_check
      %p275 = pneg %p274
    $region46: #{nerf_forward.1} parent=5 // pred_check_branch
      %277 = sbr.rel (%p275) target = $region48
    $region47: #{nerf_forward.1} parent=5 // pred_region
      // Predicated region
      $region49: #{nerf_forward.1} parent=47 // pred_check
        %p278 = pneg %p35
      $region50: #{nerf_forward.1} parent=47 // pred_check_branch
        %280 = sbr.rel (%p278) target = $region52
      $region51: #{nerf_forward.1} parent=47 // pred_region
        %s281 = smul.u32 32, %s15
        %p282 = scmp.lt.s32.totalorder %s281, 255
        %s283 = scalar_select %p282, %s281, 255
        %s284 = smul.addr %s283, 4
        %s285 = scalar_lea.vmem %s0, %s284
        %s286 = smul.u32 32, %s15
      $region52: #{nerf_forward.1} parent=47 // pred_fallthru
        _
    $region48: #{nerf_forward.1} parent=5 // pred_fallthru
      _
    %p287 = scmp.le.s32.totalorder 1, %s15
    %p288 = scmp.lt.s32.totalorder %s15, 9
    %p289 = pnand %p287, %p288
    %p290 = pneg %p289
    // Predicated region
    $region53: #{nerf_forward.1} parent=5 // pred_check
      _
    $region54: #{nerf_forward.1} parent=5 // pred_check_branch
      %292 = sbr.rel (%p289) target = $region56
    $region55: #{nerf_forward.1} parent=5 // pred_region
      %s293 = ssub.s32 %s15, 1
      %s294 = smul.u32 32, %s20
      %p295 = scmp.lt.s32.totalorder %s294, 255
      %s296 = scalar_select %p295, %s294, 255
      %s297 = smul.addr %s296, 4
      %s298 = scalar_lea.vmem %s0, %s297
      %p299 = pneg %p41
      %p300 = pneg %p38
      %p301 = pneg %p62
      %p302 = pneg %p59
      %p303 = pneg %p83
      %p304 = pneg %p80
      %p305 = pneg %p104
      %p306 = pneg %p101
      %p307 = pneg %p125
      %p308 = pneg %p122
      %p309 = pneg %p146
      %p310 = pneg %p143
      %p311 = pneg %p167
      %p312 = pneg %p164
      %p313 = pneg %p188
      %p314 = pneg %p185
      %p315 = pneg %p209
      %p316 = pneg %p206
      %p317 = pneg %p235
      %p318 = pneg %p232
      %s319 = smul.u32 32, %s20
      %p320 = scmp.lt.s32.totalorder %s319, 255
      %s321 = scalar_select %p320, %s319, 255
      %s322 = smul.addr %s321, 4
      %s323 = scalar_lea.vmem %s9, %s322
      %s324 = smul.u32 32, %s20
      %p325 = scmp.lt.s32.totalorder %s324, 255
      %s326 = scalar_select %p325, %s324, 255
      %s327 = smul.addr %s326, 4
      %s328 = scalar_lea.vmem %s0, %s327
      %s329 = smul.u32 32, %s20
      %s330 = smul.u32 32, %s20
      %p331 = scmp.lt.s32.totalorder %s330, 255
      %s332 = scalar_select %p331, %s330, 255
      %s333 = smul.addr %s332, 4
      %s334 = scalar_lea.vmem %s9, %s333
      %s335 = smul.u32 32, %s20
      %v338 = vld [vmem:[%s328] sm:$0xf]
      %v339 = vld [vmem:[%s328 + $0x4] sm:$0xf]
      %v340 = vld [vmem:[%s328 + $0x8] sm:$0xf]
      %v341 = vld [vmem:[%s328 + $0xc] sm:$0xf]
      %v342 = vld [vmem:[%s328 + $0x10] sm:$0xf]
      %v343 = vld [vmem:[%s328 + $0x14] sm:$0xf]
      %v344 = vld [vmem:[%s328 + $0x18] sm:$0xf]
      %v345 = vld [vmem:[%s328 + $0x1c] sm:$0xf]
      %v346 = vld [vmem:[%s328 + $0x20] sm:$0xf]
      %v347 = vld [vmem:[%s328 + $0x24] sm:$0xf]
      %v348 = vld [vmem:[%s328 + $0x28] sm:$0xf]
      %v349 = vld [vmem:[%s328 + $0x2c] sm:$0xf]
      %v350 = vld [vmem:[%s328 + $0x30] sm:$0xf]
      %v351 = vld [vmem:[%s328 + $0x34] sm:$0xf]
      %v352 = vld [vmem:[%s328 + $0x38] sm:$0xf]
      %v353 = vld [vmem:[%s328 + $0x3c] sm:$0xf]
      %v354 = vld [vmem:[%s328 + $0x40] sm:$0xf]
      %v355 = vld [vmem:[%s328 + $0x44] sm:$0xf]
      %v356 = vld [vmem:[%s328 + $0x48] sm:$0xf]
      %v357 = vld [vmem:[%s328 + $0x4c] sm:$0xf]
      %v358 = vld [vmem:[%s328 + $0x50] sm:$0xf]
      %v359 = vld [vmem:[%s328 + $0x54] sm:$0xf]
      %v360 = vld [vmem:[%s328 + $0x58] sm:$0xf]
      %v361 = vld [vmem:[%s328 + $0x5c] sm:$0xf]
      %v362 = vld [vmem:[%s328 + $0x60] sm:$0xf]
      %v363 = vld [vmem:[%s328 + $0x64] sm:$0xf]
      %v364 = vld [vmem:[%s328 + $0x68] sm:$0xf]
      %v365 = vld [vmem:[%s328 + $0x6c] sm:$0xf]
      %v366 = vld [vmem:[%s328 + $0x70] sm:$0xf]
      %v367 = vld [vmem:[%s328 + $0x74] sm:$0xf]
      %v368 = vld [vmem:[%s328 + $0x78] sm:$0xf]
      %v369 = vld [vmem:[%s328 + $0x7c] sm:$0xf]
      %v370 = vld [vmem:[%s1] sm:$0xff]
      %v371 = vld [vmem:[%s1 + $0x8] sm:$0xf]
      %v372 = vld [vmem:[%s1 + $0xc] sm:$0xff]
      %v373 = vld [vmem:[%s1 + $0x14] sm:$0xf]
      %v374 = vld [vmem:[%s1 + $0x18] sm:$0xff]
      %v375 = vld [vmem:[%s1 + $0x20] sm:$0xf]
      %v408 = vunpack.c.l.b16 %v338
      %v409 = vunpack.c.l.b16 %v339
      %v410 = vunpack.c.l.b16 %v340
      %v411 = vunpack.c.l.b16 %v341
      %v412 = vunpack.c.l.b16 %v342
      %v413 = vunpack.c.l.b16 %v343
      %v414 = vunpack.c.l.b16 %v344
      %v415 = vunpack.c.l.b16 %v345
      %v416 = vunpack.c.l.b16 %v346
      %v417 = vunpack.c.l.b16 %v347
      %v418 = vunpack.c.l.b16 %v348
      %v419 = vunpack.c.l.b16 %v349
      %v420 = vunpack.c.l.b16 %v350
      %v421 = vunpack.c.l.b16 %v351
      %v422 = vunpack.c.l.b16 %v352
      %v423 = vunpack.c.l.b16 %v353
      %v424 = vunpack.c.l.b16 %v354
      %v425 = vunpack.c.l.b16 %v355
      %v426 = vunpack.c.l.b16 %v356
      %v427 = vunpack.c.l.b16 %v357
      %v428 = vunpack.c.l.b16 %v358
      %v429 = vunpack.c.l.b16 %v359
      %v430 = vunpack.c.l.b16 %v360
      %v431 = vunpack.c.l.b16 %v361
      %v432 = vunpack.c.l.b16 %v362
      %v433 = vunpack.c.l.b16 %v363
      %v434 = vunpack.c.l.b16 %v364
      %v435 = vunpack.c.l.b16 %v365
      %v436 = vunpack.c.l.b16 %v366
      %v437 = vunpack.c.l.b16 %v367
      %v438 = vunpack.c.l.b16 %v368
      %v439 = vunpack.c.l.b16 %v369
      %v440 = vpack.c.b16 %v409, %v408
      %v441 = vpack.c.b16 %v411, %v410
      %v442 = vpack.c.b16 %v413, %v412
      %v443 = vpack.c.b16 %v415, %v414
      %v444 = vpack.c.b16 %v417, %v416
      %v445 = vpack.c.b16 %v419, %v418
      %v446 = vpack.c.b16 %v421, %v420
      %v447 = vpack.c.b16 %v423, %v422
      %v448 = vpack.c.b16 %v425, %v424
      %v449 = vpack.c.b16 %v427, %v426
      %v450 = vpack.c.b16 %v429, %v428
      %v451 = vpack.c.b16 %v431, %v430
      %v452 = vpack.c.b16 %v433, %v432
      %v453 = vpack.c.b16 %v435, %v434
      %v454 = vpack.c.b16 %v437, %v436
      %v455 = vpack.c.b16 %v439, %v438
      %v462 = vunpack.c.l.b16 %v370
      %v463 = vunpack.c.h.b16 %v370
      %v464 = vunpack.c.l.b16 %v371
      %v465 = vunpack.c.l.b16 %v372
      %v466 = vunpack.c.h.b16 %v372
      %v467 = vunpack.c.l.b16 %v373
      %v468 = vunpack.c.l.b16 %v374
      %v469 = vunpack.c.h.b16 %v374
      %v470 = vunpack.c.l.b16 %v375
      %v471 = vpack.c.b16 %v465, %v462
      %v472 = vpack.c.b16 %v466, %v463
      %v473 = vpack.c.b16 %v467, %v464
      %v474 = vpack.c.b16 %v468, %v468
      %v475 = vpack.c.b16 %v469, %v469
      %v476 = vpack.c.b16 %v470, %v470
      %vm480 = vcmask 195584
      %v482 = vsel %vm480, %v440, 0
      %v485 = vsel %vm480, %v441, 0
      %v488 = vsel %vm480, %v442, 0
      %v491 = vsel %vm480, %v443, 0
      %v494 = vsel %vm480, %v444, 0
      %v497 = vsel %vm480, %v445, 0
      %v500 = vsel %vm480, %v446, 0
      %v503 = vsel %vm480, %v447, 0
      %v506 = vsel %vm480, %v448, 0
      %v509 = vsel %vm480, %v449, 0
      %v512 = vsel %vm480, %v450, 0
      %v515 = vsel %vm480, %v451, 0
      %v518 = vsel %vm480, %v452, 0
      %v521 = vsel %vm480, %v453, 0
      %v524 = vsel %vm480, %v454, 0
      %v527 = vsel %vm480, %v455, 0
      %vm529 = vcmask 1043456
      %v531 = vsel %vm529, %v474, 0
      %v534 = vsel %vm529, %v475, 0
      %v537 = vsel %vm529, %v476, 0
      %539 = vmatpush.bf16.msra.mxu0 0
      %540 = vmatpush.bf16.msra.mxu0 0
      %541 = vmatpush.bf16.msra.mxu0 0
      %542 = vmatpush.bf16.msra.mxu0 0
      %543 = vmatpush.bf16.msra.mxu0 0
      %544 = vmatpush.bf16.msra.mxu0 0
      %545 = vmatpush.bf16.msra.mxu0 %v531
      %546 = vmatpush.bf16.msra.mxu0 %v471
      %547 = vmatmul.bf16.gmra.mxu0 %v482
      %v548 = vpop.f32.mrf.mxu0
      %v549 = vadd.f32 0.0, %v548
      %v550 = vpop.f32.mrf.mxu0
      %v551 = vadd.f32 0.0, %v550
      %552 = vmatmul.bf16.gmra.mxu0 %v485
      %v553 = vpop.f32.mrf.mxu0
      %v554 = vadd.f32 0.0, %v553
      %v555 = vpop.f32.mrf.mxu0
      %v556 = vadd.f32 0.0, %v555
      %557 = vmatmul.bf16.gmra.mxu0 %v488
      %v558 = vpop.f32.mrf.mxu0
      %v559 = vadd.f32 0.0, %v558
      %v560 = vpop.f32.mrf.mxu0
      %v561 = vadd.f32 0.0, %v560
      %562 = vmatmul.bf16.gmra.mxu0 %v491
      %v563 = vpop.f32.mrf.mxu0
      %v564 = vadd.f32 0.0, %v563
      %v565 = vpop.f32.mrf.mxu0
      %v566 = vadd.f32 0.0, %v565
      %567 = vmatmul.bf16.gmra.mxu0 %v494
      %v568 = vpop.f32.mrf.mxu0
      %v569 = vadd.f32 0.0, %v568
      %v570 = vpop.f32.mrf.mxu0
      %v571 = vadd.f32 0.0, %v570
      %572 = vmatmul.bf16.gmra.mxu0 %v497
      %v573 = vpop.f32.mrf.mxu0
      %v574 = vadd.f32 0.0, %v573
      %v575 = vpop.f32.mrf.mxu0
      %v576 = vadd.f32 0.0, %v575
      %577 = vmatmul.bf16.gmra.mxu0 %v500
      %v578 = vpop.f32.mrf.mxu0
      %v579 = vadd.f32 0.0, %v578
      %v580 = vpop.f32.mrf.mxu0
      %v581 = vadd.f32 0.0, %v580
      %582 = vmatmul.bf16.gmra.mxu0 %v503
      %v583 = vpop.f32.mrf.mxu0
      %v584 = vadd.f32 0.0, %v583
      %v585 = vpop.f32.mrf.mxu0
      %v586 = vadd.f32 0.0, %v585
      %587 = vmatmul.bf16.gmra.mxu0 %v506
      %v588 = vpop.f32.mrf.mxu0
      %v589 = vadd.f32 0.0, %v588
      %v590 = vpop.f32.mrf.mxu0
      %v591 = vadd.f32 0.0, %v590
      %592 = vmatmul.bf16.gmra.mxu0 %v509
      %v593 = vpop.f32.mrf.mxu0
      %v594 = vadd.f32 0.0, %v593
      %v595 = vpop.f32.mrf.mxu0
      %v596 = vadd.f32 0.0, %v595
      %597 = vmatmul.bf16.gmra.mxu0 %v512
      %v598 = vpop.f32.mrf.mxu0
      %v599 = vadd.f32 0.0, %v598
      %v600 = vpop.f32.mrf.mxu0
      %v601 = vadd.f32 0.0, %v600
      %602 = vmatmul.bf16.gmra.mxu0 %v515
      %v603 = vpop.f32.mrf.mxu0
      %v604 = vadd.f32 0.0, %v603
      %v605 = vpop.f32.mrf.mxu0
      %v606 = vadd.f32 0.0, %v605
      %607 = vmatmul.bf16.gmra.mxu0 %v518
      %v608 = vpop.f32.mrf.mxu0
      %v609 = vadd.f32 0.0, %v608
      %v610 = vpop.f32.mrf.mxu0
      %v611 = vadd.f32 0.0, %v610
      %612 = vmatmul.bf16.gmra.mxu0 %v521
      %v613 = vpop.f32.mrf.mxu0
      %v614 = vadd.f32 0.0, %v613
      %v615 = vpop.f32.mrf.mxu0
      %v616 = vadd.f32 0.0, %v615
      %617 = vmatmul.bf16.gmra.mxu0 %v524
      %v618 = vpop.f32.mrf.mxu0
      %v619 = vadd.f32 0.0, %v618
      %v620 = vpop.f32.mrf.mxu0
      %v621 = vadd.f32 0.0, %v620
      %622 = vmatmul.bf16.gmra.mxu0 %v527
      %v623 = vpop.f32.mrf.mxu0
      %v624 = vadd.f32 0.0, %v623
      %v625 = vpop.f32.mrf.mxu0
      %v626 = vadd.f32 0.0, %v625
      %627 = vdwg.mxu0
      %628 = vmatpush.bf16.msra.mxu0 0
      %629 = vmatpush.bf16.msra.mxu0 0
      %630 = vmatpush.bf16.msra.mxu0 0
      %631 = vmatpush.bf16.msra.mxu0 0
      %632 = vmatpush.bf16.msra.mxu0 0
      %633 = vmatpush.bf16.msra.mxu0 0
      %634 = vmatpush.bf16.msra.mxu0 %v534
      %635 = vmatpush.bf16.msra.mxu0 %v472
      %636 = vmatmul.bf16.gmra.mxu0 %v482
      %v637 = vpop.f32.mrf.mxu0
      %v638 = vadd.f32 0.0, %v637
      %v639 = vpop.f32.mrf.mxu0
      %v640 = vadd.f32 0.0, %v639
      %641 = vmatmul.bf16.gmra.mxu0 %v485
      %v642 = vpop.f32.mrf.mxu0
      %v643 = vadd.f32 0.0, %v642
      %v644 = vpop.f32.mrf.mxu0
      %v645 = vadd.f32 0.0, %v644
      %646 = vmatmul.bf16.gmra.mxu0 %v488
      %v647 = vpop.f32.mrf.mxu0
      %v648 = vadd.f32 0.0, %v647
      %v649 = vpop.f32.mrf.mxu0
      %v650 = vadd.f32 0.0, %v649
      %651 = vmatmul.bf16.gmra.mxu0 %v491
      %v652 = vpop.f32.mrf.mxu0
      %v653 = vadd.f32 0.0, %v652
      %v654 = vpop.f32.mrf.mxu0
      %v655 = vadd.f32 0.0, %v654
      %656 = vmatmul.bf16.gmra.mxu0 %v494
      %v657 = vpop.f32.mrf.mxu0
      %v658 = vadd.f32 0.0, %v657
      %v659 = vpop.f32.mrf.mxu0
      %v660 = vadd.f32 0.0, %v659
      %661 = vmatmul.bf16.gmra.mxu0 %v497
      %v662 = vpop.f32.mrf.mxu0
      %v663 = vadd.f32 0.0, %v662
      %v664 = vpop.f32.mrf.mxu0
      %v665 = vadd.f32 0.0, %v664
      %666 = vmatmul.bf16.gmra.mxu0 %v500
      %v667 = vpop.f32.mrf.mxu0
      %v668 = vadd.f32 0.0, %v667
      %v669 = vpop.f32.mrf.mxu0
      %v670 = vadd.f32 0.0, %v669
      %671 = vmatmul.bf16.gmra.mxu0 %v503
      %v672 = vpop.f32.mrf.mxu0
      %v673 = vadd.f32 0.0, %v672
      %v674 = vpop.f32.mrf.mxu0
      %v675 = vadd.f32 0.0, %v674
      %676 = vmatmul.bf16.gmra.mxu0 %v506
      %v677 = vpop.f32.mrf.mxu0
      %v678 = vadd.f32 0.0, %v677
      %v679 = vpop.f32.mrf.mxu0
      %v680 = vadd.f32 0.0, %v679
      %681 = vmatmul.bf16.gmra.mxu0 %v509
      %v682 = vpop.f32.mrf.mxu0
      %v683 = vadd.f32 0.0, %v682
      %v684 = vpop.f32.mrf.mxu0
      %v685 = vadd.f32 0.0, %v684
      %686 = vmatmul.bf16.gmra.mxu0 %v512
      %v687 = vpop.f32.mrf.mxu0
      %v688 = vadd.f32 0.0, %v687
      %v689 = vpop.f32.mrf.mxu0
      %v690 = vadd.f32 0.0, %v689
      %691 = vmatmul.bf16.gmra.mxu0 %v515
      %v692 = vpop.f32.mrf.mxu0
      %v693 = vadd.f32 0.0, %v692
      %v694 = vpop.f32.mrf.mxu0
      %v695 = vadd.f32 0.0, %v694
      %696 = vmatmul.bf16.gmra.mxu0 %v518
      %v697 = vpop.f32.mrf.mxu0
      %v698 = vadd.f32 0.0, %v697
      %v699 = vpop.f32.mrf.mxu0
      %v700 = vadd.f32 0.0, %v699
      %701 = vmatmul.bf16.gmra.mxu0 %v521
      %v702 = vpop.f32.mrf.mxu0
      %v703 = vadd.f32 0.0, %v702
      %v704 = vpop.f32.mrf.mxu0
      %v705 = vadd.f32 0.0, %v704
      %706 = vmatmul.bf16.gmra.mxu0 %v524
      %v707 = vpop.f32.mrf.mxu0
      %v708 = vadd.f32 0.0, %v707
      %v709 = vpop.f32.mrf.mxu0
      %v710 = vadd.f32 0.0, %v709
      %711 = vmatmul.bf16.gmra.mxu0 %v527
      %v712 = vpop.f32.mrf.mxu0
      %v713 = vadd.f32 0.0, %v712
      %v714 = vpop.f32.mrf.mxu0
      %v715 = vadd.f32 0.0, %v714
      %716 = vdwg.mxu0
      %717 = vmatpush.bf16.msra.mxu0 0
      %718 = vmatpush.bf16.msra.mxu0 0
      %719 = vmatpush.bf16.msra.mxu0 0
      %720 = vmatpush.bf16.msra.mxu0 0
      %721 = vmatpush.bf16.msra.mxu0 0
      %722 = vmatpush.bf16.msra.mxu0 0
      %723 = vmatpush.bf16.msra.mxu0 %v537
      %724 = vmatpush.bf16.msra.mxu0 %v473
      %725 = vmatmul.bf16.gmra.mxu0 %v482
      %v726 = vpop.f32.mrf.mxu0
      %v727 = vadd.f32 0.0, %v726
      %v728 = vpop.f32.mrf.mxu0
      %v729 = vadd.f32 0.0, %v728
      %730 = vmatmul.bf16.gmra.mxu0 %v485
      %v731 = vpop.f32.mrf.mxu0
      %v732 = vadd.f32 0.0, %v731
      %v733 = vpop.f32.mrf.mxu0
      %v734 = vadd.f32 0.0, %v733
      %735 = vmatmul.bf16.gmra.mxu0 %v488
      %v736 = vpop.f32.mrf.mxu0
      %v737 = vadd.f32 0.0, %v736
      %v738 = vpop.f32.mrf.mxu0
      %v739 = vadd.f32 0.0, %v738
      %740 = vmatmul.bf16.gmra.mxu0 %v491
      %v741 = vpop.f32.mrf.mxu0
      %v742 = vadd.f32 0.0, %v741
      %v743 = vpop.f32.mrf.mxu0
      %v744 = vadd.f32 0.0, %v743
      %745 = vmatmul.bf16.gmra.mxu0 %v494
      %v746 = vpop.f32.mrf.mxu0
      %v747 = vadd.f32 0.0, %v746
      %v748 = vpop.f32.mrf.mxu0
      %v749 = vadd.f32 0.0, %v748
      %750 = vmatmul.bf16.gmra.mxu0 %v497
      %v751 = vpop.f32.mrf.mxu0
      %v752 = vadd.f32 0.0, %v751
      %v753 = vpop.f32.mrf.mxu0
      %v754 = vadd.f32 0.0, %v753
      %755 = vmatmul.bf16.gmra.mxu0 %v500
      %v756 = vpop.f32.mrf.mxu0
      %v757 = vadd.f32 0.0, %v756
      %v758 = vpop.f32.mrf.mxu0
      %v759 = vadd.f32 0.0, %v758
      %760 = vmatmul.bf16.gmra.mxu0 %v503
      %v761 = vpop.f32.mrf.mxu0
      %v762 = vadd.f32 0.0, %v761
      %v763 = vpop.f32.mrf.mxu0
      %v764 = vadd.f32 0.0, %v763
      %765 = vmatmul.bf16.gmra.mxu0 %v506
      %v766 = vpop.f32.mrf.mxu0
      %v767 = vadd.f32 0.0, %v766
      %v768 = vpop.f32.mrf.mxu0
      %v769 = vadd.f32 0.0, %v768
      %770 = vmatmul.bf16.gmra.mxu0 %v509
      %v771 = vpop.f32.mrf.mxu0
      %v772 = vadd.f32 0.0, %v771
      %v773 = vpop.f32.mrf.mxu0
      %v774 = vadd.f32 0.0, %v773
      %775 = vmatmul.bf16.gmra.mxu0 %v512
      %v776 = vpop.f32.mrf.mxu0
      %v777 = vadd.f32 0.0, %v776
      %v778 = vpop.f32.mrf.mxu0
      %v779 = vadd.f32 0.0, %v778
      %780 = vmatmul.bf16.gmra.mxu0 %v515
      %v781 = vpop.f32.mrf.mxu0
      %v782 = vadd.f32 0.0, %v781
      %v783 = vpop.f32.mrf.mxu0
      %v784 = vadd.f32 0.0, %v783
      %785 = vmatmul.bf16.gmra.mxu0 %v518
      %v786 = vpop.f32.mrf.mxu0
      %v787 = vadd.f32 0.0, %v786
      %v788 = vpop.f32.mrf.mxu0
      %v789 = vadd.f32 0.0, %v788
      %790 = vmatmul.bf16.gmra.mxu0 %v521
      %v791 = vpop.f32.mrf.mxu0
      %v792 = vadd.f32 0.0, %v791
      %v793 = vpop.f32.mrf.mxu0
      %v794 = vadd.f32 0.0, %v793
      %795 = vmatmul.bf16.gmra.mxu0 %v524
      %v796 = vpop.f32.mrf.mxu0
      %v797 = vadd.f32 0.0, %v796
      %v798 = vpop.f32.mrf.mxu0
      %v799 = vadd.f32 0.0, %v798
      %800 = vmatmul.bf16.gmra.mxu0 %v527
      %v801 = vpop.f32.mrf.mxu0
      %v802 = vadd.f32 0.0, %v801
      %v803 = vpop.f32.mrf.mxu0
      %v804 = vadd.f32 0.0, %v803
      %805 = vdwg.mxu0
      %v806 = vpack.c.bf16 %v638, %v638
      %v807 = vpack.c.bf16 %v640, %v640
      %v808 = vpack.c.bf16 %v643, %v643
      %v809 = vpack.c.bf16 %v645, %v645
      %v810 = vpack.c.bf16 %v648, %v648
      %v811 = vpack.c.bf16 %v650, %v650
      %v812 = vpack.c.bf16 %v653, %v653
      %v813 = vpack.c.bf16 %v655, %v655
      %v814 = vpack.c.bf16 %v658, %v658
      %v815 = vpack.c.bf16 %v660, %v660
      %v816 = vpack.c.bf16 %v663, %v663
      %v817 = vpack.c.bf16 %v665, %v665
      %v818 = vpack.c.bf16 %v668, %v668
      %v819 = vpack.c.bf16 %v670, %v670
      %v820 = vpack.c.bf16 %v673, %v673
      %v821 = vpack.c.bf16 %v675, %v675
      %v822 = vpack.c.bf16 %v678, %v678
      %v823 = vpack.c.bf16 %v680, %v680
      %v824 = vpack.c.bf16 %v683, %v683
      %v825 = vpack.c.bf16 %v685, %v685
      %v826 = vpack.c.bf16 %v688, %v688
      %v827 = vpack.c.bf16 %v690, %v690
      %v828 = vpack.c.bf16 %v693, %v693
      %v829 = vpack.c.bf16 %v695, %v695
      %v830 = vpack.c.bf16 %v698, %v698
      %v831 = vpack.c.bf16 %v700, %v700
      %v832 = vpack.c.bf16 %v703, %v703
      %v833 = vpack.c.bf16 %v705, %v705
      %v834 = vpack.c.bf16 %v708, %v708
      %v835 = vpack.c.bf16 %v710, %v710
      %v836 = vpack.c.bf16 %v713, %v713
      %v837 = vpack.c.bf16 %v715, %v715
      %v838 = vpack.c.bf16 %v727, %v727
      %v839 = vpack.c.bf16 %v729, %v729
      %v840 = vpack.c.bf16 %v732, %v732
      %v841 = vpack.c.bf16 %v734, %v734
      %v842 = vpack.c.bf16 %v737, %v737
      %v843 = vpack.c.bf16 %v739, %v739
      %v844 = vpack.c.bf16 %v742, %v742
      %v845 = vpack.c.bf16 %v744, %v744
      %v846 = vpack.c.bf16 %v747, %v747
      %v847 = vpack.c.bf16 %v749, %v749
      %v848 = vpack.c.bf16 %v752, %v752
      %v849 = vpack.c.bf16 %v754, %v754
      %v850 = vpack.c.bf16 %v757, %v757
      %v851 = vpack.c.bf16 %v759, %v759
      %v852 = vpack.c.bf16 %v762, %v762
      %v853 = vpack.c.bf16 %v764, %v764
      %v854 = vpack.c.bf16 %v767, %v767
      %v855 = vpack.c.bf16 %v769, %v769
      %v856 = vpack.c.bf16 %v772, %v772
      %v857 = vpack.c.bf16 %v774, %v774
      %v858 = vpack.c.bf16 %v777, %v777
      %v859 = vpack.c.bf16 %v779, %v779
      %v860 = vpack.c.bf16 %v782, %v782
      %v861 = vpack.c.bf16 %v784, %v784
      %v862 = vpack.c.bf16 %v787, %v787
      %v863 = vpack.c.bf16 %v789, %v789
      %v864 = vpack.c.bf16 %v792, %v792
      %v865 = vpack.c.bf16 %v794, %v794
      %v866 = vpack.c.bf16 %v797, %v797
      %v867 = vpack.c.bf16 %v799, %v799
      %v868 = vpack.c.bf16 %v802, %v802
      %v869 = vpack.c.bf16 %v804, %v804
      %v870 = vpack.c.bf16 %v549, %v549
      %v871 = vpack.c.bf16 %v551, %v551
      %v872 = vpack.c.bf16 %v554, %v554
      %v873 = vpack.c.bf16 %v556, %v556
      %v874 = vpack.c.bf16 %v559, %v559
      %v875 = vpack.c.bf16 %v561, %v561
      %v876 = vpack.c.bf16 %v564, %v564
      %v877 = vpack.c.bf16 %v566, %v566
      %v878 = vpack.c.bf16 %v569, %v569
      %v879 = vpack.c.bf16 %v571, %v571
      %v880 = vpack.c.bf16 %v574, %v574
      %v881 = vpack.c.bf16 %v576, %v576
      %v882 = vpack.c.bf16 %v579, %v579
      %v883 = vpack.c.bf16 %v581, %v581
      %v884 = vpack.c.bf16 %v584, %v584
      %v885 = vpack.c.bf16 %v586, %v586
      %v886 = vpack.c.bf16 %v589, %v589
      %v887 = vpack.c.bf16 %v591, %v591
      %v888 = vpack.c.bf16 %v594, %v594
      %v889 = vpack.c.bf16 %v596, %v596
      %v890 = vpack.c.bf16 %v599, %v599
      %v891 = vpack.c.bf16 %v601, %v601
      %v892 = vpack.c.bf16 %v604, %v604
      %v893 = vpack.c.bf16 %v606, %v606
      %v894 = vpack.c.bf16 %v609, %v609
      %v895 = vpack.c.bf16 %v611, %v611
      %v896 = vpack.c.bf16 %v614, %v614
      %v897 = vpack.c.bf16 %v616, %v616
      %v898 = vpack.c.bf16 %v619, %v619
      %v899 = vpack.c.bf16 %v621, %v621
      %v900 = vpack.c.bf16 %v624, %v624
      %v901 = vpack.c.bf16 %v626, %v626
      %v902 = vld [vmem:[%s3] sm:$0x1]
      %v904 = vpack.i.b16 %v902, %v902
      %v906 = vperm.slane %v904, 0
      %v907 = vunpack.c.l.bf16 %v870
      %v908 = vunpack.c.l.bf16 %v871
      %v909 = vunpack.c.l.bf16 %v872
      %v910 = vunpack.c.l.bf16 %v873
      %v911 = vunpack.c.l.bf16 %v874
      %v912 = vunpack.c.l.bf16 %v875
      %v913 = vunpack.c.l.bf16 %v876
      %v914 = vunpack.c.l.bf16 %v877
      %v915 = vunpack.c.l.bf16 %v878
      %v916 = vunpack.c.l.bf16 %v879
      %v917 = vunpack.c.l.bf16 %v880
      %v918 = vunpack.c.l.bf16 %v881
      %v919 = vunpack.c.l.bf16 %v882
      %v920 = vunpack.c.l.bf16 %v883
      %v921 = vunpack.c.l.bf16 %v884
      %v922 = vunpack.c.l.bf16 %v885
      %v923 = vunpack.c.l.bf16 %v886
      %v924 = vunpack.c.l.bf16 %v887
      %v925 = vunpack.c.l.bf16 %v888
      %v926 = vunpack.c.l.bf16 %v889
      %v927 = vunpack.c.l.bf16 %v890
      %v928 = vunpack.c.l.bf16 %v891
      %v929 = vunpack.c.l.bf16 %v892
      %v930 = vunpack.c.l.bf16 %v893
      %v931 = vunpack.c.l.bf16 %v894
      %v932 = vunpack.c.l.bf16 %v895
      %v933 = vunpack.c.l.bf16 %v896
      %v934 = vunpack.c.l.bf16 %v897
      %v935 = vunpack.c.l.bf16 %v898
      %v936 = vunpack.c.l.bf16 %v899
      %v937 = vunpack.c.l.bf16 %v900
      %v938 = vunpack.c.l.bf16 %v901
      %v939 = vunpack.c.l.bf16 %v906
      %v940 = vadd.f32 %v907, %v939
      %v941 = vadd.f32 %v908, %v939
      %v942 = vadd.f32 %v909, %v939
      %v943 = vadd.f32 %v910, %v939
      %v944 = vadd.f32 %v911, %v939
      %v945 = vadd.f32 %v912, %v939
      %v946 = vadd.f32 %v913, %v939
      %v947 = vadd.f32 %v914, %v939
      %v948 = vadd.f32 %v915, %v939
      %v949 = vadd.f32 %v916, %v939
      %v950 = vadd.f32 %v917, %v939
      %v951 = vadd.f32 %v918, %v939
      %v952 = vadd.f32 %v919, %v939
      %v953 = vadd.f32 %v920, %v939
      %v954 = vadd.f32 %v921, %v939
      %v955 = vadd.f32 %v922, %v939
      %v956 = vadd.f32 %v923, %v939
      %v957 = vadd.f32 %v924, %v939
      %v958 = vadd.f32 %v925, %v939
      %v959 = vadd.f32 %v926, %v939
      %v960 = vadd.f32 %v927, %v939
      %v961 = vadd.f32 %v928, %v939
      %v962 = vadd.f32 %v929, %v939
      %v963 = vadd.f32 %v930, %v939
      %v964 = vadd.f32 %v931, %v939
      %v965 = vadd.f32 %v932, %v939
      %v966 = vadd.f32 %v933, %v939
      %v967 = vadd.f32 %v934, %v939
      %v968 = vadd.f32 %v935, %v939
      %v969 = vadd.f32 %v936, %v939
      %v970 = vadd.f32 %v937, %v939
      %v971 = vadd.f32 %v938, %v939
      %v972 = vpack.c.bf16 %v940, %v940
      %v973 = vpack.c.bf16 %v941, %v941
      %v974 = vpack.c.bf16 %v942, %v942
      %v975 = vpack.c.bf16 %v943, %v943
      %v976 = vpack.c.bf16 %v944, %v944
      %v977 = vpack.c.bf16 %v945, %v945
      %v978 = vpack.c.bf16 %v946, %v946
      %v979 = vpack.c.bf16 %v947, %v947
      %v980 = vpack.c.bf16 %v948, %v948
      %v981 = vpack.c.bf16 %v949, %v949
      %v982 = vpack.c.bf16 %v950, %v950
      %v983 = vpack.c.bf16 %v951, %v951
      %v984 = vpack.c.bf16 %v952, %v952
      %v985 = vpack.c.bf16 %v953, %v953
      %v986 = vpack.c.bf16 %v954, %v954
      %v987 = vpack.c.bf16 %v955, %v955
      %v988 = vpack.c.bf16 %v956, %v956
      %v989 = vpack.c.bf16 %v957, %v957
      %v990 = vpack.c.bf16 %v958, %v958
      %v991 = vpack.c.bf16 %v959, %v959
      %v992 = vpack.c.bf16 %v960, %v960
      %v993 = vpack.c.bf16 %v961, %v961
      %v994 = vpack.c.bf16 %v962, %v962
      %v995 = vpack.c.bf16 %v963, %v963
      %v996 = vpack.c.bf16 %v964, %v964
      %v997 = vpack.c.bf16 %v965, %v965
      %v998 = vpack.c.bf16 %v966, %v966
      %v999 = vpack.c.bf16 %v967, %v967
      %v1000 = vpack.c.bf16 %v968, %v968
      %v1001 = vpack.c.bf16 %v969, %v969
      %v1002 = vpack.c.bf16 %v970, %v970
      %v1003 = vpack.c.bf16 %v971, %v971
      %v1004 = vunpack.c.l.bf16 %v972
      %v1005 = vunpack.c.l.bf16 %v973
      %v1006 = vunpack.c.l.bf16 %v974
      %v1007 = vunpack.c.l.bf16 %v975
      %v1008 = vunpack.c.l.bf16 %v976
      %v1009 = vunpack.c.l.bf16 %v977
      %v1010 = vunpack.c.l.bf16 %v978
      %v1011 = vunpack.c.l.bf16 %v979
      %v1012 = vunpack.c.l.bf16 %v980
      %v1013 = vunpack.c.l.bf16 %v981
      %v1014 = vunpack.c.l.bf16 %v982
      %v1015 = vunpack.c.l.bf16 %v983
      %v1016 = vunpack.c.l.bf16 %v984
      %v1017 = vunpack.c.l.bf16 %v985
      %v1018 = vunpack.c.l.bf16 %v986
      %v1019 = vunpack.c.l.bf16 %v987
      %v1020 = vunpack.c.l.bf16 %v988
      %v1021 = vunpack.c.l.bf16 %v989
      %v1022 = vunpack.c.l.bf16 %v990
      %v1023 = vunpack.c.l.bf16 %v991
      %v1024 = vunpack.c.l.bf16 %v992
      %v1025 = vunpack.c.l.bf16 %v993
      %v1026 = vunpack.c.l.bf16 %v994
      %v1027 = vunpack.c.l.bf16 %v995
      %v1028 = vunpack.c.l.bf16 %v996
      %v1029 = vunpack.c.l.bf16 %v997
      %v1030 = vunpack.c.l.bf16 %v998
      %v1031 = vunpack.c.l.bf16 %v999
      %v1032 = vunpack.c.l.bf16 %v1000
      %v1033 = vunpack.c.l.bf16 %v1001
      %v1034 = vunpack.c.l.bf16 %v1002
      %v1035 = vunpack.c.l.bf16 %v1003
      %v1036 = vmax.f32 %v1004, 0.0
      %v1037 = vmax.f32 %v1005, 0.0
      %v1038 = vmax.f32 %v1006, 0.0
      %v1039 = vmax.f32 %v1007, 0.0
      %v1040 = vmax.f32 %v1008, 0.0
      %v1041 = vmax.f32 %v1009, 0.0
      %v1042 = vmax.f32 %v1010, 0.0
      %v1043 = vmax.f32 %v1011, 0.0
      %v1044 = vmax.f32 %v1012, 0.0
      %v1045 = vmax.f32 %v1013, 0.0
      %v1046 = vmax.f32 %v1014, 0.0
      %v1047 = vmax.f32 %v1015, 0.0
      %v1048 = vmax.f32 %v1016, 0.0
      %v1049 = vmax.f32 %v1017, 0.0
      %v1050 = vmax.f32 %v1018, 0.0
      %v1051 = vmax.f32 %v1019, 0.0
      %v1052 = vmax.f32 %v1020, 0.0
      %v1053 = vmax.f32 %v1021, 0.0
      %v1054 = vmax.f32 %v1022, 0.0
      %v1055 = vmax.f32 %v1023, 0.0
      %v1056 = vmax.f32 %v1024, 0.0
      %v1057 = vmax.f32 %v1025, 0.0
      %v1058 = vmax.f32 %v1026, 0.0
      %v1059 = vmax.f32 %v1027, 0.0
      %v1060 = vmax.f32 %v1028, 0.0
      %v1061 = vmax.f32 %v1029, 0.0
      %v1062 = vmax.f32 %v1030, 0.0
      %v1063 = vmax.f32 %v1031, 0.0
      %v1064 = vmax.f32 %v1032, 0.0
      %v1065 = vmax.f32 %v1033, 0.0
      %v1066 = vmax.f32 %v1034, 0.0
      %v1067 = vmax.f32 %v1035, 0.0
      %v1068 = vpack.c.bf16 %v1037, %v1036
      %v1069 = vpack.c.bf16 %v1039, %v1038
      %v1070 = vpack.c.bf16 %v1041, %v1040
      %v1071 = vpack.c.bf16 %v1043, %v1042
      %v1072 = vpack.c.bf16 %v1045, %v1044
      %v1073 = vpack.c.bf16 %v1047, %v1046
      %v1074 = vpack.c.bf16 %v1049, %v1048
      %v1075 = vpack.c.bf16 %v1051, %v1050
      %v1076 = vpack.c.bf16 %v1053, %v1052
      %v1077 = vpack.c.bf16 %v1055, %v1054
      %v1078 = vpack.c.bf16 %v1057, %v1056
      %v1079 = vpack.c.bf16 %v1059, %v1058
      %v1080 = vpack.c.bf16 %v1061, %v1060
      %v1081 = vpack.c.bf16 %v1063, %v1062
      %v1082 = vpack.c.bf16 %v1065, %v1064
      %v1083 = vpack.c.bf16 %v1067, %v1066
      %v1084 = vld [vmem:[%s2] sm:$0xf]
      %v1085 = vld [vmem:[%s2 + $0x4] sm:$0xf]
      %v1086 = vld [vmem:[%s2 + $0x8] sm:$0xf]
      %v1087 = vld [vmem:[%s2 + $0xc] sm:$0xf]
      %v1088 = vld [vmem:[%s2 + $0x10] sm:$0xf]
      %v1089 = vld [vmem:[%s2 + $0x14] sm:$0xf]
      %v1090 = vld [vmem:[%s2 + $0x18] sm:$0xf]
      %v1091 = vld [vmem:[%s2 + $0x1c] sm:$0xf]
      %v1092 = vld [vmem:[%s2 + $0x20] sm:$0xf]
      %v1093 = vld [vmem:[%s2 + $0x24] sm:$0xf]
      %v1094 = vld [vmem:[%s2 + $0x28] sm:$0xf]
      %v1095 = vld [vmem:[%s2 + $0x2c] sm:$0xf]
      %v1096 = vld [vmem:[%s2 + $0x30] sm:$0xf]
      %v1097 = vld [vmem:[%s2 + $0x34] sm:$0xf]
      %v1098 = vld [vmem:[%s2 + $0x38] sm:$0xf]
      %v1099 = vld [vmem:[%s2 + $0x3c] sm:$0xf]
      %v1116 = vunpack.c.l.b16 %v1084
      %v1117 = vunpack.c.l.b16 %v1085
      %v1118 = vunpack.c.l.b16 %v1086
      %v1119 = vunpack.c.l.b16 %v1087
      %v1120 = vunpack.c.l.b16 %v1088
      %v1121 = vunpack.c.l.b16 %v1089
      %v1122 = vunpack.c.l.b16 %v1090
      %v1123 = vunpack.c.l.b16 %v1091
      %v1124 = vunpack.c.l.b16 %v1092
      %v1125 = vunpack.c.l.b16 %v1093
      %v1126 = vunpack.c.l.b16 %v1094
      %v1127 = vunpack.c.l.b16 %v1095
      %v1128 = vunpack.c.l.b16 %v1096
      %v1129 = vunpack.c.l.b16 %v1097
      %v1130 = vunpack.c.l.b16 %v1098
      %v1131 = vunpack.c.l.b16 %v1099
      %v1132 = vpack.c.b16 %v1117, %v1116
      %v1133 = vpack.c.b16 %v1119, %v1118
      %v1134 = vpack.c.b16 %v1121, %v1120
      %v1135 = vpack.c.b16 %v1123, %v1122
      %v1136 = vpack.c.b16 %v1125, %v1124
      %v1137 = vpack.c.b16 %v1127, %v1126
      %v1138 = vpack.c.b16 %v1129, %v1128
      %v1139 = vpack.c.b16 %v1131, %v1130
      %1148 = vmatpush.bf16.msra.mxu0 %v1139
      %1149 = vmatpush.bf16.msra.mxu0 %v1138
      %1150 = vmatpush.bf16.msra.mxu0 %v1137
      %1151 = vmatpush.bf16.msra.mxu0 %v1136
      %1152 = vmatpush.bf16.msra.mxu0 %v1135
      %1153 = vmatpush.bf16.msra.mxu0 %v1134
      %1154 = vmatpush.bf16.msra.mxu0 %v1133
      %1155 = vmatpush.bf16.msra.mxu0 %v1132
      %1156 = vmatmul.bf16.gmra.mxu0 %v1068
      %v1157 = vpop.f32.mrf.mxu0
      %v1158 = vadd.f32 0.0, %v1157
      %v1159 = vpop.f32.mrf.mxu0
      %v1160 = vadd.f32 0.0, %v1159
      %1161 = vmatmul.bf16.gmra.mxu0 %v1069
      %v1162 = vpop.f32.mrf.mxu0
      %v1163 = vadd.f32 0.0, %v1162
      %v1164 = vpop.f32.mrf.mxu0
      %v1165 = vadd.f32 0.0, %v1164
      %1166 = vmatmul.bf16.gmra.mxu0 %v1070
      %v1167 = vpop.f32.mrf.mxu0
      %v1168 = vadd.f32 0.0, %v1167
      %v1169 = vpop.f32.mrf.mxu0
      %v1170 = vadd.f32 0.0, %v1169
      %1171 = vmatmul.bf16.gmra.mxu0 %v1071
      %v1172 = vpop.f32.mrf.mxu0
      %v1173 = vadd.f32 0.0, %v1172
      %v1174 = vpop.f32.mrf.mxu0
      %v1175 = vadd.f32 0.0, %v1174
      %1176 = vmatmul.bf16.gmra.mxu0 %v1072
      %v1177 = vpop.f32.mrf.mxu0
      %v1178 = vadd.f32 0.0, %v1177
      %v1179 = vpop.f32.mrf.mxu0
      %v1180 = vadd.f32 0.0, %v1179
      %1181 = vmatmul.bf16.gmra.mxu0 %v1073
      %v1182 = vpop.f32.mrf.mxu0
      %v1183 = vadd.f32 0.0, %v1182
      %v1184 = vpop.f32.mrf.mxu0
      %v1185 = vadd.f32 0.0, %v1184
      %1186 = vmatmul.bf16.gmra.mxu0 %v1074
      %v1187 = vpop.f32.mrf.mxu0
      %v1188 = vadd.f32 0.0, %v1187
      %v1189 = vpop.f32.mrf.mxu0
      %v1190 = vadd.f32 0.0, %v1189
      %1191 = vmatmul.bf16.gmra.mxu0 %v1075
      %v1192 = vpop.f32.mrf.mxu0
      %v1193 = vadd.f32 0.0, %v1192
      %v1194 = vpop.f32.mrf.mxu0
      %v1195 = vadd.f32 0.0, %v1194
      %1196 = vmatmul.bf16.gmra.mxu0 %v1076
      %v1197 = vpop.f32.mrf.mxu0
      %v1198 = vadd.f32 0.0, %v1197
      %v1199 = vpop.f32.mrf.mxu0
      %v1200 = vadd.f32 0.0, %v1199
      %1201 = vmatmul.bf16.gmra.mxu0 %v1077
      %v1202 = vpop.f32.mrf.mxu0
      %v1203 = vadd.f32 0.0, %v1202
      %v1204 = vpop.f32.mrf.mxu0
      %v1205 = vadd.f32 0.0, %v1204
      %1206 = vmatmul.bf16.gmra.mxu0 %v1078
      %v1207 = vpop.f32.mrf.mxu0
      %v1208 = vadd.f32 0.0, %v1207
      %v1209 = vpop.f32.mrf.mxu0
      %v1210 = vadd.f32 0.0, %v1209
      %1211 = vmatmul.bf16.gmra.mxu0 %v1079
      %v1212 = vpop.f32.mrf.mxu0
      %v1213 = vadd.f32 0.0, %v1212
      %v1214 = vpop.f32.mrf.mxu0
      %v1215 = vadd.f32 0.0, %v1214
      %1216 = vmatmul.bf16.gmra.mxu0 %v1080
      %v1217 = vpop.f32.mrf.mxu0
      %v1218 = vadd.f32 0.0, %v1217
      %v1219 = vpop.f32.mrf.mxu0
      %v1220 = vadd.f32 0.0, %v1219
      %1221 = vmatmul.bf16.gmra.mxu0 %v1081
      %v1222 = vpop.f32.mrf.mxu0
      %v1223 = vadd.f32 0.0, %v1222
      %v1224 = vpop.f32.mrf.mxu0
      %v1225 = vadd.f32 0.0, %v1224
      %1226 = vmatmul.bf16.gmra.mxu0 %v1082
      %v1227 = vpop.f32.mrf.mxu0
      %v1228 = vadd.f32 0.0, %v1227
      %v1229 = vpop.f32.mrf.mxu0
      %v1230 = vadd.f32 0.0, %v1229
      %1231 = vmatmul.bf16.gmra.mxu0 %v1083
      %v1232 = vpop.f32.mrf.mxu0
      %v1233 = vadd.f32 0.0, %v1232
      %v1234 = vpop.f32.mrf.mxu0
      %v1235 = vadd.f32 0.0, %v1234
      %1236 = vdwg.mxu0
      %v1237 = vpack.c.bf16 %v1158, %v1158
      %v1238 = vpack.c.bf16 %v1160, %v1160
      %v1239 = vpack.c.bf16 %v1163, %v1163
      %v1240 = vpack.c.bf16 %v1165, %v1165
      %v1241 = vpack.c.bf16 %v1168, %v1168
      %v1242 = vpack.c.bf16 %v1170, %v1170
      %v1243 = vpack.c.bf16 %v1173, %v1173
      %v1244 = vpack.c.bf16 %v1175, %v1175
      %v1245 = vpack.c.bf16 %v1178, %v1178
      %v1246 = vpack.c.bf16 %v1180, %v1180
      %v1247 = vpack.c.bf16 %v1183, %v1183
      %v1248 = vpack.c.bf16 %v1185, %v1185
      %v1249 = vpack.c.bf16 %v1188, %v1188
      %v1250 = vpack.c.bf16 %v1190, %v1190
      %v1251 = vpack.c.bf16 %v1193, %v1193
      %v1252 = vpack.c.bf16 %v1195, %v1195
      %v1253 = vpack.c.bf16 %v1198, %v1198
      %v1254 = vpack.c.bf16 %v1200, %v1200
      %v1255 = vpack.c.bf16 %v1203, %v1203
      %v1256 = vpack.c.bf16 %v1205, %v1205
      %v1257 = vpack.c.bf16 %v1208, %v1208
      %v1258 = vpack.c.bf16 %v1210, %v1210
      %v1259 = vpack.c.bf16 %v1213, %v1213
      %v1260 = vpack.c.bf16 %v1215, %v1215
      %v1261 = vpack.c.bf16 %v1218, %v1218
      %v1262 = vpack.c.bf16 %v1220, %v1220
      %v1263 = vpack.c.bf16 %v1223, %v1223
      %v1264 = vpack.c.bf16 %v1225, %v1225
      %v1265 = vpack.c.bf16 %v1228, %v1228
      %v1266 = vpack.c.bf16 %v1230, %v1230
      %v1267 = vpack.c.bf16 %v1233, %v1233
      %v1268 = vpack.c.bf16 %v1235, %v1235
      %v1269 = vshrl.u32 %v902, 16
      %v1270 = vpack.i.b16 %v1269, %v1269
      %v1272 = vperm.slane %v1270, 0
      %v1273 = vunpack.c.l.bf16 %v1237
      %v1274 = vunpack.c.l.bf16 %v1238
      %v1275 = vunpack.c.l.bf16 %v1239
      %v1276 = vunpack.c.l.bf16 %v1240
      %v1277 = vunpack.c.l.bf16 %v1241
      %v1278 = vunpack.c.l.bf16 %v1242
      %v1279 = vunpack.c.l.bf16 %v1243
      %v1280 = vunpack.c.l.bf16 %v1244
      %v1281 = vunpack.c.l.bf16 %v1245
      %v1282 = vunpack.c.l.bf16 %v1246
      %v1283 = vunpack.c.l.bf16 %v1247
      %v1284 = vunpack.c.l.bf16 %v1248
      %v1285 = vunpack.c.l.bf16 %v1249
      %v1286 = vunpack.c.l.bf16 %v1250
      %v1287 = vunpack.c.l.bf16 %v1251
      %v1288 = vunpack.c.l.bf16 %v1252
      %v1289 = vunpack.c.l.bf16 %v1253
      %v1290 = vunpack.c.l.bf16 %v1254
      %v1291 = vunpack.c.l.bf16 %v1255
      %v1292 = vunpack.c.l.bf16 %v1256
      %v1293 = vunpack.c.l.bf16 %v1257
      %v1294 = vunpack.c.l.bf16 %v1258
      %v1295 = vunpack.c.l.bf16 %v1259
      %v1296 = vunpack.c.l.bf16 %v1260
      %v1297 = vunpack.c.l.bf16 %v1261
      %v1298 = vunpack.c.l.bf16 %v1262
      %v1299 = vunpack.c.l.bf16 %v1263
      %v1300 = vunpack.c.l.bf16 %v1264
      %v1301 = vunpack.c.l.bf16 %v1265
      %v1302 = vunpack.c.l.bf16 %v1266
      %v1303 = vunpack.c.l.bf16 %v1267
      %v1304 = vunpack.c.l.bf16 %v1268
      %v1305 = vunpack.c.l.bf16 %v1272
      %v1306 = vadd.f32 %v1273, %v1305
      %v1307 = vadd.f32 %v1274, %v1305
      %v1308 = vadd.f32 %v1275, %v1305
      %v1309 = vadd.f32 %v1276, %v1305
      %v1310 = vadd.f32 %v1277, %v1305
      %v1311 = vadd.f32 %v1278, %v1305
      %v1312 = vadd.f32 %v1279, %v1305
      %v1313 = vadd.f32 %v1280, %v1305
      %v1314 = vadd.f32 %v1281, %v1305
      %v1315 = vadd.f32 %v1282, %v1305
      %v1316 = vadd.f32 %v1283, %v1305
      %v1317 = vadd.f32 %v1284, %v1305
      %v1318 = vadd.f32 %v1285, %v1305
      %v1319 = vadd.f32 %v1286, %v1305
      %v1320 = vadd.f32 %v1287, %v1305
      %v1321 = vadd.f32 %v1288, %v1305
      %v1322 = vadd.f32 %v1289, %v1305
      %v1323 = vadd.f32 %v1290, %v1305
      %v1324 = vadd.f32 %v1291, %v1305
      %v1325 = vadd.f32 %v1292, %v1305
      %v1326 = vadd.f32 %v1293, %v1305
      %v1327 = vadd.f32 %v1294, %v1305
      %v1328 = vadd.f32 %v1295, %v1305
      %v1329 = vadd.f32 %v1296, %v1305
      %v1330 = vadd.f32 %v1297, %v1305
      %v1331 = vadd.f32 %v1298, %v1305
      %v1332 = vadd.f32 %v1299, %v1305
      %v1333 = vadd.f32 %v1300, %v1305
      %v1334 = vadd.f32 %v1301, %v1305
      %v1335 = vadd.f32 %v1302, %v1305
      %v1336 = vadd.f32 %v1303, %v1305
      %v1337 = vadd.f32 %v1304, %v1305
      %v1338 = vpack.c.bf16 %v1306, %v1306
      %v1339 = vpack.c.bf16 %v1307, %v1307
      %v1340 = vpack.c.bf16 %v1308, %v1308
      %v1341 = vpack.c.bf16 %v1309, %v1309
      %v1342 = vpack.c.bf16 %v1310, %v1310
      %v1343 = vpack.c.bf16 %v1311, %v1311
      %v1344 = vpack.c.bf16 %v1312, %v1312
      %v1345 = vpack.c.bf16 %v1313, %v1313
      %v1346 = vpack.c.bf16 %v1314, %v1314
      %v1347 = vpack.c.bf16 %v1315, %v1315
      %v1348 = vpack.c.bf16 %v1316, %v1316
      %v1349 = vpack.c.bf16 %v1317, %v1317
      %v1350 = vpack.c.bf16 %v1318, %v1318
      %v1351 = vpack.c.bf16 %v1319, %v1319
      %v1352 = vpack.c.bf16 %v1320, %v1320
      %v1353 = vpack.c.bf16 %v1321, %v1321
      %v1354 = vpack.c.bf16 %v1322, %v1322
      %v1355 = vpack.c.bf16 %v1323, %v1323
      %v1356 = vpack.c.bf16 %v1324, %v1324
      %v1357 = vpack.c.bf16 %v1325, %v1325
      %v1358 = vpack.c.bf16 %v1326, %v1326
      %v1359 = vpack.c.bf16 %v1327, %v1327
      %v1360 = vpack.c.bf16 %v1328, %v1328
      %v1361 = vpack.c.bf16 %v1329, %v1329
      %v1362 = vpack.c.bf16 %v1330, %v1330
      %v1363 = vpack.c.bf16 %v1331, %v1331
      %v1364 = vpack.c.bf16 %v1332, %v1332
      %v1365 = vpack.c.bf16 %v1333, %v1333
      %v1366 = vpack.c.bf16 %v1334, %v1334
      %v1367 = vpack.c.bf16 %v1335, %v1335
      %v1368 = vpack.c.bf16 %v1336, %v1336
      %v1369 = vpack.c.bf16 %v1337, %v1337
      %v1370 = vunpack.c.l.bf16 %v1338
      %v1371 = vunpack.c.l.bf16 %v1339
      %v1372 = vunpack.c.l.bf16 %v1340
      %v1373 = vunpack.c.l.bf16 %v1341
      %v1374 = vunpack.c.l.bf16 %v1342
      %v1375 = vunpack.c.l.bf16 %v1343
      %v1376 = vunpack.c.l.bf16 %v1344
      %v1377 = vunpack.c.l.bf16 %v1345
      %v1378 = vunpack.c.l.bf16 %v1346
      %v1379 = vunpack.c.l.bf16 %v1347
      %v1380 = vunpack.c.l.bf16 %v1348
      %v1381 = vunpack.c.l.bf16 %v1349
      %v1382 = vunpack.c.l.bf16 %v1350
      %v1383 = vunpack.c.l.bf16 %v1351
      %v1384 = vunpack.c.l.bf16 %v1352
      %v1385 = vunpack.c.l.bf16 %v1353
      %v1386 = vunpack.c.l.bf16 %v1354
      %v1387 = vunpack.c.l.bf16 %v1355
      %v1388 = vunpack.c.l.bf16 %v1356
      %v1389 = vunpack.c.l.bf16 %v1357
      %v1390 = vunpack.c.l.bf16 %v1358
      %v1391 = vunpack.c.l.bf16 %v1359
      %v1392 = vunpack.c.l.bf16 %v1360
      %v1393 = vunpack.c.l.bf16 %v1361
      %v1394 = vunpack.c.l.bf16 %v1362
      %v1395 = vunpack.c.l.bf16 %v1363
      %v1396 = vunpack.c.l.bf16 %v1364
      %v1397 = vunpack.c.l.bf16 %v1365
      %v1398 = vunpack.c.l.bf16 %v1366
      %v1399 = vunpack.c.l.bf16 %v1367
      %v1400 = vunpack.c.l.bf16 %v1368
      %v1401 = vunpack.c.l.bf16 %v1369
      %v1402 = vmax.f32 %v1370, 0.0
      %v1403 = vmax.f32 %v1371, 0.0
      %v1404 = vmax.f32 %v1372, 0.0
      %v1405 = vmax.f32 %v1373, 0.0
      %v1406 = vmax.f32 %v1374, 0.0
      %v1407 = vmax.f32 %v1375, 0.0
      %v1408 = vmax.f32 %v1376, 0.0
      %v1409 = vmax.f32 %v1377, 0.0
      %v1410 = vmax.f32 %v1378, 0.0
      %v1411 = vmax.f32 %v1379, 0.0
      %v1412 = vmax.f32 %v1380, 0.0
      %v1413 = vmax.f32 %v1381, 0.0
      %v1414 = vmax.f32 %v1382, 0.0
      %v1415 = vmax.f32 %v1383, 0.0
      %v1416 = vmax.f32 %v1384, 0.0
      %v1417 = vmax.f32 %v1385, 0.0
      %v1418 = vmax.f32 %v1386, 0.0
      %v1419 = vmax.f32 %v1387, 0.0
      %v1420 = vmax.f32 %v1388, 0.0
      %v1421 = vmax.f32 %v1389, 0.0
      %v1422 = vmax.f32 %v1390, 0.0
      %v1423 = vmax.f32 %v1391, 0.0
      %v1424 = vmax.f32 %v1392, 0.0
      %v1425 = vmax.f32 %v1393, 0.0
      %v1426 = vmax.f32 %v1394, 0.0
      %v1427 = vmax.f32 %v1395, 0.0
      %v1428 = vmax.f32 %v1396, 0.0
      %v1429 = vmax.f32 %v1397, 0.0
      %v1430 = vmax.f32 %v1398, 0.0
      %v1431 = vmax.f32 %v1399, 0.0
      %v1432 = vmax.f32 %v1400, 0.0
      %v1433 = vmax.f32 %v1401, 0.0
      %v1434 = vpack.c.bf16 %v1403, %v1402
      %v1435 = vpack.c.bf16 %v1405, %v1404
      %v1436 = vpack.c.bf16 %v1407, %v1406
      %v1437 = vpack.c.bf16 %v1409, %v1408
      %v1438 = vpack.c.bf16 %v1411, %v1410
      %v1439 = vpack.c.bf16 %v1413, %v1412
      %v1440 = vpack.c.bf16 %v1415, %v1414
      %v1441 = vpack.c.bf16 %v1417, %v1416
      %v1442 = vpack.c.bf16 %v1419, %v1418
      %v1443 = vpack.c.bf16 %v1421, %v1420
      %v1444 = vpack.c.bf16 %v1423, %v1422
      %v1445 = vpack.c.bf16 %v1425, %v1424
      %v1446 = vpack.c.bf16 %v1427, %v1426
      %v1447 = vpack.c.bf16 %v1429, %v1428
      %v1448 = vpack.c.bf16 %v1431, %v1430
      %v1449 = vpack.c.bf16 %v1433, %v1432
      %s1450 = scalar_lea.vmem %s2, 64
      %v1451 = vld [vmem:[%s1450] sm:$0xf]
      %v1452 = vld [vmem:[%s1450 + $0x4] sm:$0xf]
      %v1453 = vld [vmem:[%s1450 + $0x8] sm:$0xf]
      %v1454 = vld [vmem:[%s1450 + $0xc] sm:$0xf]
      %v1455 = vld [vmem:[%s1450 + $0x10] sm:$0xf]
      %v1456 = vld [vmem:[%s1450 + $0x14] sm:$0xf]
      %v1457 = vld [vmem:[%s1450 + $0x18] sm:$0xf]
      %v1458 = vld [vmem:[%s1450 + $0x1c] sm:$0xf]
      %v1459 = vld [vmem:[%s1450 + $0x20] sm:$0xf]
      %v1460 = vld [vmem:[%s1450 + $0x24] sm:$0xf]
      %v1461 = vld [vmem:[%s1450 + $0x28] sm:$0xf]
      %v1462 = vld [vmem:[%s1450 + $0x2c] sm:$0xf]
      %v1463 = vld [vmem:[%s1450 + $0x30] sm:$0xf]
      %v1464 = vld [vmem:[%s1450 + $0x34] sm:$0xf]
      %v1465 = vld [vmem:[%s1450 + $0x38] sm:$0xf]
      %v1466 = vld [vmem:[%s1450 + $0x3c] sm:$0xf]
      %v1483 = vunpack.c.l.b16 %v1451
      %v1484 = vunpack.c.l.b16 %v1452
      %v1485 = vunpack.c.l.b16 %v1453
      %v1486 = vunpack.c.l.b16 %v1454
      %v1487 = vunpack.c.l.b16 %v1455
      %v1488 = vunpack.c.l.b16 %v1456
      %v1489 = vunpack.c.l.b16 %v1457
      %v1490 = vunpack.c.l.b16 %v1458
      %v1491 = vunpack.c.l.b16 %v1459
      %v1492 = vunpack.c.l.b16 %v1460
      %v1493 = vunpack.c.l.b16 %v1461
      %v1494 = vunpack.c.l.b16 %v1462
      %v1495 = vunpack.c.l.b16 %v1463
      %v1496 = vunpack.c.l.b16 %v1464
      %v1497 = vunpack.c.l.b16 %v1465
      %v1498 = vunpack.c.l.b16 %v1466
      %v1499 = vpack.c.b16 %v1484, %v1483
      %v1500 = vpack.c.b16 %v1486, %v1485
      %v1501 = vpack.c.b16 %v1488, %v1487
      %v1502 = vpack.c.b16 %v1490, %v1489
      %v1503 = vpack.c.b16 %v1492, %v1491
      %v1504 = vpack.c.b16 %v1494, %v1493
      %v1505 = vpack.c.b16 %v1496, %v1495
      %v1506 = vpack.c.b16 %v1498, %v1497
      %1515 = vmatpush.bf16.msra.mxu0 %v1506
      %1516 = vmatpush.bf16.msra.mxu0 %v1505
      %1517 = vmatpush.bf16.msra.mxu0 %v1504
      %1518 = vmatpush.bf16.msra.mxu0 %v1503
      %1519 = vmatpush.bf16.msra.mxu0 %v1502
      %1520 = vmatpush.bf16.msra.mxu0 %v1501
      %1521 = vmatpush.bf16.msra.mxu0 %v1500
      %1522 = vmatpush.bf16.msra.mxu0 %v1499
      %1523 = vmatmul.bf16.gmra.mxu0 %v1434
      %v1524 = vpop.f32.mrf.mxu0
      %v1525 = vadd.f32 0.0, %v1524
      %v1526 = vpop.f32.mrf.mxu0
      %v1527 = vadd.f32 0.0, %v1526
      %1528 = vmatmul.bf16.gmra.mxu0 %v1435
      %v1529 = vpop.f32.mrf.mxu0
      %v1530 = vadd.f32 0.0, %v1529
      %v1531 = vpop.f32.mrf.mxu0
      %v1532 = vadd.f32 0.0, %v1531
      %1533 = vmatmul.bf16.gmra.mxu0 %v1436
      %v1534 = vpop.f32.mrf.mxu0
      %v1535 = vadd.f32 0.0, %v1534
      %v1536 = vpop.f32.mrf.mxu0
      %v1537 = vadd.f32 0.0, %v1536
      %1538 = vmatmul.bf16.gmra.mxu0 %v1437
      %v1539 = vpop.f32.mrf.mxu0
      %v1540 = vadd.f32 0.0, %v1539
      %v1541 = vpop.f32.mrf.mxu0
      %v1542 = vadd.f32 0.0, %v1541
      %1543 = vmatmul.bf16.gmra.mxu0 %v1438
      %v1544 = vpop.f32.mrf.mxu0
      %v1545 = vadd.f32 0.0, %v1544
      %v1546 = vpop.f32.mrf.mxu0
      %v1547 = vadd.f32 0.0, %v1546
      %1548 = vmatmul.bf16.gmra.mxu0 %v1439
      %v1549 = vpop.f32.mrf.mxu0
      %v1550 = vadd.f32 0.0, %v1549
      %v1551 = vpop.f32.mrf.mxu0
      %v1552 = vadd.f32 0.0, %v1551
      %1553 = vmatmul.bf16.gmra.mxu0 %v1440
      %v1554 = vpop.f32.mrf.mxu0
      %v1555 = vadd.f32 0.0, %v1554
      %v1556 = vpop.f32.mrf.mxu0
      %v1557 = vadd.f32 0.0, %v1556
      %1558 = vmatmul.bf16.gmra.mxu0 %v1441
      %v1559 = vpop.f32.mrf.mxu0
      %v1560 = vadd.f32 0.0, %v1559
      %v1561 = vpop.f32.mrf.mxu0
      %v1562 = vadd.f32 0.0, %v1561
      %1563 = vmatmul.bf16.gmra.mxu0 %v1442
      %v1564 = vpop.f32.mrf.mxu0
      %v1565 = vadd.f32 0.0, %v1564
      %v1566 = vpop.f32.mrf.mxu0
      %v1567 = vadd.f32 0.0, %v1566
      %1568 = vmatmul.bf16.gmra.mxu0 %v1443
      %v1569 = vpop.f32.mrf.mxu0
      %v1570 = vadd.f32 0.0, %v1569
      %v1571 = vpop.f32.mrf.mxu0
      %v1572 = vadd.f32 0.0, %v1571
      %1573 = vmatmul.bf16.gmra.mxu0 %v1444
      %v1574 = vpop.f32.mrf.mxu0
      %v1575 = vadd.f32 0.0, %v1574
      %v1576 = vpop.f32.mrf.mxu0
      %v1577 = vadd.f32 0.0, %v1576
      %1578 = vmatmul.bf16.gmra.mxu0 %v1445
      %v1579 = vpop.f32.mrf.mxu0
      %v1580 = vadd.f32 0.0, %v1579
      %v1581 = vpop.f32.mrf.mxu0
      %v1582 = vadd.f32 0.0, %v1581
      %1583 = vmatmul.bf16.gmra.mxu0 %v1446
      %v1584 = vpop.f32.mrf.mxu0
      %v1585 = vadd.f32 0.0, %v1584
      %v1586 = vpop.f32.mrf.mxu0
      %v1587 = vadd.f32 0.0, %v1586
      %1588 = vmatmul.bf16.gmra.mxu0 %v1447
      %v1589 = vpop.f32.mrf.mxu0
      %v1590 = vadd.f32 0.0, %v1589
      %v1591 = vpop.f32.mrf.mxu0
      %v1592 = vadd.f32 0.0, %v1591
      %1593 = vmatmul.bf16.gmra.mxu0 %v1448
      %v1594 = vpop.f32.mrf.mxu0
      %v1595 = vadd.f32 0.0, %v1594
      %v1596 = vpop.f32.mrf.mxu0
      %v1597 = vadd.f32 0.0, %v1596
      %1598 = vmatmul.bf16.gmra.mxu0 %v1449
      %v1599 = vpop.f32.mrf.mxu0
      %v1600 = vadd.f32 0.0, %v1599
      %v1601 = vpop.f32.mrf.mxu0
      %v1602 = vadd.f32 0.0, %v1601
      %1603 = vdwg.mxu0
      %v1604 = vpack.c.bf16 %v1525, %v1525
      %v1605 = vpack.c.bf16 %v1527, %v1527
      %v1606 = vpack.c.bf16 %v1530, %v1530
      %v1607 = vpack.c.bf16 %v1532, %v1532
      %v1608 = vpack.c.bf16 %v1535, %v1535
      %v1609 = vpack.c.bf16 %v1537, %v1537
      %v1610 = vpack.c.bf16 %v1540, %v1540
      %v1611 = vpack.c.bf16 %v1542, %v1542
      %v1612 = vpack.c.bf16 %v1545, %v1545
      %v1613 = vpack.c.bf16 %v1547, %v1547
      %v1614 = vpack.c.bf16 %v1550, %v1550
      %v1615 = vpack.c.bf16 %v1552, %v1552
      %v1616 = vpack.c.bf16 %v1555, %v1555
      %v1617 = vpack.c.bf16 %v1557, %v1557
      %v1618 = vpack.c.bf16 %v1560, %v1560
      %v1619 = vpack.c.bf16 %v1562, %v1562
      %v1620 = vpack.c.bf16 %v1565, %v1565
      %v1621 = vpack.c.bf16 %v1567, %v1567
      %v1622 = vpack.c.bf16 %v1570, %v1570
      %v1623 = vpack.c.bf16 %v1572, %v1572
      %v1624 = vpack.c.bf16 %v1575, %v1575
      %v1625 = vpack.c.bf16 %v1577, %v1577
      %v1626 = vpack.c.bf16 %v1580, %v1580
      %v1627 = vpack.c.bf16 %v1582, %v1582
      %v1628 = vpack.c.bf16 %v1585, %v1585
      %v1629 = vpack.c.bf16 %v1587, %v1587
      %v1630 = vpack.c.bf16 %v1590, %v1590
      %v1631 = vpack.c.bf16 %v1592, %v1592
      %v1632 = vpack.c.bf16 %v1595, %v1595
      %v1633 = vpack.c.bf16 %v1597, %v1597
      %v1634 = vpack.c.bf16 %v1600, %v1600
      %v1635 = vpack.c.bf16 %v1602, %v1602
      %v1636 = vld [vmem:[%s3] sm:$0x2]
      %v1638 = vpack.i.b16 %v1636, %v1636
      %v1640 = vperm.slane %v1638, 1
      %v1641 = vunpack.c.l.bf16 %v1604
      %v1642 = vunpack.c.l.bf16 %v1605
      %v1643 = vunpack.c.l.bf16 %v1606
      %v1644 = vunpack.c.l.bf16 %v1607
      %v1645 = vunpack.c.l.bf16 %v1608
      %v1646 = vunpack.c.l.bf16 %v1609
      %v1647 = vunpack.c.l.bf16 %v1610
      %v1648 = vunpack.c.l.bf16 %v1611
      %v1649 = vunpack.c.l.bf16 %v1612
      %v1650 = vunpack.c.l.bf16 %v1613
      %v1651 = vunpack.c.l.bf16 %v1614
      %v1652 = vunpack.c.l.bf16 %v1615
      %v1653 = vunpack.c.l.bf16 %v1616
      %v1654 = vunpack.c.l.bf16 %v1617
      %v1655 = vunpack.c.l.bf16 %v1618
      %v1656 = vunpack.c.l.bf16 %v1619
      %v1657 = vunpack.c.l.bf16 %v1620
      %v1658 = vunpack.c.l.bf16 %v1621
      %v1659 = vunpack.c.l.bf16 %v1622
      %v1660 = vunpack.c.l.bf16 %v1623
      %v1661 = vunpack.c.l.bf16 %v1624
      %v1662 = vunpack.c.l.bf16 %v1625
      %v1663 = vunpack.c.l.bf16 %v1626
      %v1664 = vunpack.c.l.bf16 %v1627
      %v1665 = vunpack.c.l.bf16 %v1628
      %v1666 = vunpack.c.l.bf16 %v1629
      %v1667 = vunpack.c.l.bf16 %v1630
      %v1668 = vunpack.c.l.bf16 %v1631
      %v1669 = vunpack.c.l.bf16 %v1632
      %v1670 = vunpack.c.l.bf16 %v1633
      %v1671 = vunpack.c.l.bf16 %v1634
      %v1672 = vunpack.c.l.bf16 %v1635
      %v1673 = vunpack.c.l.bf16 %v1640
      %v1674 = vadd.f32 %v1641, %v1673
      %v1675 = vadd.f32 %v1642, %v1673
      %v1676 = vadd.f32 %v1643, %v1673
      %v1677 = vadd.f32 %v1644, %v1673
      %v1678 = vadd.f32 %v1645, %v1673
      %v1679 = vadd.f32 %v1646, %v1673
      %v1680 = vadd.f32 %v1647, %v1673
      %v1681 = vadd.f32 %v1648, %v1673
      %v1682 = vadd.f32 %v1649, %v1673
      %v1683 = vadd.f32 %v1650, %v1673
      %v1684 = vadd.f32 %v1651, %v1673
      %v1685 = vadd.f32 %v1652, %v1673
      %v1686 = vadd.f32 %v1653, %v1673
      %v1687 = vadd.f32 %v1654, %v1673
      %v1688 = vadd.f32 %v1655, %v1673
      %v1689 = vadd.f32 %v1656, %v1673
      %v1690 = vadd.f32 %v1657, %v1673
      %v1691 = vadd.f32 %v1658, %v1673
      %v1692 = vadd.f32 %v1659, %v1673
      %v1693 = vadd.f32 %v1660, %v1673
      %v1694 = vadd.f32 %v1661, %v1673
      %v1695 = vadd.f32 %v1662, %v1673
      %v1696 = vadd.f32 %v1663, %v1673
      %v1697 = vadd.f32 %v1664, %v1673
      %v1698 = vadd.f32 %v1665, %v1673
      %v1699 = vadd.f32 %v1666, %v1673
      %v1700 = vadd.f32 %v1667, %v1673
      %v1701 = vadd.f32 %v1668, %v1673
      %v1702 = vadd.f32 %v1669, %v1673
      %v1703 = vadd.f32 %v1670, %v1673
      %v1704 = vadd.f32 %v1671, %v1673
      %v1705 = vadd.f32 %v1672, %v1673
      %v1706 = vpack.c.bf16 %v1674, %v1674
      %v1707 = vpack.c.bf16 %v1675, %v1675
      %v1708 = vpack.c.bf16 %v1676, %v1676
      %v1709 = vpack.c.bf16 %v1677, %v1677
      %v1710 = vpack.c.bf16 %v1678, %v1678
      %v1711 = vpack.c.bf16 %v1679, %v1679
      %v1712 = vpack.c.bf16 %v1680, %v1680
      %v1713 = vpack.c.bf16 %v1681, %v1681
      %v1714 = vpack.c.bf16 %v1682, %v1682
      %v1715 = vpack.c.bf16 %v1683, %v1683
      %v1716 = vpack.c.bf16 %v1684, %v1684
      %v1717 = vpack.c.bf16 %v1685, %v1685
      %v1718 = vpack.c.bf16 %v1686, %v1686
      %v1719 = vpack.c.bf16 %v1687, %v1687
      %v1720 = vpack.c.bf16 %v1688, %v1688
      %v1721 = vpack.c.bf16 %v1689, %v1689
      %v1722 = vpack.c.bf16 %v1690, %v1690
      %v1723 = vpack.c.bf16 %v1691, %v1691
      %v1724 = vpack.c.bf16 %v1692, %v1692
      %v1725 = vpack.c.bf16 %v1693, %v1693
      %v1726 = vpack.c.bf16 %v1694, %v1694
      %v1727 = vpack.c.bf16 %v1695, %v1695
      %v1728 = vpack.c.bf16 %v1696, %v1696
      %v1729 = vpack.c.bf16 %v1697, %v1697
      %v1730 = vpack.c.bf16 %v1698, %v1698
      %v1731 = vpack.c.bf16 %v1699, %v1699
      %v1732 = vpack.c.bf16 %v1700, %v1700
      %v1733 = vpack.c.bf16 %v1701, %v1701
      %v1734 = vpack.c.bf16 %v1702, %v1702
      %v1735 = vpack.c.bf16 %v1703, %v1703
      %v1736 = vpack.c.bf16 %v1704, %v1704
      %v1737 = vpack.c.bf16 %v1705, %v1705
      %v1738 = vunpack.c.l.bf16 %v1706
      %v1739 = vunpack.c.l.bf16 %v1707
      %v1740 = vunpack.c.l.bf16 %v1708
      %v1741 = vunpack.c.l.bf16 %v1709
      %v1742 = vunpack.c.l.bf16 %v1710
      %v1743 = vunpack.c.l.bf16 %v1711
      %v1744 = vunpack.c.l.bf16 %v1712
      %v1745 = vunpack.c.l.bf16 %v1713
      %v1746 = vunpack.c.l.bf16 %v1714
      %v1747 = vunpack.c.l.bf16 %v1715
      %v1748 = vunpack.c.l.bf16 %v1716
      %v1749 = vunpack.c.l.bf16 %v1717
      %v1750 = vunpack.c.l.bf16 %v1718
      %v1751 = vunpack.c.l.bf16 %v1719
      %v1752 = vunpack.c.l.bf16 %v1720
      %v1753 = vunpack.c.l.bf16 %v1721
      %v1754 = vunpack.c.l.bf16 %v1722
      %v1755 = vunpack.c.l.bf16 %v1723
      %v1756 = vunpack.c.l.bf16 %v1724
      %v1757 = vunpack.c.l.bf16 %v1725
      %v1758 = vunpack.c.l.bf16 %v1726
      %v1759 = vunpack.c.l.bf16 %v1727
      %v1760 = vunpack.c.l.bf16 %v1728
      %v1761 = vunpack.c.l.bf16 %v1729
      %v1762 = vunpack.c.l.bf16 %v1730
      %v1763 = vunpack.c.l.bf16 %v1731
      %v1764 = vunpack.c.l.bf16 %v1732
      %v1765 = vunpack.c.l.bf16 %v1733
      %v1766 = vunpack.c.l.bf16 %v1734
      %v1767 = vunpack.c.l.bf16 %v1735
      %v1768 = vunpack.c.l.bf16 %v1736
      %v1769 = vunpack.c.l.bf16 %v1737
      %v1770 = vmax.f32 %v1738, 0.0
      %v1771 = vmax.f32 %v1739, 0.0
      %v1772 = vmax.f32 %v1740, 0.0
      %v1773 = vmax.f32 %v1741, 0.0
      %v1774 = vmax.f32 %v1742, 0.0
      %v1775 = vmax.f32 %v1743, 0.0
      %v1776 = vmax.f32 %v1744, 0.0
      %v1777 = vmax.f32 %v1745, 0.0
      %v1778 = vmax.f32 %v1746, 0.0
      %v1779 = vmax.f32 %v1747, 0.0
      %v1780 = vmax.f32 %v1748, 0.0
      %v1781 = vmax.f32 %v1749, 0.0
      %v1782 = vmax.f32 %v1750, 0.0
      %v1783 = vmax.f32 %v1751, 0.0
      %v1784 = vmax.f32 %v1752, 0.0
      %v1785 = vmax.f32 %v1753, 0.0
      %v1786 = vmax.f32 %v1754, 0.0
      %v1787 = vmax.f32 %v1755, 0.0
      %v1788 = vmax.f32 %v1756, 0.0
      %v1789 = vmax.f32 %v1757, 0.0
      %v1790 = vmax.f32 %v1758, 0.0
      %v1791 = vmax.f32 %v1759, 0.0
      %v1792 = vmax.f32 %v1760, 0.0
      %v1793 = vmax.f32 %v1761, 0.0
      %v1794 = vmax.f32 %v1762, 0.0
      %v1795 = vmax.f32 %v1763, 0.0
      %v1796 = vmax.f32 %v1764, 0.0
      %v1797 = vmax.f32 %v1765, 0.0
      %v1798 = vmax.f32 %v1766, 0.0
      %v1799 = vmax.f32 %v1767, 0.0
      %v1800 = vmax.f32 %v1768, 0.0
      %v1801 = vmax.f32 %v1769, 0.0
      %v1802 = vpack.c.bf16 %v1771, %v1770
      %v1803 = vpack.c.bf16 %v1773, %v1772
      %v1804 = vpack.c.bf16 %v1775, %v1774
      %v1805 = vpack.c.bf16 %v1777, %v1776
      %v1806 = vpack.c.bf16 %v1779, %v1778
      %v1807 = vpack.c.bf16 %v1781, %v1780
      %v1808 = vpack.c.bf16 %v1783, %v1782
      %v1809 = vpack.c.bf16 %v1785, %v1784
      %v1810 = vpack.c.bf16 %v1787, %v1786
      %v1811 = vpack.c.bf16 %v1789, %v1788
      %v1812 = vpack.c.bf16 %v1791, %v1790
      %v1813 = vpack.c.bf16 %v1793, %v1792
      %v1814 = vpack.c.bf16 %v1795, %v1794
      %v1815 = vpack.c.bf16 %v1797, %v1796
      %v1816 = vpack.c.bf16 %v1799, %v1798
      %v1817 = vpack.c.bf16 %v1801, %v1800
      %s1818 = scalar_lea.vmem %s2, 128
      %v1819 = vld [vmem:[%s1818] sm:$0xf]
      %v1820 = vld [vmem:[%s1818 + $0x4] sm:$0xf]
      %v1821 = vld [vmem:[%s1818 + $0x8] sm:$0xf]
      %v1822 = vld [vmem:[%s1818 + $0xc] sm:$0xf]
      %v1823 = vld [vmem:[%s1818 + $0x10] sm:$0xf]
      %v1824 = vld [vmem:[%s1818 + $0x14] sm:$0xf]
      %v1825 = vld [vmem:[%s1818 + $0x18] sm:$0xf]
      %v1826 = vld [vmem:[%s1818 + $0x1c] sm:$0xf]
      %v1827 = vld [vmem:[%s1818 + $0x20] sm:$0xf]
      %v1828 = vld [vmem:[%s1818 + $0x24] sm:$0xf]
      %v1829 = vld [vmem:[%s1818 + $0x28] sm:$0xf]
      %v1830 = vld [vmem:[%s1818 + $0x2c] sm:$0xf]
      %v1831 = vld [vmem:[%s1818 + $0x30] sm:$0xf]
      %v1832 = vld [vmem:[%s1818 + $0x34] sm:$0xf]
      %v1833 = vld [vmem:[%s1818 + $0x38] sm:$0xf]
      %v1834 = vld [vmem:[%s1818 + $0x3c] sm:$0xf]
      %v1851 = vunpack.c.l.b16 %v1819
      %v1852 = vunpack.c.l.b16 %v1820
      %v1853 = vunpack.c.l.b16 %v1821
      %v1854 = vunpack.c.l.b16 %v1822
      %v1855 = vunpack.c.l.b16 %v1823
      %v1856 = vunpack.c.l.b16 %v1824
      %v1857 = vunpack.c.l.b16 %v1825
      %v1858 = vunpack.c.l.b16 %v1826
      %v1859 = vunpack.c.l.b16 %v1827
      %v1860 = vunpack.c.l.b16 %v1828
      %v1861 = vunpack.c.l.b16 %v1829
      %v1862 = vunpack.c.l.b16 %v1830
      %v1863 = vunpack.c.l.b16 %v1831
      %v1864 = vunpack.c.l.b16 %v1832
      %v1865 = vunpack.c.l.b16 %v1833
      %v1866 = vunpack.c.l.b16 %v1834
      %v1867 = vpack.c.b16 %v1852, %v1851
      %v1868 = vpack.c.b16 %v1854, %v1853
      %v1869 = vpack.c.b16 %v1856, %v1855
      %v1870 = vpack.c.b16 %v1858, %v1857
      %v1871 = vpack.c.b16 %v1860, %v1859
      %v1872 = vpack.c.b16 %v1862, %v1861
      %v1873 = vpack.c.b16 %v1864, %v1863
      %v1874 = vpack.c.b16 %v1866, %v1865
      %1883 = vmatpush.bf16.msra.mxu0 %v1874
      %1884 = vmatpush.bf16.msra.mxu0 %v1873
      %1885 = vmatpush.bf16.msra.mxu0 %v1872
      %1886 = vmatpush.bf16.msra.mxu0 %v1871
      %1887 = vmatpush.bf16.msra.mxu0 %v1870
      %1888 = vmatpush.bf16.msra.mxu0 %v1869
      %1889 = vmatpush.bf16.msra.mxu0 %v1868
      %1890 = vmatpush.bf16.msra.mxu0 %v1867
      %1891 = vmatmul.bf16.gmra.mxu0 %v1802
      %v1892 = vpop.f32.mrf.mxu0
      %v1893 = vadd.f32 0.0, %v1892
      %v1894 = vpop.f32.mrf.mxu0
      %v1895 = vadd.f32 0.0, %v1894
      %1896 = vmatmul.bf16.gmra.mxu0 %v1803
      %v1897 = vpop.f32.mrf.mxu0
      %v1898 = vadd.f32 0.0, %v1897
      %v1899 = vpop.f32.mrf.mxu0
      %v1900 = vadd.f32 0.0, %v1899
      %1901 = vmatmul.bf16.gmra.mxu0 %v1804
      %v1902 = vpop.f32.mrf.mxu0
      %v1903 = vadd.f32 0.0, %v1902
      %v1904 = vpop.f32.mrf.mxu0
      %v1905 = vadd.f32 0.0, %v1904
      %1906 = vmatmul.bf16.gmra.mxu0 %v1805
      %v1907 = vpop.f32.mrf.mxu0
      %v1908 = vadd.f32 0.0, %v1907
      %v1909 = vpop.f32.mrf.mxu0
      %v1910 = vadd.f32 0.0, %v1909
      %1911 = vmatmul.bf16.gmra.mxu0 %v1806
      %v1912 = vpop.f32.mrf.mxu0
      %v1913 = vadd.f32 0.0, %v1912
      %v1914 = vpop.f32.mrf.mxu0
      %v1915 = vadd.f32 0.0, %v1914
      %1916 = vmatmul.bf16.gmra.mxu0 %v1807
      %v1917 = vpop.f32.mrf.mxu0
      %v1918 = vadd.f32 0.0, %v1917
      %v1919 = vpop.f32.mrf.mxu0
      %v1920 = vadd.f32 0.0, %v1919
      %1921 = vmatmul.bf16.gmra.mxu0 %v1808
      %v1922 = vpop.f32.mrf.mxu0
      %v1923 = vadd.f32 0.0, %v1922
      %v1924 = vpop.f32.mrf.mxu0
      %v1925 = vadd.f32 0.0, %v1924
      %1926 = vmatmul.bf16.gmra.mxu0 %v1809
      %v1927 = vpop.f32.mrf.mxu0
      %v1928 = vadd.f32 0.0, %v1927
      %v1929 = vpop.f32.mrf.mxu0
      %v1930 = vadd.f32 0.0, %v1929
      %1931 = vmatmul.bf16.gmra.mxu0 %v1810
      %v1932 = vpop.f32.mrf.mxu0
      %v1933 = vadd.f32 0.0, %v1932
      %v1934 = vpop.f32.mrf.mxu0
      %v1935 = vadd.f32 0.0, %v1934
      %1936 = vmatmul.bf16.gmra.mxu0 %v1811
      %v1937 = vpop.f32.mrf.mxu0
      %v1938 = vadd.f32 0.0, %v1937
      %v1939 = vpop.f32.mrf.mxu0
      %v1940 = vadd.f32 0.0, %v1939
      %1941 = vmatmul.bf16.gmra.mxu0 %v1812
      %v1942 = vpop.f32.mrf.mxu0
      %v1943 = vadd.f32 0.0, %v1942
      %v1944 = vpop.f32.mrf.mxu0
      %v1945 = vadd.f32 0.0, %v1944
      %1946 = vmatmul.bf16.gmra.mxu0 %v1813
      %v1947 = vpop.f32.mrf.mxu0
      %v1948 = vadd.f32 0.0, %v1947
      %v1949 = vpop.f32.mrf.mxu0
      %v1950 = vadd.f32 0.0, %v1949
      %1951 = vmatmul.bf16.gmra.mxu0 %v1814
      %v1952 = vpop.f32.mrf.mxu0
      %v1953 = vadd.f32 0.0, %v1952
      %v1954 = vpop.f32.mrf.mxu0
      %v1955 = vadd.f32 0.0, %v1954
      %1956 = vmatmul.bf16.gmra.mxu0 %v1815
      %v1957 = vpop.f32.mrf.mxu0
      %v1958 = vadd.f32 0.0, %v1957
      %v1959 = vpop.f32.mrf.mxu0
      %v1960 = vadd.f32 0.0, %v1959
      %1961 = vmatmul.bf16.gmra.mxu0 %v1816
      %v1962 = vpop.f32.mrf.mxu0
      %v1963 = vadd.f32 0.0, %v1962
      %v1964 = vpop.f32.mrf.mxu0
      %v1965 = vadd.f32 0.0, %v1964
      %1966 = vmatmul.bf16.gmra.mxu0 %v1817
      %v1967 = vpop.f32.mrf.mxu0
      %v1968 = vadd.f32 0.0, %v1967
      %v1969 = vpop.f32.mrf.mxu0
      %v1970 = vadd.f32 0.0, %v1969
      %1971 = vdwg.mxu0
      %v1972 = vpack.c.bf16 %v1893, %v1893
      %v1973 = vpack.c.bf16 %v1895, %v1895
      %v1974 = vpack.c.bf16 %v1898, %v1898
      %v1975 = vpack.c.bf16 %v1900, %v1900
      %v1976 = vpack.c.bf16 %v1903, %v1903
      %v1977 = vpack.c.bf16 %v1905, %v1905
      %v1978 = vpack.c.bf16 %v1908, %v1908
      %v1979 = vpack.c.bf16 %v1910, %v1910
      %v1980 = vpack.c.bf16 %v1913, %v1913
      %v1981 = vpack.c.bf16 %v1915, %v1915
      %v1982 = vpack.c.bf16 %v1918, %v1918
      %v1983 = vpack.c.bf16 %v1920, %v1920
      %v1984 = vpack.c.bf16 %v1923, %v1923
      %v1985 = vpack.c.bf16 %v1925, %v1925
      %v1986 = vpack.c.bf16 %v1928, %v1928
      %v1987 = vpack.c.bf16 %v1930, %v1930
      %v1988 = vpack.c.bf16 %v1933, %v1933
      %v1989 = vpack.c.bf16 %v1935, %v1935
      %v1990 = vpack.c.bf16 %v1938, %v1938
      %v1991 = vpack.c.bf16 %v1940, %v1940
      %v1992 = vpack.c.bf16 %v1943, %v1943
      %v1993 = vpack.c.bf16 %v1945, %v1945
      %v1994 = vpack.c.bf16 %v1948, %v1948
      %v1995 = vpack.c.bf16 %v1950, %v1950
      %v1996 = vpack.c.bf16 %v1953, %v1953
      %v1997 = vpack.c.bf16 %v1955, %v1955
      %v1998 = vpack.c.bf16 %v1958, %v1958
      %v1999 = vpack.c.bf16 %v1960, %v1960
      %v2000 = vpack.c.bf16 %v1963, %v1963
      %v2001 = vpack.c.bf16 %v1965, %v1965
      %v2002 = vpack.c.bf16 %v1968, %v1968
      %v2003 = vpack.c.bf16 %v1970, %v1970
      %v2004 = vshrl.u32 %v1636, 16
      %v2005 = vpack.i.b16 %v2004, %v2004
      %v2007 = vperm.slane %v2005, 1
      %v2008 = vunpack.c.l.bf16 %v1972
      %v2009 = vunpack.c.l.bf16 %v1973
      %v2010 = vunpack.c.l.bf16 %v1974
      %v2011 = vunpack.c.l.bf16 %v1975
      %v2012 = vunpack.c.l.bf16 %v1976
      %v2013 = vunpack.c.l.bf16 %v1977
      %v2014 = vunpack.c.l.bf16 %v1978
      %v2015 = vunpack.c.l.bf16 %v1979
      %v2016 = vunpack.c.l.bf16 %v1980
      %v2017 = vunpack.c.l.bf16 %v1981
      %v2018 = vunpack.c.l.bf16 %v1982
      %v2019 = vunpack.c.l.bf16 %v1983
      %v2020 = vunpack.c.l.bf16 %v1984
      %v2021 = vunpack.c.l.bf16 %v1985
      %v2022 = vunpack.c.l.bf16 %v1986
      %v2023 = vunpack.c.l.bf16 %v1987
      %v2024 = vunpack.c.l.bf16 %v1988
      %v2025 = vunpack.c.l.bf16 %v1989
      %v2026 = vunpack.c.l.bf16 %v1990
      %v2027 = vunpack.c.l.bf16 %v1991
      %v2028 = vunpack.c.l.bf16 %v1992
      %v2029 = vunpack.c.l.bf16 %v1993
      %v2030 = vunpack.c.l.bf16 %v1994
      %v2031 = vunpack.c.l.bf16 %v1995
      %v2032 = vunpack.c.l.bf16 %v1996
      %v2033 = vunpack.c.l.bf16 %v1997
      %v2034 = vunpack.c.l.bf16 %v1998
      %v2035 = vunpack.c.l.bf16 %v1999
      %v2036 = vunpack.c.l.bf16 %v2000
      %v2037 = vunpack.c.l.bf16 %v2001
      %v2038 = vunpack.c.l.bf16 %v2002
      %v2039 = vunpack.c.l.bf16 %v2003
      %v2040 = vunpack.c.l.bf16 %v2007
      %v2041 = vadd.f32 %v2008, %v2040
      %v2042 = vadd.f32 %v2009, %v2040
      %v2043 = vadd.f32 %v2010, %v2040
      %v2044 = vadd.f32 %v2011, %v2040
      %v2045 = vadd.f32 %v2012, %v2040
      %v2046 = vadd.f32 %v2013, %v2040
      %v2047 = vadd.f32 %v2014, %v2040
      %v2048 = vadd.f32 %v2015, %v2040
      %v2049 = vadd.f32 %v2016, %v2040
      %v2050 = vadd.f32 %v2017, %v2040
      %v2051 = vadd.f32 %v2018, %v2040
      %v2052 = vadd.f32 %v2019, %v2040
      %v2053 = vadd.f32 %v2020, %v2040
      %v2054 = vadd.f32 %v2021, %v2040
      %v2055 = vadd.f32 %v2022, %v2040
      %v2056 = vadd.f32 %v2023, %v2040
      %v2057 = vadd.f32 %v2024, %v2040
      %v2058 = vadd.f32 %v2025, %v2040
      %v2059 = vadd.f32 %v2026, %v2040
      %v2060 = vadd.f32 %v2027, %v2040
      %v2061 = vadd.f32 %v2028, %v2040
      %v2062 = vadd.f32 %v2029, %v2040
      %v2063 = vadd.f32 %v2030, %v2040
      %v2064 = vadd.f32 %v2031, %v2040
      %v2065 = vadd.f32 %v2032, %v2040
      %v2066 = vadd.f32 %v2033, %v2040
      %v2067 = vadd.f32 %v2034, %v2040
      %v2068 = vadd.f32 %v2035, %v2040
      %v2069 = vadd.f32 %v2036, %v2040
      %v2070 = vadd.f32 %v2037, %v2040
      %v2071 = vadd.f32 %v2038, %v2040
      %v2072 = vadd.f32 %v2039, %v2040
      %v2073 = vpack.c.bf16 %v2041, %v2041
      %v2074 = vpack.c.bf16 %v2042, %v2042
      %v2075 = vpack.c.bf16 %v2043, %v2043
      %v2076 = vpack.c.bf16 %v2044, %v2044
      %v2077 = vpack.c.bf16 %v2045, %v2045
      %v2078 = vpack.c.bf16 %v2046, %v2046
      %v2079 = vpack.c.bf16 %v2047, %v2047
      %v2080 = vpack.c.bf16 %v2048, %v2048
      %v2081 = vpack.c.bf16 %v2049, %v2049
      %v2082 = vpack.c.bf16 %v2050, %v2050
      %v2083 = vpack.c.bf16 %v2051, %v2051
      %v2084 = vpack.c.bf16 %v2052, %v2052
      %v2085 = vpack.c.bf16 %v2053, %v2053
      %v2086 = vpack.c.bf16 %v2054, %v2054
      %v2087 = vpack.c.bf16 %v2055, %v2055
      %v2088 = vpack.c.bf16 %v2056, %v2056
      %v2089 = vpack.c.bf16 %v2057, %v2057
      %v2090 = vpack.c.bf16 %v2058, %v2058
      %v2091 = vpack.c.bf16 %v2059, %v2059
      %v2092 = vpack.c.bf16 %v2060, %v2060
      %v2093 = vpack.c.bf16 %v2061, %v2061
      %v2094 = vpack.c.bf16 %v2062, %v2062
      %v2095 = vpack.c.bf16 %v2063, %v2063
      %v2096 = vpack.c.bf16 %v2064, %v2064
      %v2097 = vpack.c.bf16 %v2065, %v2065
      %v2098 = vpack.c.bf16 %v2066, %v2066
      %v2099 = vpack.c.bf16 %v2067, %v2067
      %v2100 = vpack.c.bf16 %v2068, %v2068
      %v2101 = vpack.c.bf16 %v2069, %v2069
      %v2102 = vpack.c.bf16 %v2070, %v2070
      %v2103 = vpack.c.bf16 %v2071, %v2071
      %v2104 = vpack.c.bf16 %v2072, %v2072
      %v2105 = vunpack.c.l.bf16 %v2073
      %v2106 = vunpack.c.l.bf16 %v2074
      %v2107 = vunpack.c.l.bf16 %v2075
      %v2108 = vunpack.c.l.bf16 %v2076
      %v2109 = vunpack.c.l.bf16 %v2077
      %v2110 = vunpack.c.l.bf16 %v2078
      %v2111 = vunpack.c.l.bf16 %v2079
      %v2112 = vunpack.c.l.bf16 %v2080
      %v2113 = vunpack.c.l.bf16 %v2081
      %v2114 = vunpack.c.l.bf16 %v2082
      %v2115 = vunpack.c.l.bf16 %v2083
      %v2116 = vunpack.c.l.bf16 %v2084
      %v2117 = vunpack.c.l.bf16 %v2085
      %v2118 = vunpack.c.l.bf16 %v2086
      %v2119 = vunpack.c.l.bf16 %v2087
      %v2120 = vunpack.c.l.bf16 %v2088
      %v2121 = vunpack.c.l.bf16 %v2089
      %v2122 = vunpack.c.l.bf16 %v2090
      %v2123 = vunpack.c.l.bf16 %v2091
      %v2124 = vunpack.c.l.bf16 %v2092
      %v2125 = vunpack.c.l.bf16 %v2093
      %v2126 = vunpack.c.l.bf16 %v2094
      %v2127 = vunpack.c.l.bf16 %v2095
      %v2128 = vunpack.c.l.bf16 %v2096
      %v2129 = vunpack.c.l.bf16 %v2097
      %v2130 = vunpack.c.l.bf16 %v2098
      %v2131 = vunpack.c.l.bf16 %v2099
      %v2132 = vunpack.c.l.bf16 %v2100
      %v2133 = vunpack.c.l.bf16 %v2101
      %v2134 = vunpack.c.l.bf16 %v2102
      %v2135 = vunpack.c.l.bf16 %v2103
      %v2136 = vunpack.c.l.bf16 %v2104
      %v2137 = vmax.f32 %v2105, 0.0
      %v2138 = vmax.f32 %v2106, 0.0
      %v2139 = vmax.f32 %v2107, 0.0
      %v2140 = vmax.f32 %v2108, 0.0
      %v2141 = vmax.f32 %v2109, 0.0
      %v2142 = vmax.f32 %v2110, 0.0
      %v2143 = vmax.f32 %v2111, 0.0
      %v2144 = vmax.f32 %v2112, 0.0
      %v2145 = vmax.f32 %v2113, 0.0
      %v2146 = vmax.f32 %v2114, 0.0
      %v2147 = vmax.f32 %v2115, 0.0
      %v2148 = vmax.f32 %v2116, 0.0
      %v2149 = vmax.f32 %v2117, 0.0
      %v2150 = vmax.f32 %v2118, 0.0
      %v2151 = vmax.f32 %v2119, 0.0
      %v2152 = vmax.f32 %v2120, 0.0
      %v2153 = vmax.f32 %v2121, 0.0
      %v2154 = vmax.f32 %v2122, 0.0
      %v2155 = vmax.f32 %v2123, 0.0
      %v2156 = vmax.f32 %v2124, 0.0
      %v2157 = vmax.f32 %v2125, 0.0
      %v2158 = vmax.f32 %v2126, 0.0
      %v2159 = vmax.f32 %v2127, 0.0
      %v2160 = vmax.f32 %v2128, 0.0
      %v2161 = vmax.f32 %v2129, 0.0
      %v2162 = vmax.f32 %v2130, 0.0
      %v2163 = vmax.f32 %v2131, 0.0
      %v2164 = vmax.f32 %v2132, 0.0
      %v2165 = vmax.f32 %v2133, 0.0
      %v2166 = vmax.f32 %v2134, 0.0
      %v2167 = vmax.f32 %v2135, 0.0
      %v2168 = vmax.f32 %v2136, 0.0
      %v2169 = vpack.c.bf16 %v2138, %v2137
      %v2170 = vpack.c.bf16 %v2140, %v2139
      %v2171 = vpack.c.bf16 %v2142, %v2141
      %v2172 = vpack.c.bf16 %v2144, %v2143
      %v2173 = vpack.c.bf16 %v2146, %v2145
      %v2174 = vpack.c.bf16 %v2148, %v2147
      %v2175 = vpack.c.bf16 %v2150, %v2149
      %v2176 = vpack.c.bf16 %v2152, %v2151
      %v2177 = vpack.c.bf16 %v2154, %v2153
      %v2178 = vpack.c.bf16 %v2156, %v2155
      %v2179 = vpack.c.bf16 %v2158, %v2157
      %v2180 = vpack.c.bf16 %v2160, %v2159
      %v2181 = vpack.c.bf16 %v2162, %v2161
      %v2182 = vpack.c.bf16 %v2164, %v2163
      %v2183 = vpack.c.bf16 %v2166, %v2165
      %v2184 = vpack.c.bf16 %v2168, %v2167
      %s2185 = scalar_lea.vmem %s2, 192
      %v2186 = vld [vmem:[%s2185] sm:$0xf]
      %v2187 = vld [vmem:[%s2185 + $0x4] sm:$0xf]
      %v2188 = vld [vmem:[%s2185 + $0x8] sm:$0xf]
      %v2189 = vld [vmem:[%s2185 + $0xc] sm:$0xf]
      %v2190 = vld [vmem:[%s2185 + $0x10] sm:$0xf]
      %v2191 = vld [vmem:[%s2185 + $0x14] sm:$0xf]
      %v2192 = vld [vmem:[%s2185 + $0x18] sm:$0xf]
      %v2193 = vld [vmem:[%s2185 + $0x1c] sm:$0xf]
      %v2194 = vld [vmem:[%s2185 + $0x20] sm:$0xf]
      %v2195 = vld [vmem:[%s2185 + $0x24] sm:$0xf]
      %v2196 = vld [vmem:[%s2185 + $0x28] sm:$0xf]
      %v2197 = vld [vmem:[%s2185 + $0x2c] sm:$0xf]
      %v2198 = vld [vmem:[%s2185 + $0x30] sm:$0xf]
      %v2199 = vld [vmem:[%s2185 + $0x34] sm:$0xf]
      %v2200 = vld [vmem:[%s2185 + $0x38] sm:$0xf]
      %v2201 = vld [vmem:[%s2185 + $0x3c] sm:$0xf]
      %v2218 = vunpack.c.l.b16 %v2186
      %v2219 = vunpack.c.l.b16 %v2187
      %v2220 = vunpack.c.l.b16 %v2188
      %v2221 = vunpack.c.l.b16 %v2189
      %v2222 = vunpack.c.l.b16 %v2190
      %v2223 = vunpack.c.l.b16 %v2191
      %v2224 = vunpack.c.l.b16 %v2192
      %v2225 = vunpack.c.l.b16 %v2193
      %v2226 = vunpack.c.l.b16 %v2194
      %v2227 = vunpack.c.l.b16 %v2195
      %v2228 = vunpack.c.l.b16 %v2196
      %v2229 = vunpack.c.l.b16 %v2197
      %v2230 = vunpack.c.l.b16 %v2198
      %v2231 = vunpack.c.l.b16 %v2199
      %v2232 = vunpack.c.l.b16 %v2200
      %v2233 = vunpack.c.l.b16 %v2201
      %v2234 = vpack.c.b16 %v2219, %v2218
      %v2235 = vpack.c.b16 %v2221, %v2220
      %v2236 = vpack.c.b16 %v2223, %v2222
      %v2237 = vpack.c.b16 %v2225, %v2224
      %v2238 = vpack.c.b16 %v2227, %v2226
      %v2239 = vpack.c.b16 %v2229, %v2228
      %v2240 = vpack.c.b16 %v2231, %v2230
      %v2241 = vpack.c.b16 %v2233, %v2232
      %2250 = vmatpush.bf16.msra.mxu0 %v2241
      %2251 = vmatpush.bf16.msra.mxu0 %v2240
      %2252 = vmatpush.bf16.msra.mxu0 %v2239
      %2253 = vmatpush.bf16.msra.mxu0 %v2238
      %2254 = vmatpush.bf16.msra.mxu0 %v2237
      %2255 = vmatpush.bf16.msra.mxu0 %v2236
      %2256 = vmatpush.bf16.msra.mxu0 %v2235
      %2257 = vmatpush.bf16.msra.mxu0 %v2234
      %2258 = vmatmul.bf16.gmra.mxu0 %v2169
      %v2259 = vpop.f32.mrf.mxu0
      %v2260 = vadd.f32 0.0, %v2259
      %v2261 = vpop.f32.mrf.mxu0
      %v2262 = vadd.f32 0.0, %v2261
      %2263 = vmatmul.bf16.gmra.mxu0 %v2170
      %v2264 = vpop.f32.mrf.mxu0
      %v2265 = vadd.f32 0.0, %v2264
      %v2266 = vpop.f32.mrf.mxu0
      %v2267 = vadd.f32 0.0, %v2266
      %2268 = vmatmul.bf16.gmra.mxu0 %v2171
      %v2269 = vpop.f32.mrf.mxu0
      %v2270 = vadd.f32 0.0, %v2269
      %v2271 = vpop.f32.mrf.mxu0
      %v2272 = vadd.f32 0.0, %v2271
      %2273 = vmatmul.bf16.gmra.mxu0 %v2172
      %v2274 = vpop.f32.mrf.mxu0
      %v2275 = vadd.f32 0.0, %v2274
      %v2276 = vpop.f32.mrf.mxu0
      %v2277 = vadd.f32 0.0, %v2276
      %2278 = vmatmul.bf16.gmra.mxu0 %v2173
      %v2279 = vpop.f32.mrf.mxu0
      %v2280 = vadd.f32 0.0, %v2279
      %v2281 = vpop.f32.mrf.mxu0
      %v2282 = vadd.f32 0.0, %v2281
      %2283 = vmatmul.bf16.gmra.mxu0 %v2174
      %v2284 = vpop.f32.mrf.mxu0
      %v2285 = vadd.f32 0.0, %v2284
      %v2286 = vpop.f32.mrf.mxu0
      %v2287 = vadd.f32 0.0, %v2286
      %2288 = vmatmul.bf16.gmra.mxu0 %v2175
      %v2289 = vpop.f32.mrf.mxu0
      %v2290 = vadd.f32 0.0, %v2289
      %v2291 = vpop.f32.mrf.mxu0
      %v2292 = vadd.f32 0.0, %v2291
      %2293 = vmatmul.bf16.gmra.mxu0 %v2176
      %v2294 = vpop.f32.mrf.mxu0
      %v2295 = vadd.f32 0.0, %v2294
      %v2296 = vpop.f32.mrf.mxu0
      %v2297 = vadd.f32 0.0, %v2296
      %2298 = vmatmul.bf16.gmra.mxu0 %v2177
      %v2299 = vpop.f32.mrf.mxu0
      %v2300 = vadd.f32 0.0, %v2299
      %v2301 = vpop.f32.mrf.mxu0
      %v2302 = vadd.f32 0.0, %v2301
      %2303 = vmatmul.bf16.gmra.mxu0 %v2178
      %v2304 = vpop.f32.mrf.mxu0
      %v2305 = vadd.f32 0.0, %v2304
      %v2306 = vpop.f32.mrf.mxu0
      %v2307 = vadd.f32 0.0, %v2306
      %2308 = vmatmul.bf16.gmra.mxu0 %v2179
      %v2309 = vpop.f32.mrf.mxu0
      %v2310 = vadd.f32 0.0, %v2309
      %v2311 = vpop.f32.mrf.mxu0
      %v2312 = vadd.f32 0.0, %v2311
      %2313 = vmatmul.bf16.gmra.mxu0 %v2180
      %v2314 = vpop.f32.mrf.mxu0
      %v2315 = vadd.f32 0.0, %v2314
      %v2316 = vpop.f32.mrf.mxu0
      %v2317 = vadd.f32 0.0, %v2316
      %2318 = vmatmul.bf16.gmra.mxu0 %v2181
      %v2319 = vpop.f32.mrf.mxu0
      %v2320 = vadd.f32 0.0, %v2319
      %v2321 = vpop.f32.mrf.mxu0
      %v2322 = vadd.f32 0.0, %v2321
      %2323 = vmatmul.bf16.gmra.mxu0 %v2182
      %v2324 = vpop.f32.mrf.mxu0
      %v2325 = vadd.f32 0.0, %v2324
      %v2326 = vpop.f32.mrf.mxu0
      %v2327 = vadd.f32 0.0, %v2326
      %2328 = vmatmul.bf16.gmra.mxu0 %v2183
      %v2329 = vpop.f32.mrf.mxu0
      %v2330 = vadd.f32 0.0, %v2329
      %v2331 = vpop.f32.mrf.mxu0
      %v2332 = vadd.f32 0.0, %v2331
      %2333 = vmatmul.bf16.gmra.mxu0 %v2184
      %v2334 = vpop.f32.mrf.mxu0
      %v2335 = vadd.f32 0.0, %v2334
      %v2336 = vpop.f32.mrf.mxu0
      %v2337 = vadd.f32 0.0, %v2336
      %2338 = vdwg.mxu0
      %v2339 = vpack.c.bf16 %v2260, %v2260
      %v2340 = vpack.c.bf16 %v2262, %v2262
      %v2341 = vpack.c.bf16 %v2265, %v2265
      %v2342 = vpack.c.bf16 %v2267, %v2267
      %v2343 = vpack.c.bf16 %v2270, %v2270
      %v2344 = vpack.c.bf16 %v2272, %v2272
      %v2345 = vpack.c.bf16 %v2275, %v2275
      %v2346 = vpack.c.bf16 %v2277, %v2277
      %v2347 = vpack.c.bf16 %v2280, %v2280
      %v2348 = vpack.c.bf16 %v2282, %v2282
      %v2349 = vpack.c.bf16 %v2285, %v2285
      %v2350 = vpack.c.bf16 %v2287, %v2287
      %v2351 = vpack.c.bf16 %v2290, %v2290
      %v2352 = vpack.c.bf16 %v2292, %v2292
      %v2353 = vpack.c.bf16 %v2295, %v2295
      %v2354 = vpack.c.bf16 %v2297, %v2297
      %v2355 = vpack.c.bf16 %v2300, %v2300
      %v2356 = vpack.c.bf16 %v2302, %v2302
      %v2357 = vpack.c.bf16 %v2305, %v2305
      %v2358 = vpack.c.bf16 %v2307, %v2307
      %v2359 = vpack.c.bf16 %v2310, %v2310
      %v2360 = vpack.c.bf16 %v2312, %v2312
      %v2361 = vpack.c.bf16 %v2315, %v2315
      %v2362 = vpack.c.bf16 %v2317, %v2317
      %v2363 = vpack.c.bf16 %v2320, %v2320
      %v2364 = vpack.c.bf16 %v2322, %v2322
      %v2365 = vpack.c.bf16 %v2325, %v2325
      %v2366 = vpack.c.bf16 %v2327, %v2327
      %v2367 = vpack.c.bf16 %v2330, %v2330
      %v2368 = vpack.c.bf16 %v2332, %v2332
      %v2369 = vpack.c.bf16 %v2335, %v2335
      %v2370 = vpack.c.bf16 %v2337, %v2337
      %v2371 = vld [vmem:[%s3] sm:$0x4]
      %v2373 = vpack.i.b16 %v2371, %v2371
      %v2375 = vperm.slane %v2373, 2
      %v2376 = vunpack.c.l.bf16 %v2339
      %v2377 = vunpack.c.l.bf16 %v2340
      %v2378 = vunpack.c.l.bf16 %v2341
      %v2379 = vunpack.c.l.bf16 %v2342
      %v2380 = vunpack.c.l.bf16 %v2343
      %v2381 = vunpack.c.l.bf16 %v2344
      %v2382 = vunpack.c.l.bf16 %v2345
      %v2383 = vunpack.c.l.bf16 %v2346
      %v2384 = vunpack.c.l.bf16 %v2347
      %v2385 = vunpack.c.l.bf16 %v2348
      %v2386 = vunpack.c.l.bf16 %v2349
      %v2387 = vunpack.c.l.bf16 %v2350
      %v2388 = vunpack.c.l.bf16 %v2351
      %v2389 = vunpack.c.l.bf16 %v2352
      %v2390 = vunpack.c.l.bf16 %v2353
      %v2391 = vunpack.c.l.bf16 %v2354
      %v2392 = vunpack.c.l.bf16 %v2355
      %v2393 = vunpack.c.l.bf16 %v2356
      %v2394 = vunpack.c.l.bf16 %v2357
      %v2395 = vunpack.c.l.bf16 %v2358
      %v2396 = vunpack.c.l.bf16 %v2359
      %v2397 = vunpack.c.l.bf16 %v2360
      %v2398 = vunpack.c.l.bf16 %v2361
      %v2399 = vunpack.c.l.bf16 %v2362
      %v2400 = vunpack.c.l.bf16 %v2363
      %v2401 = vunpack.c.l.bf16 %v2364
      %v2402 = vunpack.c.l.bf16 %v2365
      %v2403 = vunpack.c.l.bf16 %v2366
      %v2404 = vunpack.c.l.bf16 %v2367
      %v2405 = vunpack.c.l.bf16 %v2368
      %v2406 = vunpack.c.l.bf16 %v2369
      %v2407 = vunpack.c.l.bf16 %v2370
      %v2408 = vunpack.c.l.bf16 %v2375
      %v2409 = vadd.f32 %v2376, %v2408
      %v2410 = vadd.f32 %v2377, %v2408
      %v2411 = vadd.f32 %v2378, %v2408
      %v2412 = vadd.f32 %v2379, %v2408
      %v2413 = vadd.f32 %v2380, %v2408
      %v2414 = vadd.f32 %v2381, %v2408
      %v2415 = vadd.f32 %v2382, %v2408
      %v2416 = vadd.f32 %v2383, %v2408
      %v2417 = vadd.f32 %v2384, %v2408
      %v2418 = vadd.f32 %v2385, %v2408
      %v2419 = vadd.f32 %v2386, %v2408
      %v2420 = vadd.f32 %v2387, %v2408
      %v2421 = vadd.f32 %v2388, %v2408
      %v2422 = vadd.f32 %v2389, %v2408
      %v2423 = vadd.f32 %v2390, %v2408
      %v2424 = vadd.f32 %v2391, %v2408
      %v2425 = vadd.f32 %v2392, %v2408
      %v2426 = vadd.f32 %v2393, %v2408
      %v2427 = vadd.f32 %v2394, %v2408
      %v2428 = vadd.f32 %v2395, %v2408
      %v2429 = vadd.f32 %v2396, %v2408
      %v2430 = vadd.f32 %v2397, %v2408
      %v2431 = vadd.f32 %v2398, %v2408
      %v2432 = vadd.f32 %v2399, %v2408
      %v2433 = vadd.f32 %v2400, %v2408
      %v2434 = vadd.f32 %v2401, %v2408
      %v2435 = vadd.f32 %v2402, %v2408
      %v2436 = vadd.f32 %v2403, %v2408
      %v2437 = vadd.f32 %v2404, %v2408
      %v2438 = vadd.f32 %v2405, %v2408
      %v2439 = vadd.f32 %v2406, %v2408
      %v2440 = vadd.f32 %v2407, %v2408
      %v2441 = vpack.c.bf16 %v2409, %v2409
      %v2442 = vpack.c.bf16 %v2410, %v2410
      %v2443 = vpack.c.bf16 %v2411, %v2411
      %v2444 = vpack.c.bf16 %v2412, %v2412
      %v2445 = vpack.c.bf16 %v2413, %v2413
      %v2446 = vpack.c.bf16 %v2414, %v2414
      %v2447 = vpack.c.bf16 %v2415, %v2415
      %v2448 = vpack.c.bf16 %v2416, %v2416
      %v2449 = vpack.c.bf16 %v2417, %v2417
      %v2450 = vpack.c.bf16 %v2418, %v2418
      %v2451 = vpack.c.bf16 %v2419, %v2419
      %v2452 = vpack.c.bf16 %v2420, %v2420
      %v2453 = vpack.c.bf16 %v2421, %v2421
      %v2454 = vpack.c.bf16 %v2422, %v2422
      %v2455 = vpack.c.bf16 %v2423, %v2423
      %v2456 = vpack.c.bf16 %v2424, %v2424
      %v2457 = vpack.c.bf16 %v2425, %v2425
      %v2458 = vpack.c.bf16 %v2426, %v2426
      %v2459 = vpack.c.bf16 %v2427, %v2427
      %v2460 = vpack.c.bf16 %v2428, %v2428
      %v2461 = vpack.c.bf16 %v2429, %v2429
      %v2462 = vpack.c.bf16 %v2430, %v2430
      %v2463 = vpack.c.bf16 %v2431, %v2431
      %v2464 = vpack.c.bf16 %v2432, %v2432
      %v2465 = vpack.c.bf16 %v2433, %v2433
      %v2466 = vpack.c.bf16 %v2434, %v2434
      %v2467 = vpack.c.bf16 %v2435, %v2435
      %v2468 = vpack.c.bf16 %v2436, %v2436
      %v2469 = vpack.c.bf16 %v2437, %v2437
      %v2470 = vpack.c.bf16 %v2438, %v2438
      %v2471 = vpack.c.bf16 %v2439, %v2439
      %v2472 = vpack.c.bf16 %v2440, %v2440
      %v2473 = vunpack.c.l.bf16 %v2441
      %v2474 = vunpack.c.l.bf16 %v2442
      %v2475 = vunpack.c.l.bf16 %v2443
      %v2476 = vunpack.c.l.bf16 %v2444
      %v2477 = vunpack.c.l.bf16 %v2445
      %v2478 = vunpack.c.l.bf16 %v2446
      %v2479 = vunpack.c.l.bf16 %v2447
      %v2480 = vunpack.c.l.bf16 %v2448
      %v2481 = vunpack.c.l.bf16 %v2449
      %v2482 = vunpack.c.l.bf16 %v2450
      %v2483 = vunpack.c.l.bf16 %v2451
      %v2484 = vunpack.c.l.bf16 %v2452
      %v2485 = vunpack.c.l.bf16 %v2453
      %v2486 = vunpack.c.l.bf16 %v2454
      %v2487 = vunpack.c.l.bf16 %v2455
      %v2488 = vunpack.c.l.bf16 %v2456
      %v2489 = vunpack.c.l.bf16 %v2457
      %v2490 = vunpack.c.l.bf16 %v2458
      %v2491 = vunpack.c.l.bf16 %v2459
      %v2492 = vunpack.c.l.bf16 %v2460
      %v2493 = vunpack.c.l.bf16 %v2461
      %v2494 = vunpack.c.l.bf16 %v2462
      %v2495 = vunpack.c.l.bf16 %v2463
      %v2496 = vunpack.c.l.bf16 %v2464
      %v2497 = vunpack.c.l.bf16 %v2465
      %v2498 = vunpack.c.l.bf16 %v2466
      %v2499 = vunpack.c.l.bf16 %v2467
      %v2500 = vunpack.c.l.bf16 %v2468
      %v2501 = vunpack.c.l.bf16 %v2469
      %v2502 = vunpack.c.l.bf16 %v2470
      %v2503 = vunpack.c.l.bf16 %v2471
      %v2504 = vunpack.c.l.bf16 %v2472
      %v2505 = vunpack.c.l.bf16 %v806
      %v2506 = vunpack.c.l.bf16 %v807
      %v2507 = vunpack.c.l.bf16 %v808
      %v2508 = vunpack.c.l.bf16 %v809
      %v2509 = vunpack.c.l.bf16 %v810
      %v2510 = vunpack.c.l.bf16 %v811
      %v2511 = vunpack.c.l.bf16 %v812
      %v2512 = vunpack.c.l.bf16 %v813
      %v2513 = vunpack.c.l.bf16 %v814
      %v2514 = vunpack.c.l.bf16 %v815
      %v2515 = vunpack.c.l.bf16 %v816
      %v2516 = vunpack.c.l.bf16 %v817
      %v2517 = vunpack.c.l.bf16 %v818
      %v2518 = vunpack.c.l.bf16 %v819
      %v2519 = vunpack.c.l.bf16 %v820
      %v2520 = vunpack.c.l.bf16 %v821
      %v2521 = vunpack.c.l.bf16 %v822
      %v2522 = vunpack.c.l.bf16 %v823
      %v2523 = vunpack.c.l.bf16 %v824
      %v2524 = vunpack.c.l.bf16 %v825
      %v2525 = vunpack.c.l.bf16 %v826
      %v2526 = vunpack.c.l.bf16 %v827
      %v2527 = vunpack.c.l.bf16 %v828
      %v2528 = vunpack.c.l.bf16 %v829
      %v2529 = vunpack.c.l.bf16 %v830
      %v2530 = vunpack.c.l.bf16 %v831
      %v2531 = vunpack.c.l.bf16 %v832
      %v2532 = vunpack.c.l.bf16 %v833
      %v2533 = vunpack.c.l.bf16 %v834
      %v2534 = vunpack.c.l.bf16 %v835
      %v2535 = vunpack.c.l.bf16 %v836
      %v2536 = vunpack.c.l.bf16 %v837
      %v2537 = vadd.f32 %v2473, %v2505
      %v2538 = vadd.f32 %v2474, %v2506
      %v2539 = vadd.f32 %v2475, %v2507
      %v2540 = vadd.f32 %v2476, %v2508
      %v2541 = vadd.f32 %v2477, %v2509
      %v2542 = vadd.f32 %v2478, %v2510
      %v2543 = vadd.f32 %v2479, %v2511
      %v2544 = vadd.f32 %v2480, %v2512
      %v2545 = vadd.f32 %v2481, %v2513
      %v2546 = vadd.f32 %v2482, %v2514
      %v2547 = vadd.f32 %v2483, %v2515
      %v2548 = vadd.f32 %v2484, %v2516
      %v2549 = vadd.f32 %v2485, %v2517
      %v2550 = vadd.f32 %v2486, %v2518
      %v2551 = vadd.f32 %v2487, %v2519
      %v2552 = vadd.f32 %v2488, %v2520
      %v2553 = vadd.f32 %v2489, %v2521
      %v2554 = vadd.f32 %v2490, %v2522
      %v2555 = vadd.f32 %v2491, %v2523
      %v2556 = vadd.f32 %v2492, %v2524
      %v2557 = vadd.f32 %v2493, %v2525
      %v2558 = vadd.f32 %v2494, %v2526
      %v2559 = vadd.f32 %v2495, %v2527
      %v2560 = vadd.f32 %v2496, %v2528
      %v2561 = vadd.f32 %v2497, %v2529
      %v2562 = vadd.f32 %v2498, %v2530
      %v2563 = vadd.f32 %v2499, %v2531
      %v2564 = vadd.f32 %v2500, %v2532
      %v2565 = vadd.f32 %v2501, %v2533
      %v2566 = vadd.f32 %v2502, %v2534
      %v2567 = vadd.f32 %v2503, %v2535
      %v2568 = vadd.f32 %v2504, %v2536
      %v2569 = vpack.c.bf16 %v2537, %v2537
      %v2570 = vpack.c.bf16 %v2538, %v2538
      %v2571 = vpack.c.bf16 %v2539, %v2539
      %v2572 = vpack.c.bf16 %v2540, %v2540
      %v2573 = vpack.c.bf16 %v2541, %v2541
      %v2574 = vpack.c.bf16 %v2542, %v2542
      %v2575 = vpack.c.bf16 %v2543, %v2543
      %v2576 = vpack.c.bf16 %v2544, %v2544
      %v2577 = vpack.c.bf16 %v2545, %v2545
      %v2578 = vpack.c.bf16 %v2546, %v2546
      %v2579 = vpack.c.bf16 %v2547, %v2547
      %v2580 = vpack.c.bf16 %v2548, %v2548
      %v2581 = vpack.c.bf16 %v2549, %v2549
      %v2582 = vpack.c.bf16 %v2550, %v2550
      %v2583 = vpack.c.bf16 %v2551, %v2551
      %v2584 = vpack.c.bf16 %v2552, %v2552
      %v2585 = vpack.c.bf16 %v2553, %v2553
      %v2586 = vpack.c.bf16 %v2554, %v2554
      %v2587 = vpack.c.bf16 %v2555, %v2555
      %v2588 = vpack.c.bf16 %v2556, %v2556
      %v2589 = vpack.c.bf16 %v2557, %v2557
      %v2590 = vpack.c.bf16 %v2558, %v2558
      %v2591 = vpack.c.bf16 %v2559, %v2559
      %v2592 = vpack.c.bf16 %v2560, %v2560
      %v2593 = vpack.c.bf16 %v2561, %v2561
      %v2594 = vpack.c.bf16 %v2562, %v2562
      %v2595 = vpack.c.bf16 %v2563, %v2563
      %v2596 = vpack.c.bf16 %v2564, %v2564
      %v2597 = vpack.c.bf16 %v2565, %v2565
      %v2598 = vpack.c.bf16 %v2566, %v2566
      %v2599 = vpack.c.bf16 %v2567, %v2567
      %v2600 = vpack.c.bf16 %v2568, %v2568
      %v2601 = vunpack.c.l.bf16 %v2569
      %v2602 = vunpack.c.l.bf16 %v2570
      %v2603 = vunpack.c.l.bf16 %v2571
      %v2604 = vunpack.c.l.bf16 %v2572
      %v2605 = vunpack.c.l.bf16 %v2573
      %v2606 = vunpack.c.l.bf16 %v2574
      %v2607 = vunpack.c.l.bf16 %v2575
      %v2608 = vunpack.c.l.bf16 %v2576
      %v2609 = vunpack.c.l.bf16 %v2577
      %v2610 = vunpack.c.l.bf16 %v2578
      %v2611 = vunpack.c.l.bf16 %v2579
      %v2612 = vunpack.c.l.bf16 %v2580
      %v2613 = vunpack.c.l.bf16 %v2581
      %v2614 = vunpack.c.l.bf16 %v2582
      %v2615 = vunpack.c.l.bf16 %v2583
      %v2616 = vunpack.c.l.bf16 %v2584
      %v2617 = vunpack.c.l.bf16 %v2585
      %v2618 = vunpack.c.l.bf16 %v2586
      %v2619 = vunpack.c.l.bf16 %v2587
      %v2620 = vunpack.c.l.bf16 %v2588
      %v2621 = vunpack.c.l.bf16 %v2589
      %v2622 = vunpack.c.l.bf16 %v2590
      %v2623 = vunpack.c.l.bf16 %v2591
      %v2624 = vunpack.c.l.bf16 %v2592
      %v2625 = vunpack.c.l.bf16 %v2593
      %v2626 = vunpack.c.l.bf16 %v2594
      %v2627 = vunpack.c.l.bf16 %v2595
      %v2628 = vunpack.c.l.bf16 %v2596
      %v2629 = vunpack.c.l.bf16 %v2597
      %v2630 = vunpack.c.l.bf16 %v2598
      %v2631 = vunpack.c.l.bf16 %v2599
      %v2632 = vunpack.c.l.bf16 %v2600
      %v2633 = vmax.f32 %v2601, 0.0
      %v2634 = vmax.f32 %v2602, 0.0
      %v2635 = vmax.f32 %v2603, 0.0
      %v2636 = vmax.f32 %v2604, 0.0
      %v2637 = vmax.f32 %v2605, 0.0
      %v2638 = vmax.f32 %v2606, 0.0
      %v2639 = vmax.f32 %v2607, 0.0
      %v2640 = vmax.f32 %v2608, 0.0
      %v2641 = vmax.f32 %v2609, 0.0
      %v2642 = vmax.f32 %v2610, 0.0
      %v2643 = vmax.f32 %v2611, 0.0
      %v2644 = vmax.f32 %v2612, 0.0
      %v2645 = vmax.f32 %v2613, 0.0
      %v2646 = vmax.f32 %v2614, 0.0
      %v2647 = vmax.f32 %v2615, 0.0
      %v2648 = vmax.f32 %v2616, 0.0
      %v2649 = vmax.f32 %v2617, 0.0
      %v2650 = vmax.f32 %v2618, 0.0
      %v2651 = vmax.f32 %v2619, 0.0
      %v2652 = vmax.f32 %v2620, 0.0
      %v2653 = vmax.f32 %v2621, 0.0
      %v2654 = vmax.f32 %v2622, 0.0
      %v2655 = vmax.f32 %v2623, 0.0
      %v2656 = vmax.f32 %v2624, 0.0
      %v2657 = vmax.f32 %v2625, 0.0
      %v2658 = vmax.f32 %v2626, 0.0
      %v2659 = vmax.f32 %v2627, 0.0
      %v2660 = vmax.f32 %v2628, 0.0
      %v2661 = vmax.f32 %v2629, 0.0
      %v2662 = vmax.f32 %v2630, 0.0
      %v2663 = vmax.f32 %v2631, 0.0
      %v2664 = vmax.f32 %v2632, 0.0
      %v2665 = vpack.c.bf16 %v2634, %v2633
      %v2666 = vpack.c.bf16 %v2636, %v2635
      %v2667 = vpack.c.bf16 %v2638, %v2637
      %v2668 = vpack.c.bf16 %v2640, %v2639
      %v2669 = vpack.c.bf16 %v2642, %v2641
      %v2670 = vpack.c.bf16 %v2644, %v2643
      %v2671 = vpack.c.bf16 %v2646, %v2645
      %v2672 = vpack.c.bf16 %v2648, %v2647
      %v2673 = vpack.c.bf16 %v2650, %v2649
      %v2674 = vpack.c.bf16 %v2652, %v2651
      %v2675 = vpack.c.bf16 %v2654, %v2653
      %v2676 = vpack.c.bf16 %v2656, %v2655
      %v2677 = vpack.c.bf16 %v2658, %v2657
      %v2678 = vpack.c.bf16 %v2660, %v2659
      %v2679 = vpack.c.bf16 %v2662, %v2661
      %v2680 = vpack.c.bf16 %v2664, %v2663
      %s2681 = scalar_lea.vmem %s2, 256
      %v2682 = vld [vmem:[%s2681] sm:$0xf]
      %v2683 = vld [vmem:[%s2681 + $0x4] sm:$0xf]
      %v2684 = vld [vmem:[%s2681 + $0x8] sm:$0xf]
      %v2685 = vld [vmem:[%s2681 + $0xc] sm:$0xf]
      %v2686 = vld [vmem:[%s2681 + $0x10] sm:$0xf]
      %v2687 = vld [vmem:[%s2681 + $0x14] sm:$0xf]
      %v2688 = vld [vmem:[%s2681 + $0x18] sm:$0xf]
      %v2689 = vld [vmem:[%s2681 + $0x1c] sm:$0xf]
      %v2690 = vld [vmem:[%s2681 + $0x20] sm:$0xf]
      %v2691 = vld [vmem:[%s2681 + $0x24] sm:$0xf]
      %v2692 = vld [vmem:[%s2681 + $0x28] sm:$0xf]
      %v2693 = vld [vmem:[%s2681 + $0x2c] sm:$0xf]
      %v2694 = vld [vmem:[%s2681 + $0x30] sm:$0xf]
      %v2695 = vld [vmem:[%s2681 + $0x34] sm:$0xf]
      %v2696 = vld [vmem:[%s2681 + $0x38] sm:$0xf]
      %v2697 = vld [vmem:[%s2681 + $0x3c] sm:$0xf]
      %v2714 = vunpack.c.l.b16 %v2682
      %v2715 = vunpack.c.l.b16 %v2683
      %v2716 = vunpack.c.l.b16 %v2684
      %v2717 = vunpack.c.l.b16 %v2685
      %v2718 = vunpack.c.l.b16 %v2686
      %v2719 = vunpack.c.l.b16 %v2687
      %v2720 = vunpack.c.l.b16 %v2688
      %v2721 = vunpack.c.l.b16 %v2689
      %v2722 = vunpack.c.l.b16 %v2690
      %v2723 = vunpack.c.l.b16 %v2691
      %v2724 = vunpack.c.l.b16 %v2692
      %v2725 = vunpack.c.l.b16 %v2693
      %v2726 = vunpack.c.l.b16 %v2694
      %v2727 = vunpack.c.l.b16 %v2695
      %v2728 = vunpack.c.l.b16 %v2696
      %v2729 = vunpack.c.l.b16 %v2697
      %v2730 = vpack.c.b16 %v2715, %v2714
      %v2731 = vpack.c.b16 %v2717, %v2716
      %v2732 = vpack.c.b16 %v2719, %v2718
      %v2733 = vpack.c.b16 %v2721, %v2720
      %v2734 = vpack.c.b16 %v2723, %v2722
      %v2735 = vpack.c.b16 %v2725, %v2724
      %v2736 = vpack.c.b16 %v2727, %v2726
      %v2737 = vpack.c.b16 %v2729, %v2728
      %2746 = vmatpush.bf16.msra.mxu0 %v2737
      %2747 = vmatpush.bf16.msra.mxu0 %v2736
      %2748 = vmatpush.bf16.msra.mxu0 %v2735
      %2749 = vmatpush.bf16.msra.mxu0 %v2734
      %2750 = vmatpush.bf16.msra.mxu0 %v2733
      %2751 = vmatpush.bf16.msra.mxu0 %v2732
      %2752 = vmatpush.bf16.msra.mxu0 %v2731
      %2753 = vmatpush.bf16.msra.mxu0 %v2730
      %2754 = vmatmul.bf16.gmra.mxu0 %v2665
      %v2755 = vpop.f32.mrf.mxu0
      %v2756 = vadd.f32 0.0, %v2755
      %v2757 = vpop.f32.mrf.mxu0
      %v2758 = vadd.f32 0.0, %v2757
      %2759 = vmatmul.bf16.gmra.mxu0 %v2666
      %v2760 = vpop.f32.mrf.mxu0
      %v2761 = vadd.f32 0.0, %v2760
      %v2762 = vpop.f32.mrf.mxu0
      %v2763 = vadd.f32 0.0, %v2762
      %2764 = vmatmul.bf16.gmra.mxu0 %v2667
      %v2765 = vpop.f32.mrf.mxu0
      %v2766 = vadd.f32 0.0, %v2765
      %v2767 = vpop.f32.mrf.mxu0
      %v2768 = vadd.f32 0.0, %v2767
      %2769 = vmatmul.bf16.gmra.mxu0 %v2668
      %v2770 = vpop.f32.mrf.mxu0
      %v2771 = vadd.f32 0.0, %v2770
      %v2772 = vpop.f32.mrf.mxu0
      %v2773 = vadd.f32 0.0, %v2772
      %2774 = vmatmul.bf16.gmra.mxu0 %v2669
      %v2775 = vpop.f32.mrf.mxu0
      %v2776 = vadd.f32 0.0, %v2775
      %v2777 = vpop.f32.mrf.mxu0
      %v2778 = vadd.f32 0.0, %v2777
      %2779 = vmatmul.bf16.gmra.mxu0 %v2670
      %v2780 = vpop.f32.mrf.mxu0
      %v2781 = vadd.f32 0.0, %v2780
      %v2782 = vpop.f32.mrf.mxu0
      %v2783 = vadd.f32 0.0, %v2782
      %2784 = vmatmul.bf16.gmra.mxu0 %v2671
      %v2785 = vpop.f32.mrf.mxu0
      %v2786 = vadd.f32 0.0, %v2785
      %v2787 = vpop.f32.mrf.mxu0
      %v2788 = vadd.f32 0.0, %v2787
      %2789 = vmatmul.bf16.gmra.mxu0 %v2672
      %v2790 = vpop.f32.mrf.mxu0
      %v2791 = vadd.f32 0.0, %v2790
      %v2792 = vpop.f32.mrf.mxu0
      %v2793 = vadd.f32 0.0, %v2792
      %2794 = vmatmul.bf16.gmra.mxu0 %v2673
      %v2795 = vpop.f32.mrf.mxu0
      %v2796 = vadd.f32 0.0, %v2795
      %v2797 = vpop.f32.mrf.mxu0
      %v2798 = vadd.f32 0.0, %v2797
      %2799 = vmatmul.bf16.gmra.mxu0 %v2674
      %v2800 = vpop.f32.mrf.mxu0
      %v2801 = vadd.f32 0.0, %v2800
      %v2802 = vpop.f32.mrf.mxu0
      %v2803 = vadd.f32 0.0, %v2802
      %2804 = vmatmul.bf16.gmra.mxu0 %v2675
      %v2805 = vpop.f32.mrf.mxu0
      %v2806 = vadd.f32 0.0, %v2805
      %v2807 = vpop.f32.mrf.mxu0
      %v2808 = vadd.f32 0.0, %v2807
      %2809 = vmatmul.bf16.gmra.mxu0 %v2676
      %v2810 = vpop.f32.mrf.mxu0
      %v2811 = vadd.f32 0.0, %v2810
      %v2812 = vpop.f32.mrf.mxu0
      %v2813 = vadd.f32 0.0, %v2812
      %2814 = vmatmul.bf16.gmra.mxu0 %v2677
      %v2815 = vpop.f32.mrf.mxu0
      %v2816 = vadd.f32 0.0, %v2815
      %v2817 = vpop.f32.mrf.mxu0
      %v2818 = vadd.f32 0.0, %v2817
      %2819 = vmatmul.bf16.gmra.mxu0 %v2678
      %v2820 = vpop.f32.mrf.mxu0
      %v2821 = vadd.f32 0.0, %v2820
      %v2822 = vpop.f32.mrf.mxu0
      %v2823 = vadd.f32 0.0, %v2822
      %2824 = vmatmul.bf16.gmra.mxu0 %v2679
      %v2825 = vpop.f32.mrf.mxu0
      %v2826 = vadd.f32 0.0, %v2825
      %v2827 = vpop.f32.mrf.mxu0
      %v2828 = vadd.f32 0.0, %v2827
      %2829 = vmatmul.bf16.gmra.mxu0 %v2680
      %v2830 = vpop.f32.mrf.mxu0
      %v2831 = vadd.f32 0.0, %v2830
      %v2832 = vpop.f32.mrf.mxu0
      %v2833 = vadd.f32 0.0, %v2832
      %2834 = vdwg.mxu0
      %v2835 = vpack.c.bf16 %v2756, %v2756
      %v2836 = vpack.c.bf16 %v2758, %v2758
      %v2837 = vpack.c.bf16 %v2761, %v2761
      %v2838 = vpack.c.bf16 %v2763, %v2763
      %v2839 = vpack.c.bf16 %v2766, %v2766
      %v2840 = vpack.c.bf16 %v2768, %v2768
      %v2841 = vpack.c.bf16 %v2771, %v2771
      %v2842 = vpack.c.bf16 %v2773, %v2773
      %v2843 = vpack.c.bf16 %v2776, %v2776
      %v2844 = vpack.c.bf16 %v2778, %v2778
      %v2845 = vpack.c.bf16 %v2781, %v2781
      %v2846 = vpack.c.bf16 %v2783, %v2783
      %v2847 = vpack.c.bf16 %v2786, %v2786
      %v2848 = vpack.c.bf16 %v2788, %v2788
      %v2849 = vpack.c.bf16 %v2791, %v2791
      %v2850 = vpack.c.bf16 %v2793, %v2793
      %v2851 = vpack.c.bf16 %v2796, %v2796
      %v2852 = vpack.c.bf16 %v2798, %v2798
      %v2853 = vpack.c.bf16 %v2801, %v2801
      %v2854 = vpack.c.bf16 %v2803, %v2803
      %v2855 = vpack.c.bf16 %v2806, %v2806
      %v2856 = vpack.c.bf16 %v2808, %v2808
      %v2857 = vpack.c.bf16 %v2811, %v2811
      %v2858 = vpack.c.bf16 %v2813, %v2813
      %v2859 = vpack.c.bf16 %v2816, %v2816
      %v2860 = vpack.c.bf16 %v2818, %v2818
      %v2861 = vpack.c.bf16 %v2821, %v2821
      %v2862 = vpack.c.bf16 %v2823, %v2823
      %v2863 = vpack.c.bf16 %v2826, %v2826
      %v2864 = vpack.c.bf16 %v2828, %v2828
      %v2865 = vpack.c.bf16 %v2831, %v2831
      %v2866 = vpack.c.bf16 %v2833, %v2833
      %v2867 = vshrl.u32 %v2371, 16
      %v2868 = vpack.i.b16 %v2867, %v2867
      %v2870 = vperm.slane %v2868, 2
      %v2871 = vunpack.c.l.bf16 %v2835
      %v2872 = vunpack.c.l.bf16 %v2836
      %v2873 = vunpack.c.l.bf16 %v2837
      %v2874 = vunpack.c.l.bf16 %v2838
      %v2875 = vunpack.c.l.bf16 %v2839
      %v2876 = vunpack.c.l.bf16 %v2840
      %v2877 = vunpack.c.l.bf16 %v2841
      %v2878 = vunpack.c.l.bf16 %v2842
      %v2879 = vunpack.c.l.bf16 %v2843
      %v2880 = vunpack.c.l.bf16 %v2844
      %v2881 = vunpack.c.l.bf16 %v2845
      %v2882 = vunpack.c.l.bf16 %v2846
      %v2883 = vunpack.c.l.bf16 %v2847
      %v2884 = vunpack.c.l.bf16 %v2848
      %v2885 = vunpack.c.l.bf16 %v2849
      %v2886 = vunpack.c.l.bf16 %v2850
      %v2887 = vunpack.c.l.bf16 %v2851
      %v2888 = vunpack.c.l.bf16 %v2852
      %v2889 = vunpack.c.l.bf16 %v2853
      %v2890 = vunpack.c.l.bf16 %v2854
      %v2891 = vunpack.c.l.bf16 %v2855
      %v2892 = vunpack.c.l.bf16 %v2856
      %v2893 = vunpack.c.l.bf16 %v2857
      %v2894 = vunpack.c.l.bf16 %v2858
      %v2895 = vunpack.c.l.bf16 %v2859
      %v2896 = vunpack.c.l.bf16 %v2860
      %v2897 = vunpack.c.l.bf16 %v2861
      %v2898 = vunpack.c.l.bf16 %v2862
      %v2899 = vunpack.c.l.bf16 %v2863
      %v2900 = vunpack.c.l.bf16 %v2864
      %v2901 = vunpack.c.l.bf16 %v2865
      %v2902 = vunpack.c.l.bf16 %v2866
      %v2903 = vunpack.c.l.bf16 %v2870
      %v2904 = vadd.f32 %v2871, %v2903
      %v2905 = vadd.f32 %v2872, %v2903
      %v2906 = vadd.f32 %v2873, %v2903
      %v2907 = vadd.f32 %v2874, %v2903
      %v2908 = vadd.f32 %v2875, %v2903
      %v2909 = vadd.f32 %v2876, %v2903
      %v2910 = vadd.f32 %v2877, %v2903
      %v2911 = vadd.f32 %v2878, %v2903
      %v2912 = vadd.f32 %v2879, %v2903
      %v2913 = vadd.f32 %v2880, %v2903
      %v2914 = vadd.f32 %v2881, %v2903
      %v2915 = vadd.f32 %v2882, %v2903
      %v2916 = vadd.f32 %v2883, %v2903
      %v2917 = vadd.f32 %v2884, %v2903
      %v2918 = vadd.f32 %v2885, %v2903
      %v2919 = vadd.f32 %v2886, %v2903
      %v2920 = vadd.f32 %v2887, %v2903
      %v2921 = vadd.f32 %v2888, %v2903
      %v2922 = vadd.f32 %v2889, %v2903
      %v2923 = vadd.f32 %v2890, %v2903
      %v2924 = vadd.f32 %v2891, %v2903
      %v2925 = vadd.f32 %v2892, %v2903
      %v2926 = vadd.f32 %v2893, %v2903
      %v2927 = vadd.f32 %v2894, %v2903
      %v2928 = vadd.f32 %v2895, %v2903
      %v2929 = vadd.f32 %v2896, %v2903
      %v2930 = vadd.f32 %v2897, %v2903
      %v2931 = vadd.f32 %v2898, %v2903
      %v2932 = vadd.f32 %v2899, %v2903
      %v2933 = vadd.f32 %v2900, %v2903
      %v2934 = vadd.f32 %v2901, %v2903
      %v2935 = vadd.f32 %v2902, %v2903
      %v2936 = vpack.c.bf16 %v2904, %v2904
      %v2937 = vpack.c.bf16 %v2905, %v2905
      %v2938 = vpack.c.bf16 %v2906, %v2906
      %v2939 = vpack.c.bf16 %v2907, %v2907
      %v2940 = vpack.c.bf16 %v2908, %v2908
      %v2941 = vpack.c.bf16 %v2909, %v2909
      %v2942 = vpack.c.bf16 %v2910, %v2910
      %v2943 = vpack.c.bf16 %v2911, %v2911
      %v2944 = vpack.c.bf16 %v2912, %v2912
      %v2945 = vpack.c.bf16 %v2913, %v2913
      %v2946 = vpack.c.bf16 %v2914, %v2914
      %v2947 = vpack.c.bf16 %v2915, %v2915
      %v2948 = vpack.c.bf16 %v2916, %v2916
      %v2949 = vpack.c.bf16 %v2917, %v2917
      %v2950 = vpack.c.bf16 %v2918, %v2918
      %v2951 = vpack.c.bf16 %v2919, %v2919
      %v2952 = vpack.c.bf16 %v2920, %v2920
      %v2953 = vpack.c.bf16 %v2921, %v2921
      %v2954 = vpack.c.bf16 %v2922, %v2922
      %v2955 = vpack.c.bf16 %v2923, %v2923
      %v2956 = vpack.c.bf16 %v2924, %v2924
      %v2957 = vpack.c.bf16 %v2925, %v2925
      %v2958 = vpack.c.bf16 %v2926, %v2926
      %v2959 = vpack.c.bf16 %v2927, %v2927
      %v2960 = vpack.c.bf16 %v2928, %v2928
      %v2961 = vpack.c.bf16 %v2929, %v2929
      %v2962 = vpack.c.bf16 %v2930, %v2930
      %v2963 = vpack.c.bf16 %v2931, %v2931
      %v2964 = vpack.c.bf16 %v2932, %v2932
      %v2965 = vpack.c.bf16 %v2933, %v2933
      %v2966 = vpack.c.bf16 %v2934, %v2934
      %v2967 = vpack.c.bf16 %v2935, %v2935
      %v2968 = vunpack.c.l.bf16 %v2936
      %v2969 = vunpack.c.l.bf16 %v2937
      %v2970 = vunpack.c.l.bf16 %v2938
      %v2971 = vunpack.c.l.bf16 %v2939
      %v2972 = vunpack.c.l.bf16 %v2940
      %v2973 = vunpack.c.l.bf16 %v2941
      %v2974 = vunpack.c.l.bf16 %v2942
      %v2975 = vunpack.c.l.bf16 %v2943
      %v2976 = vunpack.c.l.bf16 %v2944
      %v2977 = vunpack.c.l.bf16 %v2945
      %v2978 = vunpack.c.l.bf16 %v2946
      %v2979 = vunpack.c.l.bf16 %v2947
      %v2980 = vunpack.c.l.bf16 %v2948
      %v2981 = vunpack.c.l.bf16 %v2949
      %v2982 = vunpack.c.l.bf16 %v2950
      %v2983 = vunpack.c.l.bf16 %v2951
      %v2984 = vunpack.c.l.bf16 %v2952
      %v2985 = vunpack.c.l.bf16 %v2953
      %v2986 = vunpack.c.l.bf16 %v2954
      %v2987 = vunpack.c.l.bf16 %v2955
      %v2988 = vunpack.c.l.bf16 %v2956
      %v2989 = vunpack.c.l.bf16 %v2957
      %v2990 = vunpack.c.l.bf16 %v2958
      %v2991 = vunpack.c.l.bf16 %v2959
      %v2992 = vunpack.c.l.bf16 %v2960
      %v2993 = vunpack.c.l.bf16 %v2961
      %v2994 = vunpack.c.l.bf16 %v2962
      %v2995 = vunpack.c.l.bf16 %v2963
      %v2996 = vunpack.c.l.bf16 %v2964
      %v2997 = vunpack.c.l.bf16 %v2965
      %v2998 = vunpack.c.l.bf16 %v2966
      %v2999 = vunpack.c.l.bf16 %v2967
      %v3000 = vmax.f32 %v2968, 0.0
      %v3001 = vmax.f32 %v2969, 0.0
      %v3002 = vmax.f32 %v2970, 0.0
      %v3003 = vmax.f32 %v2971, 0.0
      %v3004 = vmax.f32 %v2972, 0.0
      %v3005 = vmax.f32 %v2973, 0.0
      %v3006 = vmax.f32 %v2974, 0.0
      %v3007 = vmax.f32 %v2975, 0.0
      %v3008 = vmax.f32 %v2976, 0.0
      %v3009 = vmax.f32 %v2977, 0.0
      %v3010 = vmax.f32 %v2978, 0.0
      %v3011 = vmax.f32 %v2979, 0.0
      %v3012 = vmax.f32 %v2980, 0.0
      %v3013 = vmax.f32 %v2981, 0.0
      %v3014 = vmax.f32 %v2982, 0.0
      %v3015 = vmax.f32 %v2983, 0.0
      %v3016 = vmax.f32 %v2984, 0.0
      %v3017 = vmax.f32 %v2985, 0.0
      %v3018 = vmax.f32 %v2986, 0.0
      %v3019 = vmax.f32 %v2987, 0.0
      %v3020 = vmax.f32 %v2988, 0.0
      %v3021 = vmax.f32 %v2989, 0.0
      %v3022 = vmax.f32 %v2990, 0.0
      %v3023 = vmax.f32 %v2991, 0.0
      %v3024 = vmax.f32 %v2992, 0.0
      %v3025 = vmax.f32 %v2993, 0.0
      %v3026 = vmax.f32 %v2994, 0.0
      %v3027 = vmax.f32 %v2995, 0.0
      %v3028 = vmax.f32 %v2996, 0.0
      %v3029 = vmax.f32 %v2997, 0.0
      %v3030 = vmax.f32 %v2998, 0.0
      %v3031 = vmax.f32 %v2999, 0.0
      %v3032 = vpack.c.bf16 %v3001, %v3000
      %v3033 = vpack.c.bf16 %v3003, %v3002
      %v3034 = vpack.c.bf16 %v3005, %v3004
      %v3035 = vpack.c.bf16 %v3007, %v3006
      %v3036 = vpack.c.bf16 %v3009, %v3008
      %v3037 = vpack.c.bf16 %v3011, %v3010
      %v3038 = vpack.c.bf16 %v3013, %v3012
      %v3039 = vpack.c.bf16 %v3015, %v3014
      %v3040 = vpack.c.bf16 %v3017, %v3016
      %v3041 = vpack.c.bf16 %v3019, %v3018
      %v3042 = vpack.c.bf16 %v3021, %v3020
      %v3043 = vpack.c.bf16 %v3023, %v3022
      %v3044 = vpack.c.bf16 %v3025, %v3024
      %v3045 = vpack.c.bf16 %v3027, %v3026
      %v3046 = vpack.c.bf16 %v3029, %v3028
      %v3047 = vpack.c.bf16 %v3031, %v3030
      %s3048 = scalar_lea.vmem %s2, 320
      %v3049 = vld [vmem:[%s3048] sm:$0xf]
      %v3050 = vld [vmem:[%s3048 + $0x4] sm:$0xf]
      %v3051 = vld [vmem:[%s3048 + $0x8] sm:$0xf]
      %v3052 = vld [vmem:[%s3048 + $0xc] sm:$0xf]
      %v3053 = vld [vmem:[%s3048 + $0x10] sm:$0xf]
      %v3054 = vld [vmem:[%s3048 + $0x14] sm:$0xf]
      %v3055 = vld [vmem:[%s3048 + $0x18] sm:$0xf]
      %v3056 = vld [vmem:[%s3048 + $0x1c] sm:$0xf]
      %v3057 = vld [vmem:[%s3048 + $0x20] sm:$0xf]
      %v3058 = vld [vmem:[%s3048 + $0x24] sm:$0xf]
      %v3059 = vld [vmem:[%s3048 + $0x28] sm:$0xf]
      %v3060 = vld [vmem:[%s3048 + $0x2c] sm:$0xf]
      %v3061 = vld [vmem:[%s3048 + $0x30] sm:$0xf]
      %v3062 = vld [vmem:[%s3048 + $0x34] sm:$0xf]
      %v3063 = vld [vmem:[%s3048 + $0x38] sm:$0xf]
      %v3064 = vld [vmem:[%s3048 + $0x3c] sm:$0xf]
      %v3081 = vunpack.c.l.b16 %v3049
      %v3082 = vunpack.c.l.b16 %v3050
      %v3083 = vunpack.c.l.b16 %v3051
      %v3084 = vunpack.c.l.b16 %v3052
      %v3085 = vunpack.c.l.b16 %v3053
      %v3086 = vunpack.c.l.b16 %v3054
      %v3087 = vunpack.c.l.b16 %v3055
      %v3088 = vunpack.c.l.b16 %v3056
      %v3089 = vunpack.c.l.b16 %v3057
      %v3090 = vunpack.c.l.b16 %v3058
      %v3091 = vunpack.c.l.b16 %v3059
      %v3092 = vunpack.c.l.b16 %v3060
      %v3093 = vunpack.c.l.b16 %v3061
      %v3094 = vunpack.c.l.b16 %v3062
      %v3095 = vunpack.c.l.b16 %v3063
      %v3096 = vunpack.c.l.b16 %v3064
      %v3097 = vpack.c.b16 %v3082, %v3081
      %v3098 = vpack.c.b16 %v3084, %v3083
      %v3099 = vpack.c.b16 %v3086, %v3085
      %v3100 = vpack.c.b16 %v3088, %v3087
      %v3101 = vpack.c.b16 %v3090, %v3089
      %v3102 = vpack.c.b16 %v3092, %v3091
      %v3103 = vpack.c.b16 %v3094, %v3093
      %v3104 = vpack.c.b16 %v3096, %v3095
      %3113 = vmatpush.bf16.msra.mxu0 %v3104
      %3114 = vmatpush.bf16.msra.mxu0 %v3103
      %3115 = vmatpush.bf16.msra.mxu0 %v3102
      %3116 = vmatpush.bf16.msra.mxu0 %v3101
      %3117 = vmatpush.bf16.msra.mxu0 %v3100
      %3118 = vmatpush.bf16.msra.mxu0 %v3099
      %3119 = vmatpush.bf16.msra.mxu0 %v3098
      %3120 = vmatpush.bf16.msra.mxu0 %v3097
      %3121 = vmatmul.bf16.gmra.mxu0 %v3032
      %v3122 = vpop.f32.mrf.mxu0
      %v3123 = vadd.f32 0.0, %v3122
      %v3124 = vpop.f32.mrf.mxu0
      %v3125 = vadd.f32 0.0, %v3124
      %3126 = vmatmul.bf16.gmra.mxu0 %v3033
      %v3127 = vpop.f32.mrf.mxu0
      %v3128 = vadd.f32 0.0, %v3127
      %v3129 = vpop.f32.mrf.mxu0
      %v3130 = vadd.f32 0.0, %v3129
      %3131 = vmatmul.bf16.gmra.mxu0 %v3034
      %v3132 = vpop.f32.mrf.mxu0
      %v3133 = vadd.f32 0.0, %v3132
      %v3134 = vpop.f32.mrf.mxu0
      %v3135 = vadd.f32 0.0, %v3134
      %3136 = vmatmul.bf16.gmra.mxu0 %v3035
      %v3137 = vpop.f32.mrf.mxu0
      %v3138 = vadd.f32 0.0, %v3137
      %v3139 = vpop.f32.mrf.mxu0
      %v3140 = vadd.f32 0.0, %v3139
      %3141 = vmatmul.bf16.gmra.mxu0 %v3036
      %v3142 = vpop.f32.mrf.mxu0
      %v3143 = vadd.f32 0.0, %v3142
      %v3144 = vpop.f32.mrf.mxu0
      %v3145 = vadd.f32 0.0, %v3144
      %3146 = vmatmul.bf16.gmra.mxu0 %v3037
      %v3147 = vpop.f32.mrf.mxu0
      %v3148 = vadd.f32 0.0, %v3147
      %v3149 = vpop.f32.mrf.mxu0
      %v3150 = vadd.f32 0.0, %v3149
      %3151 = vmatmul.bf16.gmra.mxu0 %v3038
      %v3152 = vpop.f32.mrf.mxu0
      %v3153 = vadd.f32 0.0, %v3152
      %v3154 = vpop.f32.mrf.mxu0
      %v3155 = vadd.f32 0.0, %v3154
      %3156 = vmatmul.bf16.gmra.mxu0 %v3039
      %v3157 = vpop.f32.mrf.mxu0
      %v3158 = vadd.f32 0.0, %v3157
      %v3159 = vpop.f32.mrf.mxu0
      %v3160 = vadd.f32 0.0, %v3159
      %3161 = vmatmul.bf16.gmra.mxu0 %v3040
      %v3162 = vpop.f32.mrf.mxu0
      %v3163 = vadd.f32 0.0, %v3162
      %v3164 = vpop.f32.mrf.mxu0
      %v3165 = vadd.f32 0.0, %v3164
      %3166 = vmatmul.bf16.gmra.mxu0 %v3041
      %v3167 = vpop.f32.mrf.mxu0
      %v3168 = vadd.f32 0.0, %v3167
      %v3169 = vpop.f32.mrf.mxu0
      %v3170 = vadd.f32 0.0, %v3169
      %3171 = vmatmul.bf16.gmra.mxu0 %v3042
      %v3172 = vpop.f32.mrf.mxu0
      %v3173 = vadd.f32 0.0, %v3172
      %v3174 = vpop.f32.mrf.mxu0
      %v3175 = vadd.f32 0.0, %v3174
      %3176 = vmatmul.bf16.gmra.mxu0 %v3043
      %v3177 = vpop.f32.mrf.mxu0
      %v3178 = vadd.f32 0.0, %v3177
      %v3179 = vpop.f32.mrf.mxu0
      %v3180 = vadd.f32 0.0, %v3179
      %3181 = vmatmul.bf16.gmra.mxu0 %v3044
      %v3182 = vpop.f32.mrf.mxu0
      %v3183 = vadd.f32 0.0, %v3182
      %v3184 = vpop.f32.mrf.mxu0
      %v3185 = vadd.f32 0.0, %v3184
      %3186 = vmatmul.bf16.gmra.mxu0 %v3045
      %v3187 = vpop.f32.mrf.mxu0
      %v3188 = vadd.f32 0.0, %v3187
      %v3189 = vpop.f32.mrf.mxu0
      %v3190 = vadd.f32 0.0, %v3189
      %3191 = vmatmul.bf16.gmra.mxu0 %v3046
      %v3192 = vpop.f32.mrf.mxu0
      %v3193 = vadd.f32 0.0, %v3192
      %v3194 = vpop.f32.mrf.mxu0
      %v3195 = vadd.f32 0.0, %v3194
      %3196 = vmatmul.bf16.gmra.mxu0 %v3047
      %v3197 = vpop.f32.mrf.mxu0
      %v3198 = vadd.f32 0.0, %v3197
      %v3199 = vpop.f32.mrf.mxu0
      %v3200 = vadd.f32 0.0, %v3199
      %3201 = vdwg.mxu0
      %v3202 = vpack.c.bf16 %v3123, %v3123
      %v3203 = vpack.c.bf16 %v3125, %v3125
      %v3204 = vpack.c.bf16 %v3128, %v3128
      %v3205 = vpack.c.bf16 %v3130, %v3130
      %v3206 = vpack.c.bf16 %v3133, %v3133
      %v3207 = vpack.c.bf16 %v3135, %v3135
      %v3208 = vpack.c.bf16 %v3138, %v3138
      %v3209 = vpack.c.bf16 %v3140, %v3140
      %v3210 = vpack.c.bf16 %v3143, %v3143
      %v3211 = vpack.c.bf16 %v3145, %v3145
      %v3212 = vpack.c.bf16 %v3148, %v3148
      %v3213 = vpack.c.bf16 %v3150, %v3150
      %v3214 = vpack.c.bf16 %v3153, %v3153
      %v3215 = vpack.c.bf16 %v3155, %v3155
      %v3216 = vpack.c.bf16 %v3158, %v3158
      %v3217 = vpack.c.bf16 %v3160, %v3160
      %v3218 = vpack.c.bf16 %v3163, %v3163
      %v3219 = vpack.c.bf16 %v3165, %v3165
      %v3220 = vpack.c.bf16 %v3168, %v3168
      %v3221 = vpack.c.bf16 %v3170, %v3170
      %v3222 = vpack.c.bf16 %v3173, %v3173
      %v3223 = vpack.c.bf16 %v3175, %v3175
      %v3224 = vpack.c.bf16 %v3178, %v3178
      %v3225 = vpack.c.bf16 %v3180, %v3180
      %v3226 = vpack.c.bf16 %v3183, %v3183
      %v3227 = vpack.c.bf16 %v3185, %v3185
      %v3228 = vpack.c.bf16 %v3188, %v3188
      %v3229 = vpack.c.bf16 %v3190, %v3190
      %v3230 = vpack.c.bf16 %v3193, %v3193
      %v3231 = vpack.c.bf16 %v3195, %v3195
      %v3232 = vpack.c.bf16 %v3198, %v3198
      %v3233 = vpack.c.bf16 %v3200, %v3200
      %v3234 = vld [vmem:[%s3] sm:$0x8]
      %v3236 = vpack.i.b16 %v3234, %v3234
      %v3238 = vperm.slane %v3236, 3
      %v3239 = vunpack.c.l.bf16 %v3202
      %v3240 = vunpack.c.l.bf16 %v3203
      %v3241 = vunpack.c.l.bf16 %v3204
      %v3242 = vunpack.c.l.bf16 %v3205
      %v3243 = vunpack.c.l.bf16 %v3206
      %v3244 = vunpack.c.l.bf16 %v3207
      %v3245 = vunpack.c.l.bf16 %v3208
      %v3246 = vunpack.c.l.bf16 %v3209
      %v3247 = vunpack.c.l.bf16 %v3210
      %v3248 = vunpack.c.l.bf16 %v3211
      %v3249 = vunpack.c.l.bf16 %v3212
      %v3250 = vunpack.c.l.bf16 %v3213
      %v3251 = vunpack.c.l.bf16 %v3214
      %v3252 = vunpack.c.l.bf16 %v3215
      %v3253 = vunpack.c.l.bf16 %v3216
      %v3254 = vunpack.c.l.bf16 %v3217
      %v3255 = vunpack.c.l.bf16 %v3218
      %v3256 = vunpack.c.l.bf16 %v3219
      %v3257 = vunpack.c.l.bf16 %v3220
      %v3258 = vunpack.c.l.bf16 %v3221
      %v3259 = vunpack.c.l.bf16 %v3222
      %v3260 = vunpack.c.l.bf16 %v3223
      %v3261 = vunpack.c.l.bf16 %v3224
      %v3262 = vunpack.c.l.bf16 %v3225
      %v3263 = vunpack.c.l.bf16 %v3226
      %v3264 = vunpack.c.l.bf16 %v3227
      %v3265 = vunpack.c.l.bf16 %v3228
      %v3266 = vunpack.c.l.bf16 %v3229
      %v3267 = vunpack.c.l.bf16 %v3230
      %v3268 = vunpack.c.l.bf16 %v3231
      %v3269 = vunpack.c.l.bf16 %v3232
      %v3270 = vunpack.c.l.bf16 %v3233
      %v3271 = vunpack.c.l.bf16 %v3238
      %v3272 = vadd.f32 %v3239, %v3271
      %v3273 = vadd.f32 %v3240, %v3271
      %v3274 = vadd.f32 %v3241, %v3271
      %v3275 = vadd.f32 %v3242, %v3271
      %v3276 = vadd.f32 %v3243, %v3271
      %v3277 = vadd.f32 %v3244, %v3271
      %v3278 = vadd.f32 %v3245, %v3271
      %v3279 = vadd.f32 %v3246, %v3271
      %v3280 = vadd.f32 %v3247, %v3271
      %v3281 = vadd.f32 %v3248, %v3271
      %v3282 = vadd.f32 %v3249, %v3271
      %v3283 = vadd.f32 %v3250, %v3271
      %v3284 = vadd.f32 %v3251, %v3271
      %v3285 = vadd.f32 %v3252, %v3271
      %v3286 = vadd.f32 %v3253, %v3271
      %v3287 = vadd.f32 %v3254, %v3271
      %v3288 = vadd.f32 %v3255, %v3271
      %v3289 = vadd.f32 %v3256, %v3271
      %v3290 = vadd.f32 %v3257, %v3271
      %v3291 = vadd.f32 %v3258, %v3271
      %v3292 = vadd.f32 %v3259, %v3271
      %v3293 = vadd.f32 %v3260, %v3271
      %v3294 = vadd.f32 %v3261, %v3271
      %v3295 = vadd.f32 %v3262, %v3271
      %v3296 = vadd.f32 %v3263, %v3271
      %v3297 = vadd.f32 %v3264, %v3271
      %v3298 = vadd.f32 %v3265, %v3271
      %v3299 = vadd.f32 %v3266, %v3271
      %v3300 = vadd.f32 %v3267, %v3271
      %v3301 = vadd.f32 %v3268, %v3271
      %v3302 = vadd.f32 %v3269, %v3271
      %v3303 = vadd.f32 %v3270, %v3271
      %v3304 = vpack.c.bf16 %v3272, %v3272
      %v3305 = vpack.c.bf16 %v3273, %v3273
      %v3306 = vpack.c.bf16 %v3274, %v3274
      %v3307 = vpack.c.bf16 %v3275, %v3275
      %v3308 = vpack.c.bf16 %v3276, %v3276
      %v3309 = vpack.c.bf16 %v3277, %v3277
      %v3310 = vpack.c.bf16 %v3278, %v3278
      %v3311 = vpack.c.bf16 %v3279, %v3279
      %v3312 = vpack.c.bf16 %v3280, %v3280
      %v3313 = vpack.c.bf16 %v3281, %v3281
      %v3314 = vpack.c.bf16 %v3282, %v3282
      %v3315 = vpack.c.bf16 %v3283, %v3283
      %v3316 = vpack.c.bf16 %v3284, %v3284
      %v3317 = vpack.c.bf16 %v3285, %v3285
      %v3318 = vpack.c.bf16 %v3286, %v3286
      %v3319 = vpack.c.bf16 %v3287, %v3287
      %v3320 = vpack.c.bf16 %v3288, %v3288
      %v3321 = vpack.c.bf16 %v3289, %v3289
      %v3322 = vpack.c.bf16 %v3290, %v3290
      %v3323 = vpack.c.bf16 %v3291, %v3291
      %v3324 = vpack.c.bf16 %v3292, %v3292
      %v3325 = vpack.c.bf16 %v3293, %v3293
      %v3326 = vpack.c.bf16 %v3294, %v3294
      %v3327 = vpack.c.bf16 %v3295, %v3295
      %v3328 = vpack.c.bf16 %v3296, %v3296
      %v3329 = vpack.c.bf16 %v3297, %v3297
      %v3330 = vpack.c.bf16 %v3298, %v3298
      %v3331 = vpack.c.bf16 %v3299, %v3299
      %v3332 = vpack.c.bf16 %v3300, %v3300
      %v3333 = vpack.c.bf16 %v3301, %v3301
      %v3334 = vpack.c.bf16 %v3302, %v3302
      %v3335 = vpack.c.bf16 %v3303, %v3303
      %v3336 = vunpack.c.l.bf16 %v3304
      %v3337 = vunpack.c.l.bf16 %v3305
      %v3338 = vunpack.c.l.bf16 %v3306
      %v3339 = vunpack.c.l.bf16 %v3307
      %v3340 = vunpack.c.l.bf16 %v3308
      %v3341 = vunpack.c.l.bf16 %v3309
      %v3342 = vunpack.c.l.bf16 %v3310
      %v3343 = vunpack.c.l.bf16 %v3311
      %v3344 = vunpack.c.l.bf16 %v3312
      %v3345 = vunpack.c.l.bf16 %v3313
      %v3346 = vunpack.c.l.bf16 %v3314
      %v3347 = vunpack.c.l.bf16 %v3315
      %v3348 = vunpack.c.l.bf16 %v3316
      %v3349 = vunpack.c.l.bf16 %v3317
      %v3350 = vunpack.c.l.bf16 %v3318
      %v3351 = vunpack.c.l.bf16 %v3319
      %v3352 = vunpack.c.l.bf16 %v3320
      %v3353 = vunpack.c.l.bf16 %v3321
      %v3354 = vunpack.c.l.bf16 %v3322
      %v3355 = vunpack.c.l.bf16 %v3323
      %v3356 = vunpack.c.l.bf16 %v3324
      %v3357 = vunpack.c.l.bf16 %v3325
      %v3358 = vunpack.c.l.bf16 %v3326
      %v3359 = vunpack.c.l.bf16 %v3327
      %v3360 = vunpack.c.l.bf16 %v3328
      %v3361 = vunpack.c.l.bf16 %v3329
      %v3362 = vunpack.c.l.bf16 %v3330
      %v3363 = vunpack.c.l.bf16 %v3331
      %v3364 = vunpack.c.l.bf16 %v3332
      %v3365 = vunpack.c.l.bf16 %v3333
      %v3366 = vunpack.c.l.bf16 %v3334
      %v3367 = vunpack.c.l.bf16 %v3335
      %v3368 = vmax.f32 %v3336, 0.0
      %v3369 = vmax.f32 %v3337, 0.0
      %v3370 = vmax.f32 %v3338, 0.0
      %v3371 = vmax.f32 %v3339, 0.0
      %v3372 = vmax.f32 %v3340, 0.0
      %v3373 = vmax.f32 %v3341, 0.0
      %v3374 = vmax.f32 %v3342, 0.0
      %v3375 = vmax.f32 %v3343, 0.0
      %v3376 = vmax.f32 %v3344, 0.0
      %v3377 = vmax.f32 %v3345, 0.0
      %v3378 = vmax.f32 %v3346, 0.0
      %v3379 = vmax.f32 %v3347, 0.0
      %v3380 = vmax.f32 %v3348, 0.0
      %v3381 = vmax.f32 %v3349, 0.0
      %v3382 = vmax.f32 %v3350, 0.0
      %v3383 = vmax.f32 %v3351, 0.0
      %v3384 = vmax.f32 %v3352, 0.0
      %v3385 = vmax.f32 %v3353, 0.0
      %v3386 = vmax.f32 %v3354, 0.0
      %v3387 = vmax.f32 %v3355, 0.0
      %v3388 = vmax.f32 %v3356, 0.0
      %v3389 = vmax.f32 %v3357, 0.0
      %v3390 = vmax.f32 %v3358, 0.0
      %v3391 = vmax.f32 %v3359, 0.0
      %v3392 = vmax.f32 %v3360, 0.0
      %v3393 = vmax.f32 %v3361, 0.0
      %v3394 = vmax.f32 %v3362, 0.0
      %v3395 = vmax.f32 %v3363, 0.0
      %v3396 = vmax.f32 %v3364, 0.0
      %v3397 = vmax.f32 %v3365, 0.0
      %v3398 = vmax.f32 %v3366, 0.0
      %v3399 = vmax.f32 %v3367, 0.0
      %v3400 = vpack.c.bf16 %v3369, %v3368
      %v3401 = vpack.c.bf16 %v3371, %v3370
      %v3402 = vpack.c.bf16 %v3373, %v3372
      %v3403 = vpack.c.bf16 %v3375, %v3374
      %v3404 = vpack.c.bf16 %v3377, %v3376
      %v3405 = vpack.c.bf16 %v3379, %v3378
      %v3406 = vpack.c.bf16 %v3381, %v3380
      %v3407 = vpack.c.bf16 %v3383, %v3382
      %v3408 = vpack.c.bf16 %v3385, %v3384
      %v3409 = vpack.c.bf16 %v3387, %v3386
      %v3410 = vpack.c.bf16 %v3389, %v3388
      %v3411 = vpack.c.bf16 %v3391, %v3390
      %v3412 = vpack.c.bf16 %v3393, %v3392
      %v3413 = vpack.c.bf16 %v3395, %v3394
      %v3414 = vpack.c.bf16 %v3397, %v3396
      %v3415 = vpack.c.bf16 %v3399, %v3398
      %s3416 = scalar_lea.vmem %s2, 384
      %v3417 = vld [vmem:[%s3416] sm:$0xf]
      %v3418 = vld [vmem:[%s3416 + $0x4] sm:$0xf]
      %v3419 = vld [vmem:[%s3416 + $0x8] sm:$0xf]
      %v3420 = vld [vmem:[%s3416 + $0xc] sm:$0xf]
      %v3421 = vld [vmem:[%s3416 + $0x10] sm:$0xf]
      %v3422 = vld [vmem:[%s3416 + $0x14] sm:$0xf]
      %v3423 = vld [vmem:[%s3416 + $0x18] sm:$0xf]
      %v3424 = vld [vmem:[%s3416 + $0x1c] sm:$0xf]
      %v3425 = vld [vmem:[%s3416 + $0x20] sm:$0xf]
      %v3426 = vld [vmem:[%s3416 + $0x24] sm:$0xf]
      %v3427 = vld [vmem:[%s3416 + $0x28] sm:$0xf]
      %v3428 = vld [vmem:[%s3416 + $0x2c] sm:$0xf]
      %v3429 = vld [vmem:[%s3416 + $0x30] sm:$0xf]
      %v3430 = vld [vmem:[%s3416 + $0x34] sm:$0xf]
      %v3431 = vld [vmem:[%s3416 + $0x38] sm:$0xf]
      %v3432 = vld [vmem:[%s3416 + $0x3c] sm:$0xf]
      %v3449 = vunpack.c.l.b16 %v3417
      %v3450 = vunpack.c.l.b16 %v3418
      %v3451 = vunpack.c.l.b16 %v3419
      %v3452 = vunpack.c.l.b16 %v3420
      %v3453 = vunpack.c.l.b16 %v3421
      %v3454 = vunpack.c.l.b16 %v3422
      %v3455 = vunpack.c.l.b16 %v3423
      %v3456 = vunpack.c.l.b16 %v3424
      %v3457 = vunpack.c.l.b16 %v3425
      %v3458 = vunpack.c.l.b16 %v3426
      %v3459 = vunpack.c.l.b16 %v3427
      %v3460 = vunpack.c.l.b16 %v3428
      %v3461 = vunpack.c.l.b16 %v3429
      %v3462 = vunpack.c.l.b16 %v3430
      %v3463 = vunpack.c.l.b16 %v3431
      %v3464 = vunpack.c.l.b16 %v3432
      %v3465 = vpack.c.b16 %v3450, %v3449
      %v3466 = vpack.c.b16 %v3452, %v3451
      %v3467 = vpack.c.b16 %v3454, %v3453
      %v3468 = vpack.c.b16 %v3456, %v3455
      %v3469 = vpack.c.b16 %v3458, %v3457
      %v3470 = vpack.c.b16 %v3460, %v3459
      %v3471 = vpack.c.b16 %v3462, %v3461
      %v3472 = vpack.c.b16 %v3464, %v3463
      %3481 = vmatpush.bf16.msra.mxu0 %v3472
      %3482 = vmatpush.bf16.msra.mxu0 %v3471
      %3483 = vmatpush.bf16.msra.mxu0 %v3470
      %3484 = vmatpush.bf16.msra.mxu0 %v3469
      %3485 = vmatpush.bf16.msra.mxu0 %v3468
      %3486 = vmatpush.bf16.msra.mxu0 %v3467
      %3487 = vmatpush.bf16.msra.mxu0 %v3466
      %3488 = vmatpush.bf16.msra.mxu0 %v3465
      %3489 = vmatmul.bf16.gmra.mxu0 %v3400
      %v3490 = vpop.f32.mrf.mxu0
      %v3491 = vadd.f32 0.0, %v3490
      %v3492 = vpop.f32.mrf.mxu0
      %v3493 = vadd.f32 0.0, %v3492
      %3494 = vmatmul.bf16.gmra.mxu0 %v3401
      %v3495 = vpop.f32.mrf.mxu0
      %v3496 = vadd.f32 0.0, %v3495
      %v3497 = vpop.f32.mrf.mxu0
      %v3498 = vadd.f32 0.0, %v3497
      %3499 = vmatmul.bf16.gmra.mxu0 %v3402
      %v3500 = vpop.f32.mrf.mxu0
      %v3501 = vadd.f32 0.0, %v3500
      %v3502 = vpop.f32.mrf.mxu0
      %v3503 = vadd.f32 0.0, %v3502
      %3504 = vmatmul.bf16.gmra.mxu0 %v3403
      %v3505 = vpop.f32.mrf.mxu0
      %v3506 = vadd.f32 0.0, %v3505
      %v3507 = vpop.f32.mrf.mxu0
      %v3508 = vadd.f32 0.0, %v3507
      %3509 = vmatmul.bf16.gmra.mxu0 %v3404
      %v3510 = vpop.f32.mrf.mxu0
      %v3511 = vadd.f32 0.0, %v3510
      %v3512 = vpop.f32.mrf.mxu0
      %v3513 = vadd.f32 0.0, %v3512
      %3514 = vmatmul.bf16.gmra.mxu0 %v3405
      %v3515 = vpop.f32.mrf.mxu0
      %v3516 = vadd.f32 0.0, %v3515
      %v3517 = vpop.f32.mrf.mxu0
      %v3518 = vadd.f32 0.0, %v3517
      %3519 = vmatmul.bf16.gmra.mxu0 %v3406
      %v3520 = vpop.f32.mrf.mxu0
      %v3521 = vadd.f32 0.0, %v3520
      %v3522 = vpop.f32.mrf.mxu0
      %v3523 = vadd.f32 0.0, %v3522
      %3524 = vmatmul.bf16.gmra.mxu0 %v3407
      %v3525 = vpop.f32.mrf.mxu0
      %v3526 = vadd.f32 0.0, %v3525
      %v3527 = vpop.f32.mrf.mxu0
      %v3528 = vadd.f32 0.0, %v3527
      %3529 = vmatmul.bf16.gmra.mxu0 %v3408
      %v3530 = vpop.f32.mrf.mxu0
      %v3531 = vadd.f32 0.0, %v3530
      %v3532 = vpop.f32.mrf.mxu0
      %v3533 = vadd.f32 0.0, %v3532
      %3534 = vmatmul.bf16.gmra.mxu0 %v3409
      %v3535 = vpop.f32.mrf.mxu0
      %v3536 = vadd.f32 0.0, %v3535
      %v3537 = vpop.f32.mrf.mxu0
      %v3538 = vadd.f32 0.0, %v3537
      %3539 = vmatmul.bf16.gmra.mxu0 %v3410
      %v3540 = vpop.f32.mrf.mxu0
      %v3541 = vadd.f32 0.0, %v3540
      %v3542 = vpop.f32.mrf.mxu0
      %v3543 = vadd.f32 0.0, %v3542
      %3544 = vmatmul.bf16.gmra.mxu0 %v3411
      %v3545 = vpop.f32.mrf.mxu0
      %v3546 = vadd.f32 0.0, %v3545
      %v3547 = vpop.f32.mrf.mxu0
      %v3548 = vadd.f32 0.0, %v3547
      %3549 = vmatmul.bf16.gmra.mxu0 %v3412
      %v3550 = vpop.f32.mrf.mxu0
      %v3551 = vadd.f32 0.0, %v3550
      %v3552 = vpop.f32.mrf.mxu0
      %v3553 = vadd.f32 0.0, %v3552
      %3554 = vmatmul.bf16.gmra.mxu0 %v3413
      %v3555 = vpop.f32.mrf.mxu0
      %v3556 = vadd.f32 0.0, %v3555
      %v3557 = vpop.f32.mrf.mxu0
      %v3558 = vadd.f32 0.0, %v3557
      %3559 = vmatmul.bf16.gmra.mxu0 %v3414
      %v3560 = vpop.f32.mrf.mxu0
      %v3561 = vadd.f32 0.0, %v3560
      %v3562 = vpop.f32.mrf.mxu0
      %v3563 = vadd.f32 0.0, %v3562
      %3564 = vmatmul.bf16.gmra.mxu0 %v3415
      %v3565 = vpop.f32.mrf.mxu0
      %v3566 = vadd.f32 0.0, %v3565
      %v3567 = vpop.f32.mrf.mxu0
      %v3568 = vadd.f32 0.0, %v3567
      %3569 = vdwg.mxu0
      %v3570 = vpack.c.bf16 %v3491, %v3491
      %v3571 = vpack.c.bf16 %v3493, %v3493
      %v3572 = vpack.c.bf16 %v3496, %v3496
      %v3573 = vpack.c.bf16 %v3498, %v3498
      %v3574 = vpack.c.bf16 %v3501, %v3501
      %v3575 = vpack.c.bf16 %v3503, %v3503
      %v3576 = vpack.c.bf16 %v3506, %v3506
      %v3577 = vpack.c.bf16 %v3508, %v3508
      %v3578 = vpack.c.bf16 %v3511, %v3511
      %v3579 = vpack.c.bf16 %v3513, %v3513
      %v3580 = vpack.c.bf16 %v3516, %v3516
      %v3581 = vpack.c.bf16 %v3518, %v3518
      %v3582 = vpack.c.bf16 %v3521, %v3521
      %v3583 = vpack.c.bf16 %v3523, %v3523
      %v3584 = vpack.c.bf16 %v3526, %v3526
      %v3585 = vpack.c.bf16 %v3528, %v3528
      %v3586 = vpack.c.bf16 %v3531, %v3531
      %v3587 = vpack.c.bf16 %v3533, %v3533
      %v3588 = vpack.c.bf16 %v3536, %v3536
      %v3589 = vpack.c.bf16 %v3538, %v3538
      %v3590 = vpack.c.bf16 %v3541, %v3541
      %v3591 = vpack.c.bf16 %v3543, %v3543
      %v3592 = vpack.c.bf16 %v3546, %v3546
      %v3593 = vpack.c.bf16 %v3548, %v3548
      %v3594 = vpack.c.bf16 %v3551, %v3551
      %v3595 = vpack.c.bf16 %v3553, %v3553
      %v3596 = vpack.c.bf16 %v3556, %v3556
      %v3597 = vpack.c.bf16 %v3558, %v3558
      %v3598 = vpack.c.bf16 %v3561, %v3561
      %v3599 = vpack.c.bf16 %v3563, %v3563
      %v3600 = vpack.c.bf16 %v3566, %v3566
      %v3601 = vpack.c.bf16 %v3568, %v3568
      %v3602 = vshrl.u32 %v3234, 16
      %v3603 = vpack.i.b16 %v3602, %v3602
      %v3605 = vperm.slane %v3603, 3
      %v3606 = vunpack.c.l.bf16 %v3570
      %v3607 = vunpack.c.l.bf16 %v3571
      %v3608 = vunpack.c.l.bf16 %v3572
      %v3609 = vunpack.c.l.bf16 %v3573
      %v3610 = vunpack.c.l.bf16 %v3574
      %v3611 = vunpack.c.l.bf16 %v3575
      %v3612 = vunpack.c.l.bf16 %v3576
      %v3613 = vunpack.c.l.bf16 %v3577
      %v3614 = vunpack.c.l.bf16 %v3578
      %v3615 = vunpack.c.l.bf16 %v3579
      %v3616 = vunpack.c.l.bf16 %v3580
      %v3617 = vunpack.c.l.bf16 %v3581
      %v3618 = vunpack.c.l.bf16 %v3582
      %v3619 = vunpack.c.l.bf16 %v3583
      %v3620 = vunpack.c.l.bf16 %v3584
      %v3621 = vunpack.c.l.bf16 %v3585
      %v3622 = vunpack.c.l.bf16 %v3586
      %v3623 = vunpack.c.l.bf16 %v3587
      %v3624 = vunpack.c.l.bf16 %v3588
      %v3625 = vunpack.c.l.bf16 %v3589
      %v3626 = vunpack.c.l.bf16 %v3590
      %v3627 = vunpack.c.l.bf16 %v3591
      %v3628 = vunpack.c.l.bf16 %v3592
      %v3629 = vunpack.c.l.bf16 %v3593
      %v3630 = vunpack.c.l.bf16 %v3594
      %v3631 = vunpack.c.l.bf16 %v3595
      %v3632 = vunpack.c.l.bf16 %v3596
      %v3633 = vunpack.c.l.bf16 %v3597
      %v3634 = vunpack.c.l.bf16 %v3598
      %v3635 = vunpack.c.l.bf16 %v3599
      %v3636 = vunpack.c.l.bf16 %v3600
      %v3637 = vunpack.c.l.bf16 %v3601
      %v3638 = vunpack.c.l.bf16 %v3605
      %v3639 = vadd.f32 %v3606, %v3638
      %v3640 = vadd.f32 %v3607, %v3638
      %v3641 = vadd.f32 %v3608, %v3638
      %v3642 = vadd.f32 %v3609, %v3638
      %v3643 = vadd.f32 %v3610, %v3638
      %v3644 = vadd.f32 %v3611, %v3638
      %v3645 = vadd.f32 %v3612, %v3638
      %v3646 = vadd.f32 %v3613, %v3638
      %v3647 = vadd.f32 %v3614, %v3638
      %v3648 = vadd.f32 %v3615, %v3638
      %v3649 = vadd.f32 %v3616, %v3638
      %v3650 = vadd.f32 %v3617, %v3638
      %v3651 = vadd.f32 %v3618, %v3638
      %v3652 = vadd.f32 %v3619, %v3638
      %v3653 = vadd.f32 %v3620, %v3638
      %v3654 = vadd.f32 %v3621, %v3638
      %v3655 = vadd.f32 %v3622, %v3638
      %v3656 = vadd.f32 %v3623, %v3638
      %v3657 = vadd.f32 %v3624, %v3638
      %v3658 = vadd.f32 %v3625, %v3638
      %v3659 = vadd.f32 %v3626, %v3638
      %v3660 = vadd.f32 %v3627, %v3638
      %v3661 = vadd.f32 %v3628, %v3638
      %v3662 = vadd.f32 %v3629, %v3638
      %v3663 = vadd.f32 %v3630, %v3638
      %v3664 = vadd.f32 %v3631, %v3638
      %v3665 = vadd.f32 %v3632, %v3638
      %v3666 = vadd.f32 %v3633, %v3638
      %v3667 = vadd.f32 %v3634, %v3638
      %v3668 = vadd.f32 %v3635, %v3638
      %v3669 = vadd.f32 %v3636, %v3638
      %v3670 = vadd.f32 %v3637, %v3638
      %v3671 = vpack.c.bf16 %v3639, %v3639
      %v3672 = vpack.c.bf16 %v3640, %v3640
      %v3673 = vpack.c.bf16 %v3641, %v3641
      %v3674 = vpack.c.bf16 %v3642, %v3642
      %v3675 = vpack.c.bf16 %v3643, %v3643
      %v3676 = vpack.c.bf16 %v3644, %v3644
      %v3677 = vpack.c.bf16 %v3645, %v3645
      %v3678 = vpack.c.bf16 %v3646, %v3646
      %v3679 = vpack.c.bf16 %v3647, %v3647
      %v3680 = vpack.c.bf16 %v3648, %v3648
      %v3681 = vpack.c.bf16 %v3649, %v3649
      %v3682 = vpack.c.bf16 %v3650, %v3650
      %v3683 = vpack.c.bf16 %v3651, %v3651
      %v3684 = vpack.c.bf16 %v3652, %v3652
      %v3685 = vpack.c.bf16 %v3653, %v3653
      %v3686 = vpack.c.bf16 %v3654, %v3654
      %v3687 = vpack.c.bf16 %v3655, %v3655
      %v3688 = vpack.c.bf16 %v3656, %v3656
      %v3689 = vpack.c.bf16 %v3657, %v3657
      %v3690 = vpack.c.bf16 %v3658, %v3658
      %v3691 = vpack.c.bf16 %v3659, %v3659
      %v3692 = vpack.c.bf16 %v3660, %v3660
      %v3693 = vpack.c.bf16 %v3661, %v3661
      %v3694 = vpack.c.bf16 %v3662, %v3662
      %v3695 = vpack.c.bf16 %v3663, %v3663
      %v3696 = vpack.c.bf16 %v3664, %v3664
      %v3697 = vpack.c.bf16 %v3665, %v3665
      %v3698 = vpack.c.bf16 %v3666, %v3666
      %v3699 = vpack.c.bf16 %v3667, %v3667
      %v3700 = vpack.c.bf16 %v3668, %v3668
      %v3701 = vpack.c.bf16 %v3669, %v3669
      %v3702 = vpack.c.bf16 %v3670, %v3670
      %v3703 = vunpack.c.l.bf16 %v3671
      %v3704 = vunpack.c.l.bf16 %v3672
      %v3705 = vunpack.c.l.bf16 %v3673
      %v3706 = vunpack.c.l.bf16 %v3674
      %v3707 = vunpack.c.l.bf16 %v3675
      %v3708 = vunpack.c.l.bf16 %v3676
      %v3709 = vunpack.c.l.bf16 %v3677
      %v3710 = vunpack.c.l.bf16 %v3678
      %v3711 = vunpack.c.l.bf16 %v3679
      %v3712 = vunpack.c.l.bf16 %v3680
      %v3713 = vunpack.c.l.bf16 %v3681
      %v3714 = vunpack.c.l.bf16 %v3682
      %v3715 = vunpack.c.l.bf16 %v3683
      %v3716 = vunpack.c.l.bf16 %v3684
      %v3717 = vunpack.c.l.bf16 %v3685
      %v3718 = vunpack.c.l.bf16 %v3686
      %v3719 = vunpack.c.l.bf16 %v3687
      %v3720 = vunpack.c.l.bf16 %v3688
      %v3721 = vunpack.c.l.bf16 %v3689
      %v3722 = vunpack.c.l.bf16 %v3690
      %v3723 = vunpack.c.l.bf16 %v3691
      %v3724 = vunpack.c.l.bf16 %v3692
      %v3725 = vunpack.c.l.bf16 %v3693
      %v3726 = vunpack.c.l.bf16 %v3694
      %v3727 = vunpack.c.l.bf16 %v3695
      %v3728 = vunpack.c.l.bf16 %v3696
      %v3729 = vunpack.c.l.bf16 %v3697
      %v3730 = vunpack.c.l.bf16 %v3698
      %v3731 = vunpack.c.l.bf16 %v3699
      %v3732 = vunpack.c.l.bf16 %v3700
      %v3733 = vunpack.c.l.bf16 %v3701
      %v3734 = vunpack.c.l.bf16 %v3702
      %v3735 = vmax.f32 %v3703, 0.0
      %v3736 = vmax.f32 %v3704, 0.0
      %v3737 = vmax.f32 %v3705, 0.0
      %v3738 = vmax.f32 %v3706, 0.0
      %v3739 = vmax.f32 %v3707, 0.0
      %v3740 = vmax.f32 %v3708, 0.0
      %v3741 = vmax.f32 %v3709, 0.0
      %v3742 = vmax.f32 %v3710, 0.0
      %v3743 = vmax.f32 %v3711, 0.0
      %v3744 = vmax.f32 %v3712, 0.0
      %v3745 = vmax.f32 %v3713, 0.0
      %v3746 = vmax.f32 %v3714, 0.0
      %v3747 = vmax.f32 %v3715, 0.0
      %v3748 = vmax.f32 %v3716, 0.0
      %v3749 = vmax.f32 %v3717, 0.0
      %v3750 = vmax.f32 %v3718, 0.0
      %v3751 = vmax.f32 %v3719, 0.0
      %v3752 = vmax.f32 %v3720, 0.0
      %v3753 = vmax.f32 %v3721, 0.0
      %v3754 = vmax.f32 %v3722, 0.0
      %v3755 = vmax.f32 %v3723, 0.0
      %v3756 = vmax.f32 %v3724, 0.0
      %v3757 = vmax.f32 %v3725, 0.0
      %v3758 = vmax.f32 %v3726, 0.0
      %v3759 = vmax.f32 %v3727, 0.0
      %v3760 = vmax.f32 %v3728, 0.0
      %v3761 = vmax.f32 %v3729, 0.0
      %v3762 = vmax.f32 %v3730, 0.0
      %v3763 = vmax.f32 %v3731, 0.0
      %v3764 = vmax.f32 %v3732, 0.0
      %v3765 = vmax.f32 %v3733, 0.0
      %v3766 = vmax.f32 %v3734, 0.0
      %v3767 = vpack.c.bf16 %v3736, %v3735
      %v3768 = vpack.c.bf16 %v3738, %v3737
      %v3769 = vpack.c.bf16 %v3740, %v3739
      %v3770 = vpack.c.bf16 %v3742, %v3741
      %v3771 = vpack.c.bf16 %v3744, %v3743
      %v3772 = vpack.c.bf16 %v3746, %v3745
      %v3773 = vpack.c.bf16 %v3748, %v3747
      %v3774 = vpack.c.bf16 %v3750, %v3749
      %v3775 = vpack.c.bf16 %v3752, %v3751
      %v3776 = vpack.c.bf16 %v3754, %v3753
      %v3777 = vpack.c.bf16 %v3756, %v3755
      %v3778 = vpack.c.bf16 %v3758, %v3757
      %v3779 = vpack.c.bf16 %v3760, %v3759
      %v3780 = vpack.c.bf16 %v3762, %v3761
      %v3781 = vpack.c.bf16 %v3764, %v3763
      %v3782 = vpack.c.bf16 %v3766, %v3765
      %s3783 = scalar_lea.vmem %s2, 448
      %v3784 = vld [vmem:[%s3783] sm:$0xf]
      %v3785 = vld [vmem:[%s3783 + $0x4] sm:$0xf]
      %v3786 = vld [vmem:[%s3783 + $0x8] sm:$0xf]
      %v3787 = vld [vmem:[%s3783 + $0xc] sm:$0xf]
      %v3788 = vld [vmem:[%s3783 + $0x10] sm:$0xf]
      %v3789 = vld [vmem:[%s3783 + $0x14] sm:$0xf]
      %v3790 = vld [vmem:[%s3783 + $0x18] sm:$0xf]
      %v3791 = vld [vmem:[%s3783 + $0x1c] sm:$0xf]
      %v3792 = vld [vmem:[%s3783 + $0x20] sm:$0xf]
      %v3793 = vld [vmem:[%s3783 + $0x24] sm:$0xf]
      %v3794 = vld [vmem:[%s3783 + $0x28] sm:$0xf]
      %v3795 = vld [vmem:[%s3783 + $0x2c] sm:$0xf]
      %v3796 = vld [vmem:[%s3783 + $0x30] sm:$0xf]
      %v3797 = vld [vmem:[%s3783 + $0x34] sm:$0xf]
      %v3798 = vld [vmem:[%s3783 + $0x38] sm:$0xf]
      %v3799 = vld [vmem:[%s3783 + $0x3c] sm:$0xf]
      %v3816 = vunpack.c.l.b16 %v3784
      %v3817 = vunpack.c.l.b16 %v3785
      %v3818 = vunpack.c.l.b16 %v3786
      %v3819 = vunpack.c.l.b16 %v3787
      %v3820 = vunpack.c.l.b16 %v3788
      %v3821 = vunpack.c.l.b16 %v3789
      %v3822 = vunpack.c.l.b16 %v3790
      %v3823 = vunpack.c.l.b16 %v3791
      %v3824 = vunpack.c.l.b16 %v3792
      %v3825 = vunpack.c.l.b16 %v3793
      %v3826 = vunpack.c.l.b16 %v3794
      %v3827 = vunpack.c.l.b16 %v3795
      %v3828 = vunpack.c.l.b16 %v3796
      %v3829 = vunpack.c.l.b16 %v3797
      %v3830 = vunpack.c.l.b16 %v3798
      %v3831 = vunpack.c.l.b16 %v3799
      %v3832 = vpack.c.b16 %v3817, %v3816
      %v3833 = vpack.c.b16 %v3819, %v3818
      %v3834 = vpack.c.b16 %v3821, %v3820
      %v3835 = vpack.c.b16 %v3823, %v3822
      %v3836 = vpack.c.b16 %v3825, %v3824
      %v3837 = vpack.c.b16 %v3827, %v3826
      %v3838 = vpack.c.b16 %v3829, %v3828
      %v3839 = vpack.c.b16 %v3831, %v3830
      %3848 = vmatpush.bf16.msra.mxu0 %v3839
      %3849 = vmatpush.bf16.msra.mxu0 %v3838
      %3850 = vmatpush.bf16.msra.mxu0 %v3837
      %3851 = vmatpush.bf16.msra.mxu0 %v3836
      %3852 = vmatpush.bf16.msra.mxu0 %v3835
      %3853 = vmatpush.bf16.msra.mxu0 %v3834
      %3854 = vmatpush.bf16.msra.mxu0 %v3833
      %3855 = vmatpush.bf16.msra.mxu0 %v3832
      %3856 = vmatmul.bf16.gmra.mxu0 %v3767
      %v3857 = vpop.f32.mrf.mxu0
      %v3858 = vadd.f32 0.0, %v3857
      %v3859 = vpop.f32.mrf.mxu0
      %v3860 = vadd.f32 0.0, %v3859
      %3861 = vmatmul.bf16.gmra.mxu0 %v3768
      %v3862 = vpop.f32.mrf.mxu0
      %v3863 = vadd.f32 0.0, %v3862
      %v3864 = vpop.f32.mrf.mxu0
      %v3865 = vadd.f32 0.0, %v3864
      %3866 = vmatmul.bf16.gmra.mxu0 %v3769
      %v3867 = vpop.f32.mrf.mxu0
      %v3868 = vadd.f32 0.0, %v3867
      %v3869 = vpop.f32.mrf.mxu0
      %v3870 = vadd.f32 0.0, %v3869
      %3871 = vmatmul.bf16.gmra.mxu0 %v3770
      %v3872 = vpop.f32.mrf.mxu0
      %v3873 = vadd.f32 0.0, %v3872
      %v3874 = vpop.f32.mrf.mxu0
      %v3875 = vadd.f32 0.0, %v3874
      %3876 = vmatmul.bf16.gmra.mxu0 %v3771
      %v3877 = vpop.f32.mrf.mxu0
      %v3878 = vadd.f32 0.0, %v3877
      %v3879 = vpop.f32.mrf.mxu0
      %v3880 = vadd.f32 0.0, %v3879
      %3881 = vmatmul.bf16.gmra.mxu0 %v3772
      %v3882 = vpop.f32.mrf.mxu0
      %v3883 = vadd.f32 0.0, %v3882
      %v3884 = vpop.f32.mrf.mxu0
      %v3885 = vadd.f32 0.0, %v3884
      %3886 = vmatmul.bf16.gmra.mxu0 %v3773
      %v3887 = vpop.f32.mrf.mxu0
      %v3888 = vadd.f32 0.0, %v3887
      %v3889 = vpop.f32.mrf.mxu0
      %v3890 = vadd.f32 0.0, %v3889
      %3891 = vmatmul.bf16.gmra.mxu0 %v3774
      %v3892 = vpop.f32.mrf.mxu0
      %v3893 = vadd.f32 0.0, %v3892
      %v3894 = vpop.f32.mrf.mxu0
      %v3895 = vadd.f32 0.0, %v3894
      %3896 = vmatmul.bf16.gmra.mxu0 %v3775
      %v3897 = vpop.f32.mrf.mxu0
      %v3898 = vadd.f32 0.0, %v3897
      %v3899 = vpop.f32.mrf.mxu0
      %v3900 = vadd.f32 0.0, %v3899
      %3901 = vmatmul.bf16.gmra.mxu0 %v3776
      %v3902 = vpop.f32.mrf.mxu0
      %v3903 = vadd.f32 0.0, %v3902
      %v3904 = vpop.f32.mrf.mxu0
      %v3905 = vadd.f32 0.0, %v3904
      %3906 = vmatmul.bf16.gmra.mxu0 %v3777
      %v3907 = vpop.f32.mrf.mxu0
      %v3908 = vadd.f32 0.0, %v3907
      %v3909 = vpop.f32.mrf.mxu0
      %v3910 = vadd.f32 0.0, %v3909
      %3911 = vmatmul.bf16.gmra.mxu0 %v3778
      %v3912 = vpop.f32.mrf.mxu0
      %v3913 = vadd.f32 0.0, %v3912
      %v3914 = vpop.f32.mrf.mxu0
      %v3915 = vadd.f32 0.0, %v3914
      %3916 = vmatmul.bf16.gmra.mxu0 %v3779
      %v3917 = vpop.f32.mrf.mxu0
      %v3918 = vadd.f32 0.0, %v3917
      %v3919 = vpop.f32.mrf.mxu0
      %v3920 = vadd.f32 0.0, %v3919
      %3921 = vmatmul.bf16.gmra.mxu0 %v3780
      %v3922 = vpop.f32.mrf.mxu0
      %v3923 = vadd.f32 0.0, %v3922
      %v3924 = vpop.f32.mrf.mxu0
      %v3925 = vadd.f32 0.0, %v3924
      %3926 = vmatmul.bf16.gmra.mxu0 %v3781
      %v3927 = vpop.f32.mrf.mxu0
      %v3928 = vadd.f32 0.0, %v3927
      %v3929 = vpop.f32.mrf.mxu0
      %v3930 = vadd.f32 0.0, %v3929
      %3931 = vmatmul.bf16.gmra.mxu0 %v3782
      %v3932 = vpop.f32.mrf.mxu0
      %v3933 = vadd.f32 0.0, %v3932
      %v3934 = vpop.f32.mrf.mxu0
      %v3935 = vadd.f32 0.0, %v3934
      %3936 = vdwg.mxu0
      %v3937 = vpack.c.bf16 %v3858, %v3858
      %v3938 = vpack.c.bf16 %v3860, %v3860
      %v3939 = vpack.c.bf16 %v3863, %v3863
      %v3940 = vpack.c.bf16 %v3865, %v3865
      %v3941 = vpack.c.bf16 %v3868, %v3868
      %v3942 = vpack.c.bf16 %v3870, %v3870
      %v3943 = vpack.c.bf16 %v3873, %v3873
      %v3944 = vpack.c.bf16 %v3875, %v3875
      %v3945 = vpack.c.bf16 %v3878, %v3878
      %v3946 = vpack.c.bf16 %v3880, %v3880
      %v3947 = vpack.c.bf16 %v3883, %v3883
      %v3948 = vpack.c.bf16 %v3885, %v3885
      %v3949 = vpack.c.bf16 %v3888, %v3888
      %v3950 = vpack.c.bf16 %v3890, %v3890
      %v3951 = vpack.c.bf16 %v3893, %v3893
      %v3952 = vpack.c.bf16 %v3895, %v3895
      %v3953 = vpack.c.bf16 %v3898, %v3898
      %v3954 = vpack.c.bf16 %v3900, %v3900
      %v3955 = vpack.c.bf16 %v3903, %v3903
      %v3956 = vpack.c.bf16 %v3905, %v3905
      %v3957 = vpack.c.bf16 %v3908, %v3908
      %v3958 = vpack.c.bf16 %v3910, %v3910
      %v3959 = vpack.c.bf16 %v3913, %v3913
      %v3960 = vpack.c.bf16 %v3915, %v3915
      %v3961 = vpack.c.bf16 %v3918, %v3918
      %v3962 = vpack.c.bf16 %v3920, %v3920
      %v3963 = vpack.c.bf16 %v3923, %v3923
      %v3964 = vpack.c.bf16 %v3925, %v3925
      %v3965 = vpack.c.bf16 %v3928, %v3928
      %v3966 = vpack.c.bf16 %v3930, %v3930
      %v3967 = vpack.c.bf16 %v3933, %v3933
      %v3968 = vpack.c.bf16 %v3935, %v3935
      %v3969 = vld [vmem:[%s3 + $0x4] sm:$0x1]
      %v3971 = vpack.i.b16 %v3969, %v3969
      %v3973 = vperm.slane %v3971, 0
      %v3974 = vunpack.c.l.bf16 %v3937
      %v3975 = vunpack.c.l.bf16 %v3938
      %v3976 = vunpack.c.l.bf16 %v3939
      %v3977 = vunpack.c.l.bf16 %v3940
      %v3978 = vunpack.c.l.bf16 %v3941
      %v3979 = vunpack.c.l.bf16 %v3942
      %v3980 = vunpack.c.l.bf16 %v3943
      %v3981 = vunpack.c.l.bf16 %v3944
      %v3982 = vunpack.c.l.bf16 %v3945
      %v3983 = vunpack.c.l.bf16 %v3946
      %v3984 = vunpack.c.l.bf16 %v3947
      %v3985 = vunpack.c.l.bf16 %v3948
      %v3986 = vunpack.c.l.bf16 %v3949
      %v3987 = vunpack.c.l.bf16 %v3950
      %v3988 = vunpack.c.l.bf16 %v3951
      %v3989 = vunpack.c.l.bf16 %v3952
      %v3990 = vunpack.c.l.bf16 %v3953
      %v3991 = vunpack.c.l.bf16 %v3954
      %v3992 = vunpack.c.l.bf16 %v3955
      %v3993 = vunpack.c.l.bf16 %v3956
      %v3994 = vunpack.c.l.bf16 %v3957
      %v3995 = vunpack.c.l.bf16 %v3958
      %v3996 = vunpack.c.l.bf16 %v3959
      %v3997 = vunpack.c.l.bf16 %v3960
      %v3998 = vunpack.c.l.bf16 %v3961
      %v3999 = vunpack.c.l.bf16 %v3962
      %v4000 = vunpack.c.l.bf16 %v3963
      %v4001 = vunpack.c.l.bf16 %v3964
      %v4002 = vunpack.c.l.bf16 %v3965
      %v4003 = vunpack.c.l.bf16 %v3966
      %v4004 = vunpack.c.l.bf16 %v3967
      %v4005 = vunpack.c.l.bf16 %v3968
      %v4006 = vunpack.c.l.bf16 %v3973
      %v4007 = vadd.f32 %v3974, %v4006
      %v4008 = vadd.f32 %v3975, %v4006
      %v4009 = vadd.f32 %v3976, %v4006
      %v4010 = vadd.f32 %v3977, %v4006
      %v4011 = vadd.f32 %v3978, %v4006
      %v4012 = vadd.f32 %v3979, %v4006
      %v4013 = vadd.f32 %v3980, %v4006
      %v4014 = vadd.f32 %v3981, %v4006
      %v4015 = vadd.f32 %v3982, %v4006
      %v4016 = vadd.f32 %v3983, %v4006
      %v4017 = vadd.f32 %v3984, %v4006
      %v4018 = vadd.f32 %v3985, %v4006
      %v4019 = vadd.f32 %v3986, %v4006
      %v4020 = vadd.f32 %v3987, %v4006
      %v4021 = vadd.f32 %v3988, %v4006
      %v4022 = vadd.f32 %v3989, %v4006
      %v4023 = vadd.f32 %v3990, %v4006
      %v4024 = vadd.f32 %v3991, %v4006
      %v4025 = vadd.f32 %v3992, %v4006
      %v4026 = vadd.f32 %v3993, %v4006
      %v4027 = vadd.f32 %v3994, %v4006
      %v4028 = vadd.f32 %v3995, %v4006
      %v4029 = vadd.f32 %v3996, %v4006
      %v4030 = vadd.f32 %v3997, %v4006
      %v4031 = vadd.f32 %v3998, %v4006
      %v4032 = vadd.f32 %v3999, %v4006
      %v4033 = vadd.f32 %v4000, %v4006
      %v4034 = vadd.f32 %v4001, %v4006
      %v4035 = vadd.f32 %v4002, %v4006
      %v4036 = vadd.f32 %v4003, %v4006
      %v4037 = vadd.f32 %v4004, %v4006
      %v4038 = vadd.f32 %v4005, %v4006
      %v4039 = vpack.c.bf16 %v4007, %v4007
      %v4040 = vpack.c.bf16 %v4008, %v4008
      %v4041 = vpack.c.bf16 %v4009, %v4009
      %v4042 = vpack.c.bf16 %v4010, %v4010
      %v4043 = vpack.c.bf16 %v4011, %v4011
      %v4044 = vpack.c.bf16 %v4012, %v4012
      %v4045 = vpack.c.bf16 %v4013, %v4013
      %v4046 = vpack.c.bf16 %v4014, %v4014
      %v4047 = vpack.c.bf16 %v4015, %v4015
      %v4048 = vpack.c.bf16 %v4016, %v4016
      %v4049 = vpack.c.bf16 %v4017, %v4017
      %v4050 = vpack.c.bf16 %v4018, %v4018
      %v4051 = vpack.c.bf16 %v4019, %v4019
      %v4052 = vpack.c.bf16 %v4020, %v4020
      %v4053 = vpack.c.bf16 %v4021, %v4021
      %v4054 = vpack.c.bf16 %v4022, %v4022
      %v4055 = vpack.c.bf16 %v4023, %v4023
      %v4056 = vpack.c.bf16 %v4024, %v4024
      %v4057 = vpack.c.bf16 %v4025, %v4025
      %v4058 = vpack.c.bf16 %v4026, %v4026
      %v4059 = vpack.c.bf16 %v4027, %v4027
      %v4060 = vpack.c.bf16 %v4028, %v4028
      %v4061 = vpack.c.bf16 %v4029, %v4029
      %v4062 = vpack.c.bf16 %v4030, %v4030
      %v4063 = vpack.c.bf16 %v4031, %v4031
      %v4064 = vpack.c.bf16 %v4032, %v4032
      %v4065 = vpack.c.bf16 %v4033, %v4033
      %v4066 = vpack.c.bf16 %v4034, %v4034
      %v4067 = vpack.c.bf16 %v4035, %v4035
      %v4068 = vpack.c.bf16 %v4036, %v4036
      %v4069 = vpack.c.bf16 %v4037, %v4037
      %v4070 = vpack.c.bf16 %v4038, %v4038
      %v4071 = vunpack.c.l.bf16 %v4039
      %v4072 = vunpack.c.l.bf16 %v4040
      %v4073 = vunpack.c.l.bf16 %v4041
      %v4074 = vunpack.c.l.bf16 %v4042
      %v4075 = vunpack.c.l.bf16 %v4043
      %v4076 = vunpack.c.l.bf16 %v4044
      %v4077 = vunpack.c.l.bf16 %v4045
      %v4078 = vunpack.c.l.bf16 %v4046
      %v4079 = vunpack.c.l.bf16 %v4047
      %v4080 = vunpack.c.l.bf16 %v4048
      %v4081 = vunpack.c.l.bf16 %v4049
      %v4082 = vunpack.c.l.bf16 %v4050
      %v4083 = vunpack.c.l.bf16 %v4051
      %v4084 = vunpack.c.l.bf16 %v4052
      %v4085 = vunpack.c.l.bf16 %v4053
      %v4086 = vunpack.c.l.bf16 %v4054
      %v4087 = vunpack.c.l.bf16 %v4055
      %v4088 = vunpack.c.l.bf16 %v4056
      %v4089 = vunpack.c.l.bf16 %v4057
      %v4090 = vunpack.c.l.bf16 %v4058
      %v4091 = vunpack.c.l.bf16 %v4059
      %v4092 = vunpack.c.l.bf16 %v4060
      %v4093 = vunpack.c.l.bf16 %v4061
      %v4094 = vunpack.c.l.bf16 %v4062
      %v4095 = vunpack.c.l.bf16 %v4063
      %v4096 = vunpack.c.l.bf16 %v4064
      %v4097 = vunpack.c.l.bf16 %v4065
      %v4098 = vunpack.c.l.bf16 %v4066
      %v4099 = vunpack.c.l.bf16 %v4067
      %v4100 = vunpack.c.l.bf16 %v4068
      %v4101 = vunpack.c.l.bf16 %v4069
      %v4102 = vunpack.c.l.bf16 %v4070
      %v4103 = vmax.f32 %v4071, 0.0
      %v4104 = vmax.f32 %v4072, 0.0
      %v4105 = vmax.f32 %v4073, 0.0
      %v4106 = vmax.f32 %v4074, 0.0
      %v4107 = vmax.f32 %v4075, 0.0
      %v4108 = vmax.f32 %v4076, 0.0
      %v4109 = vmax.f32 %v4077, 0.0
      %v4110 = vmax.f32 %v4078, 0.0
      %v4111 = vmax.f32 %v4079, 0.0
      %v4112 = vmax.f32 %v4080, 0.0
      %v4113 = vmax.f32 %v4081, 0.0
      %v4114 = vmax.f32 %v4082, 0.0
      %v4115 = vmax.f32 %v4083, 0.0
      %v4116 = vmax.f32 %v4084, 0.0
      %v4117 = vmax.f32 %v4085, 0.0
      %v4118 = vmax.f32 %v4086, 0.0
      %v4119 = vmax.f32 %v4087, 0.0
      %v4120 = vmax.f32 %v4088, 0.0
      %v4121 = vmax.f32 %v4089, 0.0
      %v4122 = vmax.f32 %v4090, 0.0
      %v4123 = vmax.f32 %v4091, 0.0
      %v4124 = vmax.f32 %v4092, 0.0
      %v4125 = vmax.f32 %v4093, 0.0
      %v4126 = vmax.f32 %v4094, 0.0
      %v4127 = vmax.f32 %v4095, 0.0
      %v4128 = vmax.f32 %v4096, 0.0
      %v4129 = vmax.f32 %v4097, 0.0
      %v4130 = vmax.f32 %v4098, 0.0
      %v4131 = vmax.f32 %v4099, 0.0
      %v4132 = vmax.f32 %v4100, 0.0
      %v4133 = vmax.f32 %v4101, 0.0
      %v4134 = vmax.f32 %v4102, 0.0
      %v4135 = vpack.c.bf16 %v4104, %v4103
      %v4136 = vpack.c.bf16 %v4106, %v4105
      %v4137 = vpack.c.bf16 %v4108, %v4107
      %v4138 = vpack.c.bf16 %v4110, %v4109
      %v4139 = vpack.c.bf16 %v4112, %v4111
      %v4140 = vpack.c.bf16 %v4114, %v4113
      %v4141 = vpack.c.bf16 %v4116, %v4115
      %v4142 = vpack.c.bf16 %v4118, %v4117
      %v4143 = vpack.c.bf16 %v4120, %v4119
      %v4144 = vpack.c.bf16 %v4122, %v4121
      %v4145 = vpack.c.bf16 %v4124, %v4123
      %v4146 = vpack.c.bf16 %v4126, %v4125
      %v4147 = vpack.c.bf16 %v4128, %v4127
      %v4148 = vpack.c.bf16 %v4130, %v4129
      %v4149 = vpack.c.bf16 %v4132, %v4131
      %v4150 = vpack.c.bf16 %v4134, %v4133
      %v4151 = vld [vmem:[%s4] sm:$0xff]
      %v4152 = vld [vmem:[%s4 + $0x8] sm:$0xff]
      %v4153 = vld [vmem:[%s4 + $0x10] sm:$0xff]
      %v4154 = vld [vmem:[%s4 + $0x18] sm:$0xff]
      %v4155 = vld [vmem:[%s4 + $0x20] sm:$0xff]
      %v4156 = vld [vmem:[%s4 + $0x28] sm:$0xff]
      %v4157 = vld [vmem:[%s4 + $0x30] sm:$0xff]
      %v4158 = vld [vmem:[%s4 + $0x38] sm:$0xff]
      %v4159 = vld [vmem:[%s4 + $0x40] sm:$0xff]
      %v4160 = vld [vmem:[%s4 + $0x48] sm:$0xff]
      %v4161 = vld [vmem:[%s4 + $0x50] sm:$0xff]
      %v4162 = vld [vmem:[%s4 + $0x58] sm:$0xff]
      %v4163 = vld [vmem:[%s4 + $0x60] sm:$0xff]
      %v4164 = vld [vmem:[%s4 + $0x68] sm:$0xff]
      %v4165 = vld [vmem:[%s4 + $0x70] sm:$0xff]
      %v4166 = vld [vmem:[%s4 + $0x78] sm:$0xff]
      %v4183 = vunpack.c.l.b16 %v4151
      %v4184 = vunpack.c.h.b16 %v4151
      %v4185 = vunpack.c.l.b16 %v4152
      %v4186 = vunpack.c.h.b16 %v4152
      %v4187 = vunpack.c.l.b16 %v4153
      %v4188 = vunpack.c.h.b16 %v4153
      %v4189 = vunpack.c.l.b16 %v4154
      %v4190 = vunpack.c.h.b16 %v4154
      %v4191 = vunpack.c.l.b16 %v4155
      %v4192 = vunpack.c.h.b16 %v4155
      %v4193 = vunpack.c.l.b16 %v4156
      %v4194 = vunpack.c.h.b16 %v4156
      %v4195 = vunpack.c.l.b16 %v4157
      %v4196 = vunpack.c.h.b16 %v4157
      %v4197 = vunpack.c.l.b16 %v4158
      %v4198 = vunpack.c.h.b16 %v4158
      %v4199 = vunpack.c.l.b16 %v4159
      %v4200 = vunpack.c.h.b16 %v4159
      %v4201 = vunpack.c.l.b16 %v4160
      %v4202 = vunpack.c.h.b16 %v4160
      %v4203 = vunpack.c.l.b16 %v4161
      %v4204 = vunpack.c.h.b16 %v4161
      %v4205 = vunpack.c.l.b16 %v4162
      %v4206 = vunpack.c.h.b16 %v4162
      %v4207 = vunpack.c.l.b16 %v4163
      %v4208 = vunpack.c.h.b16 %v4163
      %v4209 = vunpack.c.l.b16 %v4164
      %v4210 = vunpack.c.h.b16 %v4164
      %v4211 = vunpack.c.l.b16 %v4165
      %v4212 = vunpack.c.h.b16 %v4165
      %v4213 = vunpack.c.l.b16 %v4166
      %v4214 = vunpack.c.h.b16 %v4166
      %v4215 = vpack.c.b16 %v4185, %v4183
      %v4216 = vpack.c.b16 %v4186, %v4184
      %v4217 = vpack.c.b16 %v4189, %v4187
      %v4218 = vpack.c.b16 %v4190, %v4188
      %v4219 = vpack.c.b16 %v4193, %v4191
      %v4220 = vpack.c.b16 %v4194, %v4192
      %v4221 = vpack.c.b16 %v4197, %v4195
      %v4222 = vpack.c.b16 %v4198, %v4196
      %v4223 = vpack.c.b16 %v4201, %v4199
      %v4224 = vpack.c.b16 %v4202, %v4200
      %v4225 = vpack.c.b16 %v4205, %v4203
      %v4226 = vpack.c.b16 %v4206, %v4204
      %v4227 = vpack.c.b16 %v4209, %v4207
      %v4228 = vpack.c.b16 %v4210, %v4208
      %v4229 = vpack.c.b16 %v4213, %v4211
      %v4230 = vpack.c.b16 %v4214, %v4212
      %4247 = vmatpush.bf16.msra.mxu0 %v4229
      %4248 = vmatpush.bf16.msra.mxu0 %v4227
      %4249 = vmatpush.bf16.msra.mxu0 %v4225
      %4250 = vmatpush.bf16.msra.mxu0 %v4223
      %4251 = vmatpush.bf16.msra.mxu0 %v4221
      %4252 = vmatpush.bf16.msra.mxu0 %v4219
      %4253 = vmatpush.bf16.msra.mxu0 %v4217
      %4254 = vmatpush.bf16.msra.mxu0 %v4215
      %4255 = vmatmul.bf16.gmra.mxu0 %v4135
      %v4256 = vpop.f32.mrf.mxu0
      %v4257 = vadd.f32 0.0, %v4256
      %v4258 = vpop.f32.mrf.mxu0
      %v4259 = vadd.f32 0.0, %v4258
      %4260 = vmatmul.bf16.gmra.mxu0 %v4136
      %v4261 = vpop.f32.mrf.mxu0
      %v4262 = vadd.f32 0.0, %v4261
      %v4263 = vpop.f32.mrf.mxu0
      %v4264 = vadd.f32 0.0, %v4263
      %4265 = vmatmul.bf16.gmra.mxu0 %v4137
      %v4266 = vpop.f32.mrf.mxu0
      %v4267 = vadd.f32 0.0, %v4266
      %v4268 = vpop.f32.mrf.mxu0
      %v4269 = vadd.f32 0.0, %v4268
      %4270 = vmatmul.bf16.gmra.mxu0 %v4138
      %v4271 = vpop.f32.mrf.mxu0
      %v4272 = vadd.f32 0.0, %v4271
      %v4273 = vpop.f32.mrf.mxu0
      %v4274 = vadd.f32 0.0, %v4273
      %4275 = vmatmul.bf16.gmra.mxu0 %v4139
      %v4276 = vpop.f32.mrf.mxu0
      %v4277 = vadd.f32 0.0, %v4276
      %v4278 = vpop.f32.mrf.mxu0
      %v4279 = vadd.f32 0.0, %v4278
      %4280 = vmatmul.bf16.gmra.mxu0 %v4140
      %v4281 = vpop.f32.mrf.mxu0
      %v4282 = vadd.f32 0.0, %v4281
      %v4283 = vpop.f32.mrf.mxu0
      %v4284 = vadd.f32 0.0, %v4283
      %4285 = vmatmul.bf16.gmra.mxu0 %v4141
      %v4286 = vpop.f32.mrf.mxu0
      %v4287 = vadd.f32 0.0, %v4286
      %v4288 = vpop.f32.mrf.mxu0
      %v4289 = vadd.f32 0.0, %v4288
      %4290 = vmatmul.bf16.gmra.mxu0 %v4142
      %v4291 = vpop.f32.mrf.mxu0
      %v4292 = vadd.f32 0.0, %v4291
      %v4293 = vpop.f32.mrf.mxu0
      %v4294 = vadd.f32 0.0, %v4293
      %4295 = vmatmul.bf16.gmra.mxu0 %v4143
      %v4296 = vpop.f32.mrf.mxu0
      %v4297 = vadd.f32 0.0, %v4296
      %v4298 = vpop.f32.mrf.mxu0
      %v4299 = vadd.f32 0.0, %v4298
      %4300 = vmatmul.bf16.gmra.mxu0 %v4144
      %v4301 = vpop.f32.mrf.mxu0
      %v4302 = vadd.f32 0.0, %v4301
      %v4303 = vpop.f32.mrf.mxu0
      %v4304 = vadd.f32 0.0, %v4303
      %4305 = vmatmul.bf16.gmra.mxu0 %v4145
      %v4306 = vpop.f32.mrf.mxu0
      %v4307 = vadd.f32 0.0, %v4306
      %v4308 = vpop.f32.mrf.mxu0
      %v4309 = vadd.f32 0.0, %v4308
      %4310 = vmatmul.bf16.gmra.mxu0 %v4146
      %v4311 = vpop.f32.mrf.mxu0
      %v4312 = vadd.f32 0.0, %v4311
      %v4313 = vpop.f32.mrf.mxu0
      %v4314 = vadd.f32 0.0, %v4313
      %4315 = vmatmul.bf16.gmra.mxu0 %v4147
      %v4316 = vpop.f32.mrf.mxu0
      %v4317 = vadd.f32 0.0, %v4316
      %v4318 = vpop.f32.mrf.mxu0
      %v4319 = vadd.f32 0.0, %v4318
      %4320 = vmatmul.bf16.gmra.mxu0 %v4148
      %v4321 = vpop.f32.mrf.mxu0
      %v4322 = vadd.f32 0.0, %v4321
      %v4323 = vpop.f32.mrf.mxu0
      %v4324 = vadd.f32 0.0, %v4323
      %4325 = vmatmul.bf16.gmra.mxu0 %v4149
      %v4326 = vpop.f32.mrf.mxu0
      %v4327 = vadd.f32 0.0, %v4326
      %v4328 = vpop.f32.mrf.mxu0
      %v4329 = vadd.f32 0.0, %v4328
      %4330 = vmatmul.bf16.gmra.mxu0 %v4150
      %v4331 = vpop.f32.mrf.mxu0
      %v4332 = vadd.f32 0.0, %v4331
      %v4333 = vpop.f32.mrf.mxu0
      %v4334 = vadd.f32 0.0, %v4333
      %4335 = vdwg.mxu0
      %4336 = vmatpush.bf16.msra.mxu0 %v4230
      %4337 = vmatpush.bf16.msra.mxu0 %v4228
      %4338 = vmatpush.bf16.msra.mxu0 %v4226
      %4339 = vmatpush.bf16.msra.mxu0 %v4224
      %4340 = vmatpush.bf16.msra.mxu0 %v4222
      %4341 = vmatpush.bf16.msra.mxu0 %v4220
      %4342 = vmatpush.bf16.msra.mxu0 %v4218
      %4343 = vmatpush.bf16.msra.mxu0 %v4216
      %4344 = vmatmul.bf16.gmra.mxu0 %v4135
      %v4345 = vpop.f32.mrf.mxu0
      %v4346 = vadd.f32 0.0, %v4345
      %v4347 = vpop.f32.mrf.mxu0
      %v4348 = vadd.f32 0.0, %v4347
      %4349 = vmatmul.bf16.gmra.mxu0 %v4136
      %v4350 = vpop.f32.mrf.mxu0
      %v4351 = vadd.f32 0.0, %v4350
      %v4352 = vpop.f32.mrf.mxu0
      %v4353 = vadd.f32 0.0, %v4352
      %4354 = vmatmul.bf16.gmra.mxu0 %v4137
      %v4355 = vpop.f32.mrf.mxu0
      %v4356 = vadd.f32 0.0, %v4355
      %v4357 = vpop.f32.mrf.mxu0
      %v4358 = vadd.f32 0.0, %v4357
      %4359 = vmatmul.bf16.gmra.mxu0 %v4138
      %v4360 = vpop.f32.mrf.mxu0
      %v4361 = vadd.f32 0.0, %v4360
      %v4362 = vpop.f32.mrf.mxu0
      %v4363 = vadd.f32 0.0, %v4362
      %4364 = vmatmul.bf16.gmra.mxu0 %v4139
      %v4365 = vpop.f32.mrf.mxu0
      %v4366 = vadd.f32 0.0, %v4365
      %v4367 = vpop.f32.mrf.mxu0
      %v4368 = vadd.f32 0.0, %v4367
      %4369 = vmatmul.bf16.gmra.mxu0 %v4140
      %v4370 = vpop.f32.mrf.mxu0
      %v4371 = vadd.f32 0.0, %v4370
      %v4372 = vpop.f32.mrf.mxu0
      %v4373 = vadd.f32 0.0, %v4372
      %4374 = vmatmul.bf16.gmra.mxu0 %v4141
      %v4375 = vpop.f32.mrf.mxu0
      %v4376 = vadd.f32 0.0, %v4375
      %v4377 = vpop.f32.mrf.mxu0
      %v4378 = vadd.f32 0.0, %v4377
      %4379 = vmatmul.bf16.gmra.mxu0 %v4142
      %v4380 = vpop.f32.mrf.mxu0
      %v4381 = vadd.f32 0.0, %v4380
      %v4382 = vpop.f32.mrf.mxu0
      %v4383 = vadd.f32 0.0, %v4382
      %4384 = vmatmul.bf16.gmra.mxu0 %v4143
      %v4385 = vpop.f32.mrf.mxu0
      %v4386 = vadd.f32 0.0, %v4385
      %v4387 = vpop.f32.mrf.mxu0
      %v4388 = vadd.f32 0.0, %v4387
      %4389 = vmatmul.bf16.gmra.mxu0 %v4144
      %v4390 = vpop.f32.mrf.mxu0
      %v4391 = vadd.f32 0.0, %v4390
      %v4392 = vpop.f32.mrf.mxu0
      %v4393 = vadd.f32 0.0, %v4392
      %4394 = vmatmul.bf16.gmra.mxu0 %v4145
      %v4395 = vpop.f32.mrf.mxu0
      %v4396 = vadd.f32 0.0, %v4395
      %v4397 = vpop.f32.mrf.mxu0
      %v4398 = vadd.f32 0.0, %v4397
      %4399 = vmatmul.bf16.gmra.mxu0 %v4146
      %v4400 = vpop.f32.mrf.mxu0
      %v4401 = vadd.f32 0.0, %v4400
      %v4402 = vpop.f32.mrf.mxu0
      %v4403 = vadd.f32 0.0, %v4402
      %4404 = vmatmul.bf16.gmra.mxu0 %v4147
      %v4405 = vpop.f32.mrf.mxu0
      %v4406 = vadd.f32 0.0, %v4405
      %v4407 = vpop.f32.mrf.mxu0
      %v4408 = vadd.f32 0.0, %v4407
      %4409 = vmatmul.bf16.gmra.mxu0 %v4148
      %v4410 = vpop.f32.mrf.mxu0
      %v4411 = vadd.f32 0.0, %v4410
      %v4412 = vpop.f32.mrf.mxu0
      %v4413 = vadd.f32 0.0, %v4412
      %4414 = vmatmul.bf16.gmra.mxu0 %v4149
      %v4415 = vpop.f32.mrf.mxu0
      %v4416 = vadd.f32 0.0, %v4415
      %v4417 = vpop.f32.mrf.mxu0
      %v4418 = vadd.f32 0.0, %v4417
      %4419 = vmatmul.bf16.gmra.mxu0 %v4150
      %v4420 = vpop.f32.mrf.mxu0
      %v4421 = vadd.f32 0.0, %v4420
      %v4422 = vpop.f32.mrf.mxu0
      %v4423 = vadd.f32 0.0, %v4422
      %4424 = vdwg.mxu0
      %v4425 = vpack.c.bf16 %v4346, %v4257
      %v4426 = vpack.c.bf16 %v4348, %v4259
      %v4427 = vpack.c.bf16 %v4351, %v4262
      %v4428 = vpack.c.bf16 %v4353, %v4264
      %v4429 = vpack.c.bf16 %v4356, %v4267
      %v4430 = vpack.c.bf16 %v4358, %v4269
      %v4431 = vpack.c.bf16 %v4361, %v4272
      %v4432 = vpack.c.bf16 %v4363, %v4274
      %v4433 = vpack.c.bf16 %v4366, %v4277
      %v4434 = vpack.c.bf16 %v4368, %v4279
      %v4435 = vpack.c.bf16 %v4371, %v4282
      %v4436 = vpack.c.bf16 %v4373, %v4284
      %v4437 = vpack.c.bf16 %v4376, %v4287
      %v4438 = vpack.c.bf16 %v4378, %v4289
      %v4439 = vpack.c.bf16 %v4381, %v4292
      %v4440 = vpack.c.bf16 %v4383, %v4294
      %v4441 = vpack.c.bf16 %v4386, %v4297
      %v4442 = vpack.c.bf16 %v4388, %v4299
      %v4443 = vpack.c.bf16 %v4391, %v4302
      %v4444 = vpack.c.bf16 %v4393, %v4304
      %v4445 = vpack.c.bf16 %v4396, %v4307
      %v4446 = vpack.c.bf16 %v4398, %v4309
      %v4447 = vpack.c.bf16 %v4401, %v4312
      %v4448 = vpack.c.bf16 %v4403, %v4314
      %v4449 = vpack.c.bf16 %v4406, %v4317
      %v4450 = vpack.c.bf16 %v4408, %v4319
      %v4451 = vpack.c.bf16 %v4411, %v4322
      %v4452 = vpack.c.bf16 %v4413, %v4324
      %v4453 = vpack.c.bf16 %v4416, %v4327
      %v4454 = vpack.c.bf16 %v4418, %v4329
      %v4455 = vpack.c.bf16 %v4421, %v4332
      %v4456 = vpack.c.bf16 %v4423, %v4334
      %v4457 = vld [vmem:[%s5] sm:$0x3]
      %4459 = vst [vmem:[#allocation1] ss:$9 sm:$0xff] %v4457
      %v4460 = vld [vmem:[#allocation1] sm:$0xff]
      %v4461 = vld [vmem:[#allocation1 + $0x9] sm:$0xff]
      %v4462 = vpack.i.b16 %v4460, %v4460
      %v4464 = vperm.slane %v4462, 0
      %v4465 = vpack.i.b16 %v4461, %v4461
      %v4467 = vperm.slane %v4465, 0
      %v4468 = vunpack.c.l.bf16 %v4425
      %v4469 = vunpack.c.h.bf16 %v4425
      %v4470 = vunpack.c.l.bf16 %v4426
      %v4471 = vunpack.c.h.bf16 %v4426
      %v4472 = vunpack.c.l.bf16 %v4427
      %v4473 = vunpack.c.h.bf16 %v4427
      %v4474 = vunpack.c.l.bf16 %v4428
      %v4475 = vunpack.c.h.bf16 %v4428
      %v4476 = vunpack.c.l.bf16 %v4429
      %v4477 = vunpack.c.h.bf16 %v4429
      %v4478 = vunpack.c.l.bf16 %v4430
      %v4479 = vunpack.c.h.bf16 %v4430
      %v4480 = vunpack.c.l.bf16 %v4431
      %v4481 = vunpack.c.h.bf16 %v4431
      %v4482 = vunpack.c.l.bf16 %v4432
      %v4483 = vunpack.c.h.bf16 %v4432
      %v4484 = vunpack.c.l.bf16 %v4433
      %v4485 = vunpack.c.h.bf16 %v4433
      %v4486 = vunpack.c.l.bf16 %v4434
      %v4487 = vunpack.c.h.bf16 %v4434
      %v4488 = vunpack.c.l.bf16 %v4435
      %v4489 = vunpack.c.h.bf16 %v4435
      %v4490 = vunpack.c.l.bf16 %v4436
      %v4491 = vunpack.c.h.bf16 %v4436
      %v4492 = vunpack.c.l.bf16 %v4437
      %v4493 = vunpack.c.h.bf16 %v4437
      %v4494 = vunpack.c.l.bf16 %v4438
      %v4495 = vunpack.c.h.bf16 %v4438
      %v4496 = vunpack.c.l.bf16 %v4439
      %v4497 = vunpack.c.h.bf16 %v4439
      %v4498 = vunpack.c.l.bf16 %v4440
      %v4499 = vunpack.c.h.bf16 %v4440
      %v4500 = vunpack.c.l.bf16 %v4441
      %v4501 = vunpack.c.h.bf16 %v4441
      %v4502 = vunpack.c.l.bf16 %v4442
      %v4503 = vunpack.c.h.bf16 %v4442
      %v4504 = vunpack.c.l.bf16 %v4443
      %v4505 = vunpack.c.h.bf16 %v4443
      %v4506 = vunpack.c.l.bf16 %v4444
      %v4507 = vunpack.c.h.bf16 %v4444
      %v4508 = vunpack.c.l.bf16 %v4445
      %v4509 = vunpack.c.h.bf16 %v4445
      %v4510 = vunpack.c.l.bf16 %v4446
      %v4511 = vunpack.c.h.bf16 %v4446
      %v4512 = vunpack.c.l.bf16 %v4447
      %v4513 = vunpack.c.h.bf16 %v4447
      %v4514 = vunpack.c.l.bf16 %v4448
      %v4515 = vunpack.c.h.bf16 %v4448
      %v4516 = vunpack.c.l.bf16 %v4449
      %v4517 = vunpack.c.h.bf16 %v4449
      %v4518 = vunpack.c.l.bf16 %v4450
      %v4519 = vunpack.c.h.bf16 %v4450
      %v4520 = vunpack.c.l.bf16 %v4451
      %v4521 = vunpack.c.h.bf16 %v4451
      %v4522 = vunpack.c.l.bf16 %v4452
      %v4523 = vunpack.c.h.bf16 %v4452
      %v4524 = vunpack.c.l.bf16 %v4453
      %v4525 = vunpack.c.h.bf16 %v4453
      %v4526 = vunpack.c.l.bf16 %v4454
      %v4527 = vunpack.c.h.bf16 %v4454
      %v4528 = vunpack.c.l.bf16 %v4455
      %v4529 = vunpack.c.h.bf16 %v4455
      %v4530 = vunpack.c.l.bf16 %v4456
      %v4531 = vunpack.c.h.bf16 %v4456
      %v4532 = vunpack.c.l.bf16 %v4464
      %v4533 = vunpack.c.l.bf16 %v4467
      %v4534 = vadd.f32 %v4468, %v4532
      %v4535 = vadd.f32 %v4469, %v4533
      %v4536 = vadd.f32 %v4470, %v4532
      %v4537 = vadd.f32 %v4471, %v4533
      %v4538 = vadd.f32 %v4472, %v4532
      %v4539 = vadd.f32 %v4473, %v4533
      %v4540 = vadd.f32 %v4474, %v4532
      %v4541 = vadd.f32 %v4475, %v4533
      %v4542 = vadd.f32 %v4476, %v4532
      %v4543 = vadd.f32 %v4477, %v4533
      %v4544 = vadd.f32 %v4478, %v4532
      %v4545 = vadd.f32 %v4479, %v4533
      %v4546 = vadd.f32 %v4480, %v4532
      %v4547 = vadd.f32 %v4481, %v4533
      %v4548 = vadd.f32 %v4482, %v4532
      %v4549 = vadd.f32 %v4483, %v4533
      %v4550 = vadd.f32 %v4484, %v4532
      %v4551 = vadd.f32 %v4485, %v4533
      %v4552 = vadd.f32 %v4486, %v4532
      %v4553 = vadd.f32 %v4487, %v4533
      %v4554 = vadd.f32 %v4488, %v4532
      %v4555 = vadd.f32 %v4489, %v4533
      %v4556 = vadd.f32 %v4490, %v4532
      %v4557 = vadd.f32 %v4491, %v4533
      %v4558 = vadd.f32 %v4492, %v4532
      %v4559 = vadd.f32 %v4493, %v4533
      %v4560 = vadd.f32 %v4494, %v4532
      %v4561 = vadd.f32 %v4495, %v4533
      %v4562 = vadd.f32 %v4496, %v4532
      %v4563 = vadd.f32 %v4497, %v4533
      %v4564 = vadd.f32 %v4498, %v4532
      %v4565 = vadd.f32 %v4499, %v4533
      %v4566 = vadd.f32 %v4500, %v4532
      %v4567 = vadd.f32 %v4501, %v4533
      %v4568 = vadd.f32 %v4502, %v4532
      %v4569 = vadd.f32 %v4503, %v4533
      %v4570 = vadd.f32 %v4504, %v4532
      %v4571 = vadd.f32 %v4505, %v4533
      %v4572 = vadd.f32 %v4506, %v4532
      %v4573 = vadd.f32 %v4507, %v4533
      %v4574 = vadd.f32 %v4508, %v4532
      %v4575 = vadd.f32 %v4509, %v4533
      %v4576 = vadd.f32 %v4510, %v4532
      %v4577 = vadd.f32 %v4511, %v4533
      %v4578 = vadd.f32 %v4512, %v4532
      %v4579 = vadd.f32 %v4513, %v4533
      %v4580 = vadd.f32 %v4514, %v4532
      %v4581 = vadd.f32 %v4515, %v4533
      %v4582 = vadd.f32 %v4516, %v4532
      %v4583 = vadd.f32 %v4517, %v4533
      %v4584 = vadd.f32 %v4518, %v4532
      %v4585 = vadd.f32 %v4519, %v4533
      %v4586 = vadd.f32 %v4520, %v4532
      %v4587 = vadd.f32 %v4521, %v4533
      %v4588 = vadd.f32 %v4522, %v4532
      %v4589 = vadd.f32 %v4523, %v4533
      %v4590 = vadd.f32 %v4524, %v4532
      %v4591 = vadd.f32 %v4525, %v4533
      %v4592 = vadd.f32 %v4526, %v4532
      %v4593 = vadd.f32 %v4527, %v4533
      %v4594 = vadd.f32 %v4528, %v4532
      %v4595 = vadd.f32 %v4529, %v4533
      %v4596 = vadd.f32 %v4530, %v4532
      %v4597 = vadd.f32 %v4531, %v4533
      %v4598 = vpack.c.bf16 %v4535, %v4534
      %v4599 = vpack.c.bf16 %v4537, %v4536
      %v4600 = vpack.c.bf16 %v4539, %v4538
      %v4601 = vpack.c.bf16 %v4541, %v4540
      %v4602 = vpack.c.bf16 %v4543, %v4542
      %v4603 = vpack.c.bf16 %v4545, %v4544
      %v4604 = vpack.c.bf16 %v4547, %v4546
      %v4605 = vpack.c.bf16 %v4549, %v4548
      %v4606 = vpack.c.bf16 %v4551, %v4550
      %v4607 = vpack.c.bf16 %v4553, %v4552
      %v4608 = vpack.c.bf16 %v4555, %v4554
      %v4609 = vpack.c.bf16 %v4557, %v4556
      %v4610 = vpack.c.bf16 %v4559, %v4558
      %v4611 = vpack.c.bf16 %v4561, %v4560
      %v4612 = vpack.c.bf16 %v4563, %v4562
      %v4613 = vpack.c.bf16 %v4565, %v4564
      %v4614 = vpack.c.bf16 %v4567, %v4566
      %v4615 = vpack.c.bf16 %v4569, %v4568
      %v4616 = vpack.c.bf16 %v4571, %v4570
      %v4617 = vpack.c.bf16 %v4573, %v4572
      %v4618 = vpack.c.bf16 %v4575, %v4574
      %v4619 = vpack.c.bf16 %v4577, %v4576
      %v4620 = vpack.c.bf16 %v4579, %v4578
      %v4621 = vpack.c.bf16 %v4581, %v4580
      %v4622 = vpack.c.bf16 %v4583, %v4582
      %v4623 = vpack.c.bf16 %v4585, %v4584
      %v4624 = vpack.c.bf16 %v4587, %v4586
      %v4625 = vpack.c.bf16 %v4589, %v4588
      %v4626 = vpack.c.bf16 %v4591, %v4590
      %v4627 = vpack.c.bf16 %v4593, %v4592
      %v4628 = vpack.c.bf16 %v4595, %v4594
      %v4629 = vpack.c.bf16 %v4597, %v4596
      %v4630 = vld [vmem:[%s6] sm:$0xf]
      %v4631 = vld [vmem:[%s6 + $0x4] sm:$0xf]
      %v4632 = vld [vmem:[%s6 + $0x8] sm:$0xf]
      %v4633 = vld [vmem:[%s6 + $0xc] sm:$0xf]
      %v4634 = vld [vmem:[%s6 + $0x10] sm:$0xf]
      %v4635 = vld [vmem:[%s6 + $0x14] sm:$0xf]
      %v4636 = vld [vmem:[%s6 + $0x18] sm:$0xf]
      %v4637 = vld [vmem:[%s6 + $0x1c] sm:$0xf]
      %v4638 = vld [vmem:[%s6 + $0x20] sm:$0xf]
      %v4639 = vld [vmem:[%s6 + $0x24] sm:$0xf]
      %v4640 = vld [vmem:[%s6 + $0x28] sm:$0xf]
      %v4641 = vld [vmem:[%s6 + $0x2c] sm:$0xf]
      %v4642 = vld [vmem:[%s6 + $0x30] sm:$0xf]
      %v4643 = vld [vmem:[%s6 + $0x34] sm:$0xf]
      %v4644 = vld [vmem:[%s6 + $0x38] sm:$0xf]
      %v4645 = vld [vmem:[%s6 + $0x3c] sm:$0xf]
      %v4678 = vunpack.c.l.b16 %v4598
      %v4679 = vunpack.c.l.b16 %v4599
      %v4680 = vunpack.c.l.b16 %v4600
      %v4681 = vunpack.c.l.b16 %v4601
      %v4682 = vunpack.c.l.b16 %v4602
      %v4683 = vunpack.c.l.b16 %v4603
      %v4684 = vunpack.c.l.b16 %v4604
      %v4685 = vunpack.c.l.b16 %v4605
      %v4686 = vunpack.c.l.b16 %v4606
      %v4687 = vunpack.c.l.b16 %v4607
      %v4688 = vunpack.c.l.b16 %v4608
      %v4689 = vunpack.c.l.b16 %v4609
      %v4690 = vunpack.c.l.b16 %v4610
      %v4691 = vunpack.c.l.b16 %v4611
      %v4692 = vunpack.c.l.b16 %v4612
      %v4693 = vunpack.c.l.b16 %v4613
      %v4694 = vunpack.c.l.b16 %v4614
      %v4695 = vunpack.c.l.b16 %v4615
      %v4696 = vunpack.c.l.b16 %v4616
      %v4697 = vunpack.c.l.b16 %v4617
      %v4698 = vunpack.c.l.b16 %v4618
      %v4699 = vunpack.c.l.b16 %v4619
      %v4700 = vunpack.c.l.b16 %v4620
      %v4701 = vunpack.c.l.b16 %v4621
      %v4702 = vunpack.c.l.b16 %v4622
      %v4703 = vunpack.c.l.b16 %v4623
      %v4704 = vunpack.c.l.b16 %v4624
      %v4705 = vunpack.c.l.b16 %v4625
      %v4706 = vunpack.c.l.b16 %v4626
      %v4707 = vunpack.c.l.b16 %v4627
      %v4708 = vunpack.c.l.b16 %v4628
      %v4709 = vunpack.c.l.b16 %v4629
      %v4710 = vpack.c.b16 %v4679, %v4678
      %v4711 = vpack.c.b16 %v4681, %v4680
      %v4712 = vpack.c.b16 %v4683, %v4682
      %v4713 = vpack.c.b16 %v4685, %v4684
      %v4714 = vpack.c.b16 %v4687, %v4686
      %v4715 = vpack.c.b16 %v4689, %v4688
      %v4716 = vpack.c.b16 %v4691, %v4690
      %v4717 = vpack.c.b16 %v4693, %v4692
      %v4718 = vpack.c.b16 %v4695, %v4694
      %v4719 = vpack.c.b16 %v4697, %v4696
      %v4720 = vpack.c.b16 %v4699, %v4698
      %v4721 = vpack.c.b16 %v4701, %v4700
      %v4722 = vpack.c.b16 %v4703, %v4702
      %v4723 = vpack.c.b16 %v4705, %v4704
      %v4724 = vpack.c.b16 %v4707, %v4706
      %v4725 = vpack.c.b16 %v4709, %v4708
      %v4758 = vunpack.c.l.b16 %v4630
      %v4759 = vunpack.c.l.b16 %v4631
      %v4760 = vunpack.c.l.b16 %v4632
      %v4761 = vunpack.c.l.b16 %v4633
      %v4762 = vunpack.c.l.b16 %v4634
      %v4763 = vunpack.c.l.b16 %v4635
      %v4764 = vunpack.c.l.b16 %v4636
      %v4765 = vunpack.c.l.b16 %v4637
      %v4766 = vunpack.c.l.b16 %v4638
      %v4767 = vunpack.c.l.b16 %v4639
      %v4768 = vunpack.c.l.b16 %v4640
      %v4769 = vunpack.c.l.b16 %v4641
      %v4770 = vunpack.c.l.b16 %v4642
      %v4771 = vunpack.c.l.b16 %v4643
      %v4772 = vunpack.c.l.b16 %v4644
      %v4773 = vunpack.c.l.b16 %v4645
      %v4774 = vpack.c.b16 %v4759, %v4758
      %v4775 = vpack.c.b16 %v4761, %v4760
      %v4776 = vpack.c.b16 %v4763, %v4762
      %v4777 = vpack.c.b16 %v4765, %v4764
      %v4778 = vpack.c.b16 %v4767, %v4766
      %v4779 = vpack.c.b16 %v4769, %v4768
      %v4780 = vpack.c.b16 %v4771, %v4770
      %v4781 = vpack.c.b16 %v4773, %v4772
      %4790 = vmatpush.bf16.msra.mxu0 %v4781
      %4791 = vmatpush.bf16.msra.mxu0 %v4780
      %4792 = vmatpush.bf16.msra.mxu0 %v4779
      %4793 = vmatpush.bf16.msra.mxu0 %v4778
      %4794 = vmatpush.bf16.msra.mxu0 %v4777
      %4795 = vmatpush.bf16.msra.mxu0 %v4776
      %4796 = vmatpush.bf16.msra.mxu0 %v4775
      %4797 = vmatpush.bf16.msra.mxu0 %v4774
      %4798 = vmatmul.bf16.gmra.mxu0 %v4710
      %v4799 = vpop.f32.mrf.mxu0
      %v4800 = vadd.f32 0.0, %v4799
      %v4801 = vpop.f32.mrf.mxu0
      %v4802 = vadd.f32 0.0, %v4801
      %4803 = vmatmul.bf16.gmra.mxu0 %v4711
      %v4804 = vpop.f32.mrf.mxu0
      %v4805 = vadd.f32 0.0, %v4804
      %v4806 = vpop.f32.mrf.mxu0
      %v4807 = vadd.f32 0.0, %v4806
      %4808 = vmatmul.bf16.gmra.mxu0 %v4712
      %v4809 = vpop.f32.mrf.mxu0
      %v4810 = vadd.f32 0.0, %v4809
      %v4811 = vpop.f32.mrf.mxu0
      %v4812 = vadd.f32 0.0, %v4811
      %4813 = vmatmul.bf16.gmra.mxu0 %v4713
      %v4814 = vpop.f32.mrf.mxu0
      %v4815 = vadd.f32 0.0, %v4814
      %v4816 = vpop.f32.mrf.mxu0
      %v4817 = vadd.f32 0.0, %v4816
      %4818 = vmatmul.bf16.gmra.mxu0 %v4714
      %v4819 = vpop.f32.mrf.mxu0
      %v4820 = vadd.f32 0.0, %v4819
      %v4821 = vpop.f32.mrf.mxu0
      %v4822 = vadd.f32 0.0, %v4821
      %4823 = vmatmul.bf16.gmra.mxu0 %v4715
      %v4824 = vpop.f32.mrf.mxu0
      %v4825 = vadd.f32 0.0, %v4824
      %v4826 = vpop.f32.mrf.mxu0
      %v4827 = vadd.f32 0.0, %v4826
      %4828 = vmatmul.bf16.gmra.mxu0 %v4716
      %v4829 = vpop.f32.mrf.mxu0
      %v4830 = vadd.f32 0.0, %v4829
      %v4831 = vpop.f32.mrf.mxu0
      %v4832 = vadd.f32 0.0, %v4831
      %4833 = vmatmul.bf16.gmra.mxu0 %v4717
      %v4834 = vpop.f32.mrf.mxu0
      %v4835 = vadd.f32 0.0, %v4834
      %v4836 = vpop.f32.mrf.mxu0
      %v4837 = vadd.f32 0.0, %v4836
      %4838 = vmatmul.bf16.gmra.mxu0 %v4718
      %v4839 = vpop.f32.mrf.mxu0
      %v4840 = vadd.f32 0.0, %v4839
      %v4841 = vpop.f32.mrf.mxu0
      %v4842 = vadd.f32 0.0, %v4841
      %4843 = vmatmul.bf16.gmra.mxu0 %v4719
      %v4844 = vpop.f32.mrf.mxu0
      %v4845 = vadd.f32 0.0, %v4844
      %v4846 = vpop.f32.mrf.mxu0
      %v4847 = vadd.f32 0.0, %v4846
      %4848 = vmatmul.bf16.gmra.mxu0 %v4720
      %v4849 = vpop.f32.mrf.mxu0
      %v4850 = vadd.f32 0.0, %v4849
      %v4851 = vpop.f32.mrf.mxu0
      %v4852 = vadd.f32 0.0, %v4851
      %4853 = vmatmul.bf16.gmra.mxu0 %v4721
      %v4854 = vpop.f32.mrf.mxu0
      %v4855 = vadd.f32 0.0, %v4854
      %v4856 = vpop.f32.mrf.mxu0
      %v4857 = vadd.f32 0.0, %v4856
      %4858 = vmatmul.bf16.gmra.mxu0 %v4722
      %v4859 = vpop.f32.mrf.mxu0
      %v4860 = vadd.f32 0.0, %v4859
      %v4861 = vpop.f32.mrf.mxu0
      %v4862 = vadd.f32 0.0, %v4861
      %4863 = vmatmul.bf16.gmra.mxu0 %v4723
      %v4864 = vpop.f32.mrf.mxu0
      %v4865 = vadd.f32 0.0, %v4864
      %v4866 = vpop.f32.mrf.mxu0
      %v4867 = vadd.f32 0.0, %v4866
      %4868 = vmatmul.bf16.gmra.mxu0 %v4724
      %v4869 = vpop.f32.mrf.mxu0
      %v4870 = vadd.f32 0.0, %v4869
      %v4871 = vpop.f32.mrf.mxu0
      %v4872 = vadd.f32 0.0, %v4871
      %4873 = vmatmul.bf16.gmra.mxu0 %v4725
      %v4874 = vpop.f32.mrf.mxu0
      %v4875 = vadd.f32 0.0, %v4874
      %v4876 = vpop.f32.mrf.mxu0
      %v4877 = vadd.f32 0.0, %v4876
      %4878 = vdwg.mxu0
      %v4879 = vpack.c.bf16 %v4800, %v4800
      %v4880 = vpack.c.bf16 %v4802, %v4802
      %v4881 = vpack.c.bf16 %v4805, %v4805
      %v4882 = vpack.c.bf16 %v4807, %v4807
      %v4883 = vpack.c.bf16 %v4810, %v4810
      %v4884 = vpack.c.bf16 %v4812, %v4812
      %v4885 = vpack.c.bf16 %v4815, %v4815
      %v4886 = vpack.c.bf16 %v4817, %v4817
      %v4887 = vpack.c.bf16 %v4820, %v4820
      %v4888 = vpack.c.bf16 %v4822, %v4822
      %v4889 = vpack.c.bf16 %v4825, %v4825
      %v4890 = vpack.c.bf16 %v4827, %v4827
      %v4891 = vpack.c.bf16 %v4830, %v4830
      %v4892 = vpack.c.bf16 %v4832, %v4832
      %v4893 = vpack.c.bf16 %v4835, %v4835
      %v4894 = vpack.c.bf16 %v4837, %v4837
      %v4895 = vpack.c.bf16 %v4840, %v4840
      %v4896 = vpack.c.bf16 %v4842, %v4842
      %v4897 = vpack.c.bf16 %v4845, %v4845
      %v4898 = vpack.c.bf16 %v4847, %v4847
      %v4899 = vpack.c.bf16 %v4850, %v4850
      %v4900 = vpack.c.bf16 %v4852, %v4852
      %v4901 = vpack.c.bf16 %v4855, %v4855
      %v4902 = vpack.c.bf16 %v4857, %v4857
      %v4903 = vpack.c.bf16 %v4860, %v4860
      %v4904 = vpack.c.bf16 %v4862, %v4862
      %v4905 = vpack.c.bf16 %v4865, %v4865
      %v4906 = vpack.c.bf16 %v4867, %v4867
      %v4907 = vpack.c.bf16 %v4870, %v4870
      %v4908 = vpack.c.bf16 %v4872, %v4872
      %v4909 = vpack.c.bf16 %v4875, %v4875
      %v4910 = vpack.c.bf16 %v4877, %v4877
      %v4911 = vunpack.c.l.bf16 %v4879
      %v4912 = vunpack.c.l.bf16 %v4880
      %v4913 = vunpack.c.l.bf16 %v4881
      %v4914 = vunpack.c.l.bf16 %v4882
      %v4915 = vunpack.c.l.bf16 %v4883
      %v4916 = vunpack.c.l.bf16 %v4884
      %v4917 = vunpack.c.l.bf16 %v4885
      %v4918 = vunpack.c.l.bf16 %v4886
      %v4919 = vunpack.c.l.bf16 %v4887
      %v4920 = vunpack.c.l.bf16 %v4888
      %v4921 = vunpack.c.l.bf16 %v4889
      %v4922 = vunpack.c.l.bf16 %v4890
      %v4923 = vunpack.c.l.bf16 %v4891
      %v4924 = vunpack.c.l.bf16 %v4892
      %v4925 = vunpack.c.l.bf16 %v4893
      %v4926 = vunpack.c.l.bf16 %v4894
      %v4927 = vunpack.c.l.bf16 %v4895
      %v4928 = vunpack.c.l.bf16 %v4896
      %v4929 = vunpack.c.l.bf16 %v4897
      %v4930 = vunpack.c.l.bf16 %v4898
      %v4931 = vunpack.c.l.bf16 %v4899
      %v4932 = vunpack.c.l.bf16 %v4900
      %v4933 = vunpack.c.l.bf16 %v4901
      %v4934 = vunpack.c.l.bf16 %v4902
      %v4935 = vunpack.c.l.bf16 %v4903
      %v4936 = vunpack.c.l.bf16 %v4904
      %v4937 = vunpack.c.l.bf16 %v4905
      %v4938 = vunpack.c.l.bf16 %v4906
      %v4939 = vunpack.c.l.bf16 %v4907
      %v4940 = vunpack.c.l.bf16 %v4908
      %v4941 = vunpack.c.l.bf16 %v4909
      %v4942 = vunpack.c.l.bf16 %v4910
      %v4943 = vunpack.c.l.bf16 %v838
      %v4944 = vunpack.c.l.bf16 %v839
      %v4945 = vunpack.c.l.bf16 %v840
      %v4946 = vunpack.c.l.bf16 %v841
      %v4947 = vunpack.c.l.bf16 %v842
      %v4948 = vunpack.c.l.bf16 %v843
      %v4949 = vunpack.c.l.bf16 %v844
      %v4950 = vunpack.c.l.bf16 %v845
      %v4951 = vunpack.c.l.bf16 %v846
      %v4952 = vunpack.c.l.bf16 %v847
      %v4953 = vunpack.c.l.bf16 %v848
      %v4954 = vunpack.c.l.bf16 %v849
      %v4955 = vunpack.c.l.bf16 %v850
      %v4956 = vunpack.c.l.bf16 %v851
      %v4957 = vunpack.c.l.bf16 %v852
      %v4958 = vunpack.c.l.bf16 %v853
      %v4959 = vunpack.c.l.bf16 %v854
      %v4960 = vunpack.c.l.bf16 %v855
      %v4961 = vunpack.c.l.bf16 %v856
      %v4962 = vunpack.c.l.bf16 %v857
      %v4963 = vunpack.c.l.bf16 %v858
      %v4964 = vunpack.c.l.bf16 %v859
      %v4965 = vunpack.c.l.bf16 %v860
      %v4966 = vunpack.c.l.bf16 %v861
      %v4967 = vunpack.c.l.bf16 %v862
      %v4968 = vunpack.c.l.bf16 %v863
      %v4969 = vunpack.c.l.bf16 %v864
      %v4970 = vunpack.c.l.bf16 %v865
      %v4971 = vunpack.c.l.bf16 %v866
      %v4972 = vunpack.c.l.bf16 %v867
      %v4973 = vunpack.c.l.bf16 %v868
      %v4974 = vunpack.c.l.bf16 %v869
      %v4975 = vadd.f32 %v4911, %v4943
      %v4976 = vadd.f32 %v4912, %v4944
      %v4977 = vadd.f32 %v4913, %v4945
      %v4978 = vadd.f32 %v4914, %v4946
      %v4979 = vadd.f32 %v4915, %v4947
      %v4980 = vadd.f32 %v4916, %v4948
      %v4981 = vadd.f32 %v4917, %v4949
      %v4982 = vadd.f32 %v4918, %v4950
      %v4983 = vadd.f32 %v4919, %v4951
      %v4984 = vadd.f32 %v4920, %v4952
      %v4985 = vadd.f32 %v4921, %v4953
      %v4986 = vadd.f32 %v4922, %v4954
      %v4987 = vadd.f32 %v4923, %v4955
      %v4988 = vadd.f32 %v4924, %v4956
      %v4989 = vadd.f32 %v4925, %v4957
      %v4990 = vadd.f32 %v4926, %v4958
      %v4991 = vadd.f32 %v4927, %v4959
      %v4992 = vadd.f32 %v4928, %v4960
      %v4993 = vadd.f32 %v4929, %v4961
      %v4994 = vadd.f32 %v4930, %v4962
      %v4995 = vadd.f32 %v4931, %v4963
      %v4996 = vadd.f32 %v4932, %v4964
      %v4997 = vadd.f32 %v4933, %v4965
      %v4998 = vadd.f32 %v4934, %v4966
      %v4999 = vadd.f32 %v4935, %v4967
      %v5000 = vadd.f32 %v4936, %v4968
      %v5001 = vadd.f32 %v4937, %v4969
      %v5002 = vadd.f32 %v4938, %v4970
      %v5003 = vadd.f32 %v4939, %v4971
      %v5004 = vadd.f32 %v4940, %v4972
      %v5005 = vadd.f32 %v4941, %v4973
      %v5006 = vadd.f32 %v4942, %v4974
      %v5007 = vpack.c.bf16 %v4975, %v4975
      %v5008 = vpack.c.bf16 %v4976, %v4976
      %v5009 = vpack.c.bf16 %v4977, %v4977
      %v5010 = vpack.c.bf16 %v4978, %v4978
      %v5011 = vpack.c.bf16 %v4979, %v4979
      %v5012 = vpack.c.bf16 %v4980, %v4980
      %v5013 = vpack.c.bf16 %v4981, %v4981
      %v5014 = vpack.c.bf16 %v4982, %v4982
      %v5015 = vpack.c.bf16 %v4983, %v4983
      %v5016 = vpack.c.bf16 %v4984, %v4984
      %v5017 = vpack.c.bf16 %v4985, %v4985
      %v5018 = vpack.c.bf16 %v4986, %v4986
      %v5019 = vpack.c.bf16 %v4987, %v4987
      %v5020 = vpack.c.bf16 %v4988, %v4988
      %v5021 = vpack.c.bf16 %v4989, %v4989
      %v5022 = vpack.c.bf16 %v4990, %v4990
      %v5023 = vpack.c.bf16 %v4991, %v4991
      %v5024 = vpack.c.bf16 %v4992, %v4992
      %v5025 = vpack.c.bf16 %v4993, %v4993
      %v5026 = vpack.c.bf16 %v4994, %v4994
      %v5027 = vpack.c.bf16 %v4995, %v4995
      %v5028 = vpack.c.bf16 %v4996, %v4996
      %v5029 = vpack.c.bf16 %v4997, %v4997
      %v5030 = vpack.c.bf16 %v4998, %v4998
      %v5031 = vpack.c.bf16 %v4999, %v4999
      %v5032 = vpack.c.bf16 %v5000, %v5000
      %v5033 = vpack.c.bf16 %v5001, %v5001
      %v5034 = vpack.c.bf16 %v5002, %v5002
      %v5035 = vpack.c.bf16 %v5003, %v5003
      %v5036 = vpack.c.bf16 %v5004, %v5004
      %v5037 = vpack.c.bf16 %v5005, %v5005
      %v5038 = vpack.c.bf16 %v5006, %v5006
      %v5039 = vld [vmem:[%s8] sm:$0x1]
      %v5041 = vpack.i.b16 %v5039, %v5039
      %v5043 = vperm.slane %v5041, 0
      %v5044 = vunpack.c.l.bf16 %v5007
      %v5045 = vunpack.c.l.bf16 %v5008
      %v5046 = vunpack.c.l.bf16 %v5009
      %v5047 = vunpack.c.l.bf16 %v5010
      %v5048 = vunpack.c.l.bf16 %v5011
      %v5049 = vunpack.c.l.bf16 %v5012
      %v5050 = vunpack.c.l.bf16 %v5013
      %v5051 = vunpack.c.l.bf16 %v5014
      %v5052 = vunpack.c.l.bf16 %v5015
      %v5053 = vunpack.c.l.bf16 %v5016
      %v5054 = vunpack.c.l.bf16 %v5017
      %v5055 = vunpack.c.l.bf16 %v5018
      %v5056 = vunpack.c.l.bf16 %v5019
      %v5057 = vunpack.c.l.bf16 %v5020
      %v5058 = vunpack.c.l.bf16 %v5021
      %v5059 = vunpack.c.l.bf16 %v5022
      %v5060 = vunpack.c.l.bf16 %v5023
      %v5061 = vunpack.c.l.bf16 %v5024
      %v5062 = vunpack.c.l.bf16 %v5025
      %v5063 = vunpack.c.l.bf16 %v5026
      %v5064 = vunpack.c.l.bf16 %v5027
      %v5065 = vunpack.c.l.bf16 %v5028
      %v5066 = vunpack.c.l.bf16 %v5029
      %v5067 = vunpack.c.l.bf16 %v5030
      %v5068 = vunpack.c.l.bf16 %v5031
      %v5069 = vunpack.c.l.bf16 %v5032
      %v5070 = vunpack.c.l.bf16 %v5033
      %v5071 = vunpack.c.l.bf16 %v5034
      %v5072 = vunpack.c.l.bf16 %v5035
      %v5073 = vunpack.c.l.bf16 %v5036
      %v5074 = vunpack.c.l.bf16 %v5037
      %v5075 = vunpack.c.l.bf16 %v5038
      %v5076 = vunpack.c.l.bf16 %v5043
      %v5077 = vadd.f32 %v5044, %v5076
      %v5078 = vadd.f32 %v5045, %v5076
      %v5079 = vadd.f32 %v5046, %v5076
      %v5080 = vadd.f32 %v5047, %v5076
      %v5081 = vadd.f32 %v5048, %v5076
      %v5082 = vadd.f32 %v5049, %v5076
      %v5083 = vadd.f32 %v5050, %v5076
      %v5084 = vadd.f32 %v5051, %v5076
      %v5085 = vadd.f32 %v5052, %v5076
      %v5086 = vadd.f32 %v5053, %v5076
      %v5087 = vadd.f32 %v5054, %v5076
      %v5088 = vadd.f32 %v5055, %v5076
      %v5089 = vadd.f32 %v5056, %v5076
      %v5090 = vadd.f32 %v5057, %v5076
      %v5091 = vadd.f32 %v5058, %v5076
      %v5092 = vadd.f32 %v5059, %v5076
      %v5093 = vadd.f32 %v5060, %v5076
      %v5094 = vadd.f32 %v5061, %v5076
      %v5095 = vadd.f32 %v5062, %v5076
      %v5096 = vadd.f32 %v5063, %v5076
      %v5097 = vadd.f32 %v5064, %v5076
      %v5098 = vadd.f32 %v5065, %v5076
      %v5099 = vadd.f32 %v5066, %v5076
      %v5100 = vadd.f32 %v5067, %v5076
      %v5101 = vadd.f32 %v5068, %v5076
      %v5102 = vadd.f32 %v5069, %v5076
      %v5103 = vadd.f32 %v5070, %v5076
      %v5104 = vadd.f32 %v5071, %v5076
      %v5105 = vadd.f32 %v5072, %v5076
      %v5106 = vadd.f32 %v5073, %v5076
      %v5107 = vadd.f32 %v5074, %v5076
      %v5108 = vadd.f32 %v5075, %v5076
      %v5109 = vpack.c.bf16 %v5077, %v5077
      %v5110 = vpack.c.bf16 %v5078, %v5078
      %v5111 = vpack.c.bf16 %v5079, %v5079
      %v5112 = vpack.c.bf16 %v5080, %v5080
      %v5113 = vpack.c.bf16 %v5081, %v5081
      %v5114 = vpack.c.bf16 %v5082, %v5082
      %v5115 = vpack.c.bf16 %v5083, %v5083
      %v5116 = vpack.c.bf16 %v5084, %v5084
      %v5117 = vpack.c.bf16 %v5085, %v5085
      %v5118 = vpack.c.bf16 %v5086, %v5086
      %v5119 = vpack.c.bf16 %v5087, %v5087
      %v5120 = vpack.c.bf16 %v5088, %v5088
      %v5121 = vpack.c.bf16 %v5089, %v5089
      %v5122 = vpack.c.bf16 %v5090, %v5090
      %v5123 = vpack.c.bf16 %v5091, %v5091
      %v5124 = vpack.c.bf16 %v5092, %v5092
      %v5125 = vpack.c.bf16 %v5093, %v5093
      %v5126 = vpack.c.bf16 %v5094, %v5094
      %v5127 = vpack.c.bf16 %v5095, %v5095
      %v5128 = vpack.c.bf16 %v5096, %v5096
      %v5129 = vpack.c.bf16 %v5097, %v5097
      %v5130 = vpack.c.bf16 %v5098, %v5098
      %v5131 = vpack.c.bf16 %v5099, %v5099
      %v5132 = vpack.c.bf16 %v5100, %v5100
      %v5133 = vpack.c.bf16 %v5101, %v5101
      %v5134 = vpack.c.bf16 %v5102, %v5102
      %v5135 = vpack.c.bf16 %v5103, %v5103
      %v5136 = vpack.c.bf16 %v5104, %v5104
      %v5137 = vpack.c.bf16 %v5105, %v5105
      %v5138 = vpack.c.bf16 %v5106, %v5106
      %v5139 = vpack.c.bf16 %v5107, %v5107
      %v5140 = vpack.c.bf16 %v5108, %v5108
      %v5141 = vunpack.c.l.bf16 %v5109
      %v5142 = vunpack.c.l.bf16 %v5110
      %v5143 = vunpack.c.l.bf16 %v5111
      %v5144 = vunpack.c.l.bf16 %v5112
      %v5145 = vunpack.c.l.bf16 %v5113
      %v5146 = vunpack.c.l.bf16 %v5114
      %v5147 = vunpack.c.l.bf16 %v5115
      %v5148 = vunpack.c.l.bf16 %v5116
      %v5149 = vunpack.c.l.bf16 %v5117
      %v5150 = vunpack.c.l.bf16 %v5118
      %v5151 = vunpack.c.l.bf16 %v5119
      %v5152 = vunpack.c.l.bf16 %v5120
      %v5153 = vunpack.c.l.bf16 %v5121
      %v5154 = vunpack.c.l.bf16 %v5122
      %v5155 = vunpack.c.l.bf16 %v5123
      %v5156 = vunpack.c.l.bf16 %v5124
      %v5157 = vunpack.c.l.bf16 %v5125
      %v5158 = vunpack.c.l.bf16 %v5126
      %v5159 = vunpack.c.l.bf16 %v5127
      %v5160 = vunpack.c.l.bf16 %v5128
      %v5161 = vunpack.c.l.bf16 %v5129
      %v5162 = vunpack.c.l.bf16 %v5130
      %v5163 = vunpack.c.l.bf16 %v5131
      %v5164 = vunpack.c.l.bf16 %v5132
      %v5165 = vunpack.c.l.bf16 %v5133
      %v5166 = vunpack.c.l.bf16 %v5134
      %v5167 = vunpack.c.l.bf16 %v5135
      %v5168 = vunpack.c.l.bf16 %v5136
      %v5169 = vunpack.c.l.bf16 %v5137
      %v5170 = vunpack.c.l.bf16 %v5138
      %v5171 = vunpack.c.l.bf16 %v5139
      %v5172 = vunpack.c.l.bf16 %v5140
      %v5173 = vmax.f32 %v5141, 0.0
      %v5174 = vmax.f32 %v5142, 0.0
      %v5175 = vmax.f32 %v5143, 0.0
      %v5176 = vmax.f32 %v5144, 0.0
      %v5177 = vmax.f32 %v5145, 0.0
      %v5178 = vmax.f32 %v5146, 0.0
      %v5179 = vmax.f32 %v5147, 0.0
      %v5180 = vmax.f32 %v5148, 0.0
      %v5181 = vmax.f32 %v5149, 0.0
      %v5182 = vmax.f32 %v5150, 0.0
      %v5183 = vmax.f32 %v5151, 0.0
      %v5184 = vmax.f32 %v5152, 0.0
      %v5185 = vmax.f32 %v5153, 0.0
      %v5186 = vmax.f32 %v5154, 0.0
      %v5187 = vmax.f32 %v5155, 0.0
      %v5188 = vmax.f32 %v5156, 0.0
      %v5189 = vmax.f32 %v5157, 0.0
      %v5190 = vmax.f32 %v5158, 0.0
      %v5191 = vmax.f32 %v5159, 0.0
      %v5192 = vmax.f32 %v5160, 0.0
      %v5193 = vmax.f32 %v5161, 0.0
      %v5194 = vmax.f32 %v5162, 0.0
      %v5195 = vmax.f32 %v5163, 0.0
      %v5196 = vmax.f32 %v5164, 0.0
      %v5197 = vmax.f32 %v5165, 0.0
      %v5198 = vmax.f32 %v5166, 0.0
      %v5199 = vmax.f32 %v5167, 0.0
      %v5200 = vmax.f32 %v5168, 0.0
      %v5201 = vmax.f32 %v5169, 0.0
      %v5202 = vmax.f32 %v5170, 0.0
      %v5203 = vmax.f32 %v5171, 0.0
      %v5204 = vmax.f32 %v5172, 0.0
      %v5205 = vpack.c.bf16 %v5174, %v5173
      %v5206 = vpack.c.bf16 %v5176, %v5175
      %v5207 = vpack.c.bf16 %v5178, %v5177
      %v5208 = vpack.c.bf16 %v5180, %v5179
      %v5209 = vpack.c.bf16 %v5182, %v5181
      %v5210 = vpack.c.bf16 %v5184, %v5183
      %v5211 = vpack.c.bf16 %v5186, %v5185
      %v5212 = vpack.c.bf16 %v5188, %v5187
      %v5213 = vpack.c.bf16 %v5190, %v5189
      %v5214 = vpack.c.bf16 %v5192, %v5191
      %v5215 = vpack.c.bf16 %v5194, %v5193
      %v5216 = vpack.c.bf16 %v5196, %v5195
      %v5217 = vpack.c.bf16 %v5198, %v5197
      %v5218 = vpack.c.bf16 %v5200, %v5199
      %v5219 = vpack.c.bf16 %v5202, %v5201
      %v5220 = vpack.c.bf16 %v5204, %v5203
      %v5221 = vld [vmem:[%s7] sm:$0xf]
      %v5222 = vld [vmem:[%s7 + $0x4] sm:$0xf]
      %v5223 = vld [vmem:[%s7 + $0x8] sm:$0xf]
      %v5224 = vld [vmem:[%s7 + $0xc] sm:$0xf]
      %v5225 = vld [vmem:[%s7 + $0x10] sm:$0xf]
      %v5226 = vld [vmem:[%s7 + $0x14] sm:$0xf]
      %v5227 = vld [vmem:[%s7 + $0x18] sm:$0xf]
      %v5228 = vld [vmem:[%s7 + $0x1c] sm:$0xf]
      %v5229 = vld [vmem:[%s7 + $0x20] sm:$0xf]
      %v5230 = vld [vmem:[%s7 + $0x24] sm:$0xf]
      %v5231 = vld [vmem:[%s7 + $0x28] sm:$0xf]
      %v5232 = vld [vmem:[%s7 + $0x2c] sm:$0xf]
      %v5233 = vld [vmem:[%s7 + $0x30] sm:$0xf]
      %v5234 = vld [vmem:[%s7 + $0x34] sm:$0xf]
      %v5235 = vld [vmem:[%s7 + $0x38] sm:$0xf]
      %v5236 = vld [vmem:[%s7 + $0x3c] sm:$0xf]
      %v5253 = vunpack.c.l.b16 %v5221
      %v5254 = vunpack.c.l.b16 %v5222
      %v5255 = vunpack.c.l.b16 %v5223
      %v5256 = vunpack.c.l.b16 %v5224
      %v5257 = vunpack.c.l.b16 %v5225
      %v5258 = vunpack.c.l.b16 %v5226
      %v5259 = vunpack.c.l.b16 %v5227
      %v5260 = vunpack.c.l.b16 %v5228
      %v5261 = vunpack.c.l.b16 %v5229
      %v5262 = vunpack.c.l.b16 %v5230
      %v5263 = vunpack.c.l.b16 %v5231
      %v5264 = vunpack.c.l.b16 %v5232
      %v5265 = vunpack.c.l.b16 %v5233
      %v5266 = vunpack.c.l.b16 %v5234
      %v5267 = vunpack.c.l.b16 %v5235
      %v5268 = vunpack.c.l.b16 %v5236
      %v5269 = vpack.c.b16 %v5254, %v5253
      %v5270 = vpack.c.b16 %v5256, %v5255
      %v5271 = vpack.c.b16 %v5258, %v5257
      %v5272 = vpack.c.b16 %v5260, %v5259
      %v5273 = vpack.c.b16 %v5262, %v5261
      %v5274 = vpack.c.b16 %v5264, %v5263
      %v5275 = vpack.c.b16 %v5266, %v5265
      %v5276 = vpack.c.b16 %v5268, %v5267
      %5285 = vmatpush.bf16.msra.mxu0 %v5276
      %5286 = vmatpush.bf16.msra.mxu0 %v5275
      %5287 = vmatpush.bf16.msra.mxu0 %v5274
      %5288 = vmatpush.bf16.msra.mxu0 %v5273
      %5289 = vmatpush.bf16.msra.mxu0 %v5272
      %5290 = vmatpush.bf16.msra.mxu0 %v5271
      %5291 = vmatpush.bf16.msra.mxu0 %v5270
      %5292 = vmatpush.bf16.msra.mxu0 %v5269
      %5293 = vmatmul.bf16.gmra.mxu0 %v5205
      %v5294 = vpop.f32.mrf.mxu0
      %v5295 = vadd.f32 0.0, %v5294
      %v5296 = vpop.f32.mrf.mxu0
      %v5297 = vadd.f32 0.0, %v5296
      %5298 = vmatmul.bf16.gmra.mxu0 %v5206
      %v5299 = vpop.f32.mrf.mxu0
      %v5300 = vadd.f32 0.0, %v5299
      %v5301 = vpop.f32.mrf.mxu0
      %v5302 = vadd.f32 0.0, %v5301
      %5303 = vmatmul.bf16.gmra.mxu0 %v5207
      %v5304 = vpop.f32.mrf.mxu0
      %v5305 = vadd.f32 0.0, %v5304
      %v5306 = vpop.f32.mrf.mxu0
      %v5307 = vadd.f32 0.0, %v5306
      %5308 = vmatmul.bf16.gmra.mxu0 %v5208
      %v5309 = vpop.f32.mrf.mxu0
      %v5310 = vadd.f32 0.0, %v5309
      %v5311 = vpop.f32.mrf.mxu0
      %v5312 = vadd.f32 0.0, %v5311
      %5313 = vmatmul.bf16.gmra.mxu0 %v5209
      %v5314 = vpop.f32.mrf.mxu0
      %v5315 = vadd.f32 0.0, %v5314
      %v5316 = vpop.f32.mrf.mxu0
      %v5317 = vadd.f32 0.0, %v5316
      %5318 = vmatmul.bf16.gmra.mxu0 %v5210
      %v5319 = vpop.f32.mrf.mxu0
      %v5320 = vadd.f32 0.0, %v5319
      %v5321 = vpop.f32.mrf.mxu0
      %v5322 = vadd.f32 0.0, %v5321
      %5323 = vmatmul.bf16.gmra.mxu0 %v5211
      %v5324 = vpop.f32.mrf.mxu0
      %v5325 = vadd.f32 0.0, %v5324
      %v5326 = vpop.f32.mrf.mxu0
      %v5327 = vadd.f32 0.0, %v5326
      %5328 = vmatmul.bf16.gmra.mxu0 %v5212
      %v5329 = vpop.f32.mrf.mxu0
      %v5330 = vadd.f32 0.0, %v5329
      %v5331 = vpop.f32.mrf.mxu0
      %v5332 = vadd.f32 0.0, %v5331
      %5333 = vmatmul.bf16.gmra.mxu0 %v5213
      %v5334 = vpop.f32.mrf.mxu0
      %v5335 = vadd.f32 0.0, %v5334
      %v5336 = vpop.f32.mrf.mxu0
      %v5337 = vadd.f32 0.0, %v5336
      %5338 = vmatmul.bf16.gmra.mxu0 %v5214
      %v5339 = vpop.f32.mrf.mxu0
      %v5340 = vadd.f32 0.0, %v5339
      %v5341 = vpop.f32.mrf.mxu0
      %v5342 = vadd.f32 0.0, %v5341
      %5343 = vmatmul.bf16.gmra.mxu0 %v5215
      %v5344 = vpop.f32.mrf.mxu0
      %v5345 = vadd.f32 0.0, %v5344
      %v5346 = vpop.f32.mrf.mxu0
      %v5347 = vadd.f32 0.0, %v5346
      %5348 = vmatmul.bf16.gmra.mxu0 %v5216
      %v5349 = vpop.f32.mrf.mxu0
      %v5350 = vadd.f32 0.0, %v5349
      %v5351 = vpop.f32.mrf.mxu0
      %v5352 = vadd.f32 0.0, %v5351
      %5353 = vmatmul.bf16.gmra.mxu0 %v5217
      %v5354 = vpop.f32.mrf.mxu0
      %v5355 = vadd.f32 0.0, %v5354
      %v5356 = vpop.f32.mrf.mxu0
      %v5357 = vadd.f32 0.0, %v5356
      %5358 = vmatmul.bf16.gmra.mxu0 %v5218
      %v5359 = vpop.f32.mrf.mxu0
      %v5360 = vadd.f32 0.0, %v5359
      %v5361 = vpop.f32.mrf.mxu0
      %v5362 = vadd.f32 0.0, %v5361
      %5363 = vmatmul.bf16.gmra.mxu0 %v5219
      %v5364 = vpop.f32.mrf.mxu0
      %v5365 = vadd.f32 0.0, %v5364
      %v5366 = vpop.f32.mrf.mxu0
      %v5367 = vadd.f32 0.0, %v5366
      %5368 = vmatmul.bf16.gmra.mxu0 %v5220
      %v5369 = vpop.f32.mrf.mxu0
      %v5370 = vadd.f32 0.0, %v5369
      %v5371 = vpop.f32.mrf.mxu0
      %v5372 = vadd.f32 0.0, %v5371
      %5373 = vdwg.mxu0
      %v5374 = vpack.c.bf16 %v5295, %v5295
      %v5375 = vpack.c.bf16 %v5297, %v5297
      %v5376 = vpack.c.bf16 %v5300, %v5300
      %v5377 = vpack.c.bf16 %v5302, %v5302
      %v5378 = vpack.c.bf16 %v5305, %v5305
      %v5379 = vpack.c.bf16 %v5307, %v5307
      %v5380 = vpack.c.bf16 %v5310, %v5310
      %v5381 = vpack.c.bf16 %v5312, %v5312
      %v5382 = vpack.c.bf16 %v5315, %v5315
      %v5383 = vpack.c.bf16 %v5317, %v5317
      %v5384 = vpack.c.bf16 %v5320, %v5320
      %v5385 = vpack.c.bf16 %v5322, %v5322
      %v5386 = vpack.c.bf16 %v5325, %v5325
      %v5387 = vpack.c.bf16 %v5327, %v5327
      %v5388 = vpack.c.bf16 %v5330, %v5330
      %v5389 = vpack.c.bf16 %v5332, %v5332
      %v5390 = vpack.c.bf16 %v5335, %v5335
      %v5391 = vpack.c.bf16 %v5337, %v5337
      %v5392 = vpack.c.bf16 %v5340, %v5340
      %v5393 = vpack.c.bf16 %v5342, %v5342
      %v5394 = vpack.c.bf16 %v5345, %v5345
      %v5395 = vpack.c.bf16 %v5347, %v5347
      %v5396 = vpack.c.bf16 %v5350, %v5350
      %v5397 = vpack.c.bf16 %v5352, %v5352
      %v5398 = vpack.c.bf16 %v5355, %v5355
      %v5399 = vpack.c.bf16 %v5357, %v5357
      %v5400 = vpack.c.bf16 %v5360, %v5360
      %v5401 = vpack.c.bf16 %v5362, %v5362
      %v5402 = vpack.c.bf16 %v5365, %v5365
      %v5403 = vpack.c.bf16 %v5367, %v5367
      %v5404 = vpack.c.bf16 %v5370, %v5370
      %v5405 = vpack.c.bf16 %v5372, %v5372
      %v5406 = vshrl.u32 %v5039, 16
      %v5407 = vpack.i.b16 %v5406, %v5406
      %v5409 = vperm.slane %v5407, 0
      %v5410 = vunpack.c.l.bf16 %v5374
      %v5411 = vunpack.c.l.bf16 %v5375
      %v5412 = vunpack.c.l.bf16 %v5376
      %v5413 = vunpack.c.l.bf16 %v5377
      %v5414 = vunpack.c.l.bf16 %v5378
      %v5415 = vunpack.c.l.bf16 %v5379
      %v5416 = vunpack.c.l.bf16 %v5380
      %v5417 = vunpack.c.l.bf16 %v5381
      %v5418 = vunpack.c.l.bf16 %v5382
      %v5419 = vunpack.c.l.bf16 %v5383
      %v5420 = vunpack.c.l.bf16 %v5384
      %v5421 = vunpack.c.l.bf16 %v5385
      %v5422 = vunpack.c.l.bf16 %v5386
      %v5423 = vunpack.c.l.bf16 %v5387
      %v5424 = vunpack.c.l.bf16 %v5388
      %v5425 = vunpack.c.l.bf16 %v5389
      %v5426 = vunpack.c.l.bf16 %v5390
      %v5427 = vunpack.c.l.bf16 %v5391
      %v5428 = vunpack.c.l.bf16 %v5392
      %v5429 = vunpack.c.l.bf16 %v5393
      %v5430 = vunpack.c.l.bf16 %v5394
      %v5431 = vunpack.c.l.bf16 %v5395
      %v5432 = vunpack.c.l.bf16 %v5396
      %v5433 = vunpack.c.l.bf16 %v5397
      %v5434 = vunpack.c.l.bf16 %v5398
      %v5435 = vunpack.c.l.bf16 %v5399
      %v5436 = vunpack.c.l.bf16 %v5400
      %v5437 = vunpack.c.l.bf16 %v5401
      %v5438 = vunpack.c.l.bf16 %v5402
      %v5439 = vunpack.c.l.bf16 %v5403
      %v5440 = vunpack.c.l.bf16 %v5404
      %v5441 = vunpack.c.l.bf16 %v5405
      %v5442 = vunpack.c.l.bf16 %v5409
      %v5443 = vadd.f32 %v5410, %v5442
      %v5444 = vadd.f32 %v5411, %v5442
      %v5445 = vadd.f32 %v5412, %v5442
      %v5446 = vadd.f32 %v5413, %v5442
      %v5447 = vadd.f32 %v5414, %v5442
      %v5448 = vadd.f32 %v5415, %v5442
      %v5449 = vadd.f32 %v5416, %v5442
      %v5450 = vadd.f32 %v5417, %v5442
      %v5451 = vadd.f32 %v5418, %v5442
      %v5452 = vadd.f32 %v5419, %v5442
      %v5453 = vadd.f32 %v5420, %v5442
      %v5454 = vadd.f32 %v5421, %v5442
      %v5455 = vadd.f32 %v5422, %v5442
      %v5456 = vadd.f32 %v5423, %v5442
      %v5457 = vadd.f32 %v5424, %v5442
      %v5458 = vadd.f32 %v5425, %v5442
      %v5459 = vadd.f32 %v5426, %v5442
      %v5460 = vadd.f32 %v5427, %v5442
      %v5461 = vadd.f32 %v5428, %v5442
      %v5462 = vadd.f32 %v5429, %v5442
      %v5463 = vadd.f32 %v5430, %v5442
      %v5464 = vadd.f32 %v5431, %v5442
      %v5465 = vadd.f32 %v5432, %v5442
      %v5466 = vadd.f32 %v5433, %v5442
      %v5467 = vadd.f32 %v5434, %v5442
      %v5468 = vadd.f32 %v5435, %v5442
      %v5469 = vadd.f32 %v5436, %v5442
      %v5470 = vadd.f32 %v5437, %v5442
      %v5471 = vadd.f32 %v5438, %v5442
      %v5472 = vadd.f32 %v5439, %v5442
      %v5473 = vadd.f32 %v5440, %v5442
      %v5474 = vadd.f32 %v5441, %v5442
      %v5475 = vpack.c.bf16 %v5443, %v5443
      %v5476 = vpack.c.bf16 %v5444, %v5444
      %v5477 = vpack.c.bf16 %v5445, %v5445
      %v5478 = vpack.c.bf16 %v5446, %v5446
      %v5479 = vpack.c.bf16 %v5447, %v5447
      %v5480 = vpack.c.bf16 %v5448, %v5448
      %v5481 = vpack.c.bf16 %v5449, %v5449
      %v5482 = vpack.c.bf16 %v5450, %v5450
      %v5483 = vpack.c.bf16 %v5451, %v5451
      %v5484 = vpack.c.bf16 %v5452, %v5452
      %v5485 = vpack.c.bf16 %v5453, %v5453
      %v5486 = vpack.c.bf16 %v5454, %v5454
      %v5487 = vpack.c.bf16 %v5455, %v5455
      %v5488 = vpack.c.bf16 %v5456, %v5456
      %v5489 = vpack.c.bf16 %v5457, %v5457
      %v5490 = vpack.c.bf16 %v5458, %v5458
      %v5491 = vpack.c.bf16 %v5459, %v5459
      %v5492 = vpack.c.bf16 %v5460, %v5460
      %v5493 = vpack.c.bf16 %v5461, %v5461
      %v5494 = vpack.c.bf16 %v5462, %v5462
      %v5495 = vpack.c.bf16 %v5463, %v5463
      %v5496 = vpack.c.bf16 %v5464, %v5464
      %v5497 = vpack.c.bf16 %v5465, %v5465
      %v5498 = vpack.c.bf16 %v5466, %v5466
      %v5499 = vpack.c.bf16 %v5467, %v5467
      %v5500 = vpack.c.bf16 %v5468, %v5468
      %v5501 = vpack.c.bf16 %v5469, %v5469
      %v5502 = vpack.c.bf16 %v5470, %v5470
      %v5503 = vpack.c.bf16 %v5471, %v5471
      %v5504 = vpack.c.bf16 %v5472, %v5472
      %v5505 = vpack.c.bf16 %v5473, %v5473
      %v5506 = vpack.c.bf16 %v5474, %v5474
      %v5507 = vlaneseq
      %v5508 = vand.u32 %v5507, 127
      %vm5509 = vcmp.eq.s32.totalorder %v5508, 0
      %v5510 = vrot.slane %v4598, 4
      %v5511 = vrot.slane %v4599, 4
      %v5512 = vrot.slane %v4600, 4
      %v5513 = vrot.slane %v4601, 4
      %v5514 = vrot.slane %v4602, 4
      %v5515 = vrot.slane %v4603, 4
      %v5516 = vrot.slane %v4604, 4
      %v5517 = vrot.slane %v4605, 4
      %v5518 = vrot.slane %v4606, 4
      %v5519 = vrot.slane %v4607, 4
      %v5520 = vrot.slane %v4608, 4
      %v5521 = vrot.slane %v4609, 4
      %v5522 = vrot.slane %v4610, 4
      %v5523 = vrot.slane %v4611, 4
      %v5524 = vrot.slane %v4612, 4
      %v5525 = vrot.slane %v4613, 4
      %v5526 = vrot.slane %v4614, 4
      %v5527 = vrot.slane %v4615, 4
      %v5528 = vrot.slane %v4616, 4
      %v5529 = vrot.slane %v4617, 4
      %v5530 = vrot.slane %v4618, 4
      %v5531 = vrot.slane %v4619, 4
      %v5532 = vrot.slane %v4620, 4
      %v5533 = vrot.slane %v4621, 4
      %v5534 = vrot.slane %v4622, 4
      %v5535 = vrot.slane %v4623, 4
      %v5536 = vrot.slane %v4624, 4
      %v5537 = vrot.slane %v4625, 4
      %v5538 = vrot.slane %v4626, 4
      %v5539 = vrot.slane %v4627, 4
      %v5540 = vrot.slane %v4628, 4
      %v5541 = vrot.slane %v4629, 4
      %v5574 = vunpack.c.l.bf16 %v5510
      %v5575 = vunpack.c.l.bf16 %v5511
      %v5576 = vunpack.c.l.bf16 %v5512
      %v5577 = vunpack.c.l.bf16 %v5513
      %v5578 = vunpack.c.l.bf16 %v5514
      %v5579 = vunpack.c.l.bf16 %v5515
      %v5580 = vunpack.c.l.bf16 %v5516
      %v5581 = vunpack.c.l.bf16 %v5517
      %v5582 = vunpack.c.l.bf16 %v5518
      %v5583 = vunpack.c.l.bf16 %v5519
      %v5584 = vunpack.c.l.bf16 %v5520
      %v5585 = vunpack.c.l.bf16 %v5521
      %v5586 = vunpack.c.l.bf16 %v5522
      %v5587 = vunpack.c.l.bf16 %v5523
      %v5588 = vunpack.c.l.bf16 %v5524
      %v5589 = vunpack.c.l.bf16 %v5525
      %v5590 = vunpack.c.l.bf16 %v5526
      %v5591 = vunpack.c.l.bf16 %v5527
      %v5592 = vunpack.c.l.bf16 %v5528
      %v5593 = vunpack.c.l.bf16 %v5529
      %v5594 = vunpack.c.l.bf16 %v5530
      %v5595 = vunpack.c.l.bf16 %v5531
      %v5596 = vunpack.c.l.bf16 %v5532
      %v5597 = vunpack.c.l.bf16 %v5533
      %v5598 = vunpack.c.l.bf16 %v5534
      %v5599 = vunpack.c.l.bf16 %v5535
      %v5600 = vunpack.c.l.bf16 %v5536
      %v5601 = vunpack.c.l.bf16 %v5537
      %v5602 = vunpack.c.l.bf16 %v5538
      %v5603 = vunpack.c.l.bf16 %v5539
      %v5604 = vunpack.c.l.bf16 %v5540
      %v5605 = vunpack.c.l.bf16 %v5541
      %v5606 = vmax.f32 %v5574, 0.0
      %v5607 = vmax.f32 %v5575, 0.0
      %v5608 = vmax.f32 %v5576, 0.0
      %v5609 = vmax.f32 %v5577, 0.0
      %v5610 = vmax.f32 %v5578, 0.0
      %v5611 = vmax.f32 %v5579, 0.0
      %v5612 = vmax.f32 %v5580, 0.0
      %v5613 = vmax.f32 %v5581, 0.0
      %v5614 = vmax.f32 %v5582, 0.0
      %v5615 = vmax.f32 %v5583, 0.0
      %v5616 = vmax.f32 %v5584, 0.0
      %v5617 = vmax.f32 %v5585, 0.0
      %v5618 = vmax.f32 %v5586, 0.0
      %v5619 = vmax.f32 %v5587, 0.0
      %v5620 = vmax.f32 %v5588, 0.0
      %v5621 = vmax.f32 %v5589, 0.0
      %v5622 = vmax.f32 %v5590, 0.0
      %v5623 = vmax.f32 %v5591, 0.0
      %v5624 = vmax.f32 %v5592, 0.0
      %v5625 = vmax.f32 %v5593, 0.0
      %v5626 = vmax.f32 %v5594, 0.0
      %v5627 = vmax.f32 %v5595, 0.0
      %v5628 = vmax.f32 %v5596, 0.0
      %v5629 = vmax.f32 %v5597, 0.0
      %v5630 = vmax.f32 %v5598, 0.0
      %v5631 = vmax.f32 %v5599, 0.0
      %v5632 = vmax.f32 %v5600, 0.0
      %v5633 = vmax.f32 %v5601, 0.0
      %v5634 = vmax.f32 %v5602, 0.0
      %v5635 = vmax.f32 %v5603, 0.0
      %v5636 = vmax.f32 %v5604, 0.0
      %v5637 = vmax.f32 %v5605, 0.0
      %v5638 = vpack.c.bf16 %v5606, %v5606
      %v5639 = vpack.c.bf16 %v5607, %v5607
      %v5640 = vpack.c.bf16 %v5608, %v5608
      %v5641 = vpack.c.bf16 %v5609, %v5609
      %v5642 = vpack.c.bf16 %v5610, %v5610
      %v5643 = vpack.c.bf16 %v5611, %v5611
      %v5644 = vpack.c.bf16 %v5612, %v5612
      %v5645 = vpack.c.bf16 %v5613, %v5613
      %v5646 = vpack.c.bf16 %v5614, %v5614
      %v5647 = vpack.c.bf16 %v5615, %v5615
      %v5648 = vpack.c.bf16 %v5616, %v5616
      %v5649 = vpack.c.bf16 %v5617, %v5617
      %v5650 = vpack.c.bf16 %v5618, %v5618
      %v5651 = vpack.c.bf16 %v5619, %v5619
      %v5652 = vpack.c.bf16 %v5620, %v5620
      %v5653 = vpack.c.bf16 %v5621, %v5621
      %v5654 = vpack.c.bf16 %v5622, %v5622
      %v5655 = vpack.c.bf16 %v5623, %v5623
      %v5656 = vpack.c.bf16 %v5624, %v5624
      %v5657 = vpack.c.bf16 %v5625, %v5625
      %v5658 = vpack.c.bf16 %v5626, %v5626
      %v5659 = vpack.c.bf16 %v5627, %v5627
      %v5660 = vpack.c.bf16 %v5628, %v5628
      %v5661 = vpack.c.bf16 %v5629, %v5629
      %v5662 = vpack.c.bf16 %v5630, %v5630
      %v5663 = vpack.c.bf16 %v5631, %v5631
      %v5664 = vpack.c.bf16 %v5632, %v5632
      %v5665 = vpack.c.bf16 %v5633, %v5633
      %v5666 = vpack.c.bf16 %v5634, %v5634
      %v5667 = vpack.c.bf16 %v5635, %v5635
      %v5668 = vpack.c.bf16 %v5636, %v5636
      %v5669 = vpack.c.bf16 %v5637, %v5637
      %v5670 = vxor.u32 %v5475, 2147516416
      %v5671 = vxor.u32 %v5476, 2147516416
      %v5672 = vxor.u32 %v5477, 2147516416
      %v5673 = vxor.u32 %v5478, 2147516416
      %v5674 = vxor.u32 %v5479, 2147516416
      %v5675 = vxor.u32 %v5480, 2147516416
      %v5676 = vxor.u32 %v5481, 2147516416
      %v5677 = vxor.u32 %v5482, 2147516416
      %v5678 = vxor.u32 %v5483, 2147516416
      %v5679 = vxor.u32 %v5484, 2147516416
      %v5680 = vxor.u32 %v5485, 2147516416
      %v5681 = vxor.u32 %v5486, 2147516416
      %v5682 = vxor.u32 %v5487, 2147516416
      %v5683 = vxor.u32 %v5488, 2147516416
      %v5684 = vxor.u32 %v5489, 2147516416
      %v5685 = vxor.u32 %v5490, 2147516416
      %v5686 = vxor.u32 %v5491, 2147516416
      %v5687 = vxor.u32 %v5492, 2147516416
      %v5688 = vxor.u32 %v5493, 2147516416
      %v5689 = vxor.u32 %v5494, 2147516416
      %v5690 = vxor.u32 %v5495, 2147516416
      %v5691 = vxor.u32 %v5496, 2147516416
      %v5692 = vxor.u32 %v5497, 2147516416
      %v5693 = vxor.u32 %v5498, 2147516416
      %v5694 = vxor.u32 %v5499, 2147516416
      %v5695 = vxor.u32 %v5500, 2147516416
      %v5696 = vxor.u32 %v5501, 2147516416
      %v5697 = vxor.u32 %v5502, 2147516416
      %v5698 = vxor.u32 %v5503, 2147516416
      %v5699 = vxor.u32 %v5504, 2147516416
      %v5700 = vxor.u32 %v5505, 2147516416
      %v5701 = vxor.u32 %v5506, 2147516416
      %v5702 = vunpack.c.l.bf16 %v5670
      %v5703 = vunpack.c.l.bf16 %v5671
      %v5704 = vunpack.c.l.bf16 %v5672
      %v5705 = vunpack.c.l.bf16 %v5673
      %v5706 = vunpack.c.l.bf16 %v5674
      %v5707 = vunpack.c.l.bf16 %v5675
      %v5708 = vunpack.c.l.bf16 %v5676
      %v5709 = vunpack.c.l.bf16 %v5677
      %v5710 = vunpack.c.l.bf16 %v5678
      %v5711 = vunpack.c.l.bf16 %v5679
      %v5712 = vunpack.c.l.bf16 %v5680
      %v5713 = vunpack.c.l.bf16 %v5681
      %v5714 = vunpack.c.l.bf16 %v5682
      %v5715 = vunpack.c.l.bf16 %v5683
      %v5716 = vunpack.c.l.bf16 %v5684
      %v5717 = vunpack.c.l.bf16 %v5685
      %v5718 = vunpack.c.l.bf16 %v5686
      %v5719 = vunpack.c.l.bf16 %v5687
      %v5720 = vunpack.c.l.bf16 %v5688
      %v5721 = vunpack.c.l.bf16 %v5689
      %v5722 = vunpack.c.l.bf16 %v5690
      %v5723 = vunpack.c.l.bf16 %v5691
      %v5724 = vunpack.c.l.bf16 %v5692
      %v5725 = vunpack.c.l.bf16 %v5693
      %v5726 = vunpack.c.l.bf16 %v5694
      %v5727 = vunpack.c.l.bf16 %v5695
      %v5728 = vunpack.c.l.bf16 %v5696
      %v5729 = vunpack.c.l.bf16 %v5697
      %v5730 = vunpack.c.l.bf16 %v5698
      %v5731 = vunpack.c.l.bf16 %v5699
      %v5732 = vunpack.c.l.bf16 %v5700
      %v5733 = vunpack.c.l.bf16 %v5701
      %v5734 = vmul.f32 %v5702, 1.442695
      %v5735 = vpow.pop %v5734
      %v5736 = vmul.f32 %v5703, 1.442695
      %v5737 = vpow.pop %v5736
      %v5738 = vmul.f32 %v5704, 1.442695
      %v5739 = vpow.pop %v5738
      %v5740 = vmul.f32 %v5705, 1.442695
      %v5741 = vpow.pop %v5740
      %v5742 = vmul.f32 %v5706, 1.442695
      %v5743 = vpow.pop %v5742
      %v5744 = vmul.f32 %v5707, 1.442695
      %v5745 = vpow.pop %v5744
      %v5746 = vmul.f32 %v5708, 1.442695
      %v5747 = vpow.pop %v5746
      %v5748 = vmul.f32 %v5709, 1.442695
      %v5749 = vpow.pop %v5748
      %v5750 = vmul.f32 %v5710, 1.442695
      %v5751 = vpow.pop %v5750
      %v5752 = vmul.f32 %v5711, 1.442695
      %v5753 = vpow.pop %v5752
      %v5754 = vmul.f32 %v5712, 1.442695
      %v5755 = vpow.pop %v5754
      %v5756 = vmul.f32 %v5713, 1.442695
      %v5757 = vpow.pop %v5756
      %v5758 = vmul.f32 %v5714, 1.442695
      %v5759 = vpow.pop %v5758
      %v5760 = vmul.f32 %v5715, 1.442695
      %v5761 = vpow.pop %v5760
      %v5762 = vmul.f32 %v5716, 1.442695
      %v5763 = vpow.pop %v5762
      %v5764 = vmul.f32 %v5717, 1.442695
      %v5765 = vpow.pop %v5764
      %v5766 = vmul.f32 %v5718, 1.442695
      %v5767 = vpow.pop %v5766
      %v5768 = vmul.f32 %v5719, 1.442695
      %v5769 = vpow.pop %v5768
      %v5770 = vmul.f32 %v5720, 1.442695
      %v5771 = vpow.pop %v5770
      %v5772 = vmul.f32 %v5721, 1.442695
      %v5773 = vpow.pop %v5772
      %v5774 = vmul.f32 %v5722, 1.442695
      %v5775 = vpow.pop %v5774
      %v5776 = vmul.f32 %v5723, 1.442695
      %v5777 = vpow.pop %v5776
      %v5778 = vmul.f32 %v5724, 1.442695
      %v5779 = vpow.pop %v5778
      %v5780 = vmul.f32 %v5725, 1.442695
      %v5781 = vpow.pop %v5780
      %v5782 = vmul.f32 %v5726, 1.442695
      %v5783 = vpow.pop %v5782
      %v5784 = vmul.f32 %v5727, 1.442695
      %v5785 = vpow.pop %v5784
      %v5786 = vmul.f32 %v5728, 1.442695
      %v5787 = vpow.pop %v5786
      %v5788 = vmul.f32 %v5729, 1.442695
      %v5789 = vpow.pop %v5788
      %v5790 = vmul.f32 %v5730, 1.442695
      %v5791 = vpow.pop %v5790
      %v5792 = vmul.f32 %v5731, 1.442695
      %v5793 = vpow.pop %v5792
      %v5794 = vmul.f32 %v5732, 1.442695
      %v5795 = vpow.pop %v5794
      %v5796 = vmul.f32 %v5733, 1.442695
      %v5797 = vpow.pop %v5796
      %v5798 = vpack.c.bf16 %v5735, %v5735
      %v5799 = vpack.c.bf16 %v5737, %v5737
      %v5800 = vpack.c.bf16 %v5739, %v5739
      %v5801 = vpack.c.bf16 %v5741, %v5741
      %v5802 = vpack.c.bf16 %v5743, %v5743
      %v5803 = vpack.c.bf16 %v5745, %v5745
      %v5804 = vpack.c.bf16 %v5747, %v5747
      %v5805 = vpack.c.bf16 %v5749, %v5749
      %v5806 = vpack.c.bf16 %v5751, %v5751
      %v5807 = vpack.c.bf16 %v5753, %v5753
      %v5808 = vpack.c.bf16 %v5755, %v5755
      %v5809 = vpack.c.bf16 %v5757, %v5757
      %v5810 = vpack.c.bf16 %v5759, %v5759
      %v5811 = vpack.c.bf16 %v5761, %v5761
      %v5812 = vpack.c.bf16 %v5763, %v5763
      %v5813 = vpack.c.bf16 %v5765, %v5765
      %v5814 = vpack.c.bf16 %v5767, %v5767
      %v5815 = vpack.c.bf16 %v5769, %v5769
      %v5816 = vpack.c.bf16 %v5771, %v5771
      %v5817 = vpack.c.bf16 %v5773, %v5773
      %v5818 = vpack.c.bf16 %v5775, %v5775
      %v5819 = vpack.c.bf16 %v5777, %v5777
      %v5820 = vpack.c.bf16 %v5779, %v5779
      %v5821 = vpack.c.bf16 %v5781, %v5781
      %v5822 = vpack.c.bf16 %v5783, %v5783
      %v5823 = vpack.c.bf16 %v5785, %v5785
      %v5824 = vpack.c.bf16 %v5787, %v5787
      %v5825 = vpack.c.bf16 %v5789, %v5789
      %v5826 = vpack.c.bf16 %v5791, %v5791
      %v5827 = vpack.c.bf16 %v5793, %v5793
      %v5828 = vpack.c.bf16 %v5795, %v5795
      %v5829 = vpack.c.bf16 %v5797, %v5797
      %v5830 = vunpack.c.l.bf16 %v5798
      %v5831 = vunpack.c.l.bf16 %v5799
      %v5832 = vunpack.c.l.bf16 %v5800
      %v5833 = vunpack.c.l.bf16 %v5801
      %v5834 = vunpack.c.l.bf16 %v5802
      %v5835 = vunpack.c.l.bf16 %v5803
      %v5836 = vunpack.c.l.bf16 %v5804
      %v5837 = vunpack.c.l.bf16 %v5805
      %v5838 = vunpack.c.l.bf16 %v5806
      %v5839 = vunpack.c.l.bf16 %v5807
      %v5840 = vunpack.c.l.bf16 %v5808
      %v5841 = vunpack.c.l.bf16 %v5809
      %v5842 = vunpack.c.l.bf16 %v5810
      %v5843 = vunpack.c.l.bf16 %v5811
      %v5844 = vunpack.c.l.bf16 %v5812
      %v5845 = vunpack.c.l.bf16 %v5813
      %v5846 = vunpack.c.l.bf16 %v5814
      %v5847 = vunpack.c.l.bf16 %v5815
      %v5848 = vunpack.c.l.bf16 %v5816
      %v5849 = vunpack.c.l.bf16 %v5817
      %v5850 = vunpack.c.l.bf16 %v5818
      %v5851 = vunpack.c.l.bf16 %v5819
      %v5852 = vunpack.c.l.bf16 %v5820
      %v5853 = vunpack.c.l.bf16 %v5821
      %v5854 = vunpack.c.l.bf16 %v5822
      %v5855 = vunpack.c.l.bf16 %v5823
      %v5856 = vunpack.c.l.bf16 %v5824
      %v5857 = vunpack.c.l.bf16 %v5825
      %v5858 = vunpack.c.l.bf16 %v5826
      %v5859 = vunpack.c.l.bf16 %v5827
      %v5860 = vunpack.c.l.bf16 %v5828
      %v5861 = vunpack.c.l.bf16 %v5829
      %v5862 = vadd.f32 %v5830, 1.0
      %v5863 = vadd.f32 %v5831, 1.0
      %v5864 = vadd.f32 %v5832, 1.0
      %v5865 = vadd.f32 %v5833, 1.0
      %v5866 = vadd.f32 %v5834, 1.0
      %v5867 = vadd.f32 %v5835, 1.0
      %v5868 = vadd.f32 %v5836, 1.0
      %v5869 = vadd.f32 %v5837, 1.0
      %v5870 = vadd.f32 %v5838, 1.0
      %v5871 = vadd.f32 %v5839, 1.0
      %v5872 = vadd.f32 %v5840, 1.0
      %v5873 = vadd.f32 %v5841, 1.0
      %v5874 = vadd.f32 %v5842, 1.0
      %v5875 = vadd.f32 %v5843, 1.0
      %v5876 = vadd.f32 %v5844, 1.0
      %v5877 = vadd.f32 %v5845, 1.0
      %v5878 = vadd.f32 %v5846, 1.0
      %v5879 = vadd.f32 %v5847, 1.0
      %v5880 = vadd.f32 %v5848, 1.0
      %v5881 = vadd.f32 %v5849, 1.0
      %v5882 = vadd.f32 %v5850, 1.0
      %v5883 = vadd.f32 %v5851, 1.0
      %v5884 = vadd.f32 %v5852, 1.0
      %v5885 = vadd.f32 %v5853, 1.0
      %v5886 = vadd.f32 %v5854, 1.0
      %v5887 = vadd.f32 %v5855, 1.0
      %v5888 = vadd.f32 %v5856, 1.0
      %v5889 = vadd.f32 %v5857, 1.0
      %v5890 = vadd.f32 %v5858, 1.0
      %v5891 = vadd.f32 %v5859, 1.0
      %v5892 = vadd.f32 %v5860, 1.0
      %v5893 = vadd.f32 %v5861, 1.0
      %v5894 = vpack.c.bf16 %v5862, %v5862
      %v5895 = vpack.c.bf16 %v5863, %v5863
      %v5896 = vpack.c.bf16 %v5864, %v5864
      %v5897 = vpack.c.bf16 %v5865, %v5865
      %v5898 = vpack.c.bf16 %v5866, %v5866
      %v5899 = vpack.c.bf16 %v5867, %v5867
      %v5900 = vpack.c.bf16 %v5868, %v5868
      %v5901 = vpack.c.bf16 %v5869, %v5869
      %v5902 = vpack.c.bf16 %v5870, %v5870
      %v5903 = vpack.c.bf16 %v5871, %v5871
      %v5904 = vpack.c.bf16 %v5872, %v5872
      %v5905 = vpack.c.bf16 %v5873, %v5873
      %v5906 = vpack.c.bf16 %v5874, %v5874
      %v5907 = vpack.c.bf16 %v5875, %v5875
      %v5908 = vpack.c.bf16 %v5876, %v5876
      %v5909 = vpack.c.bf16 %v5877, %v5877
      %v5910 = vpack.c.bf16 %v5878, %v5878
      %v5911 = vpack.c.bf16 %v5879, %v5879
      %v5912 = vpack.c.bf16 %v5880, %v5880
      %v5913 = vpack.c.bf16 %v5881, %v5881
      %v5914 = vpack.c.bf16 %v5882, %v5882
      %v5915 = vpack.c.bf16 %v5883, %v5883
      %v5916 = vpack.c.bf16 %v5884, %v5884
      %v5917 = vpack.c.bf16 %v5885, %v5885
      %v5918 = vpack.c.bf16 %v5886, %v5886
      %v5919 = vpack.c.bf16 %v5887, %v5887
      %v5920 = vpack.c.bf16 %v5888, %v5888
      %v5921 = vpack.c.bf16 %v5889, %v5889
      %v5922 = vpack.c.bf16 %v5890, %v5890
      %v5923 = vpack.c.bf16 %v5891, %v5891
      %v5924 = vpack.c.bf16 %v5892, %v5892
      %v5925 = vpack.c.bf16 %v5893, %v5893
      %v5926 = vunpack.c.h.bf16 1065369472
      %v5927 = vunpack.c.l.bf16 1065369472
      %v5928 = vunpack.c.h.bf16 %v5894
      %v5929 = vunpack.c.l.bf16 %v5894
      %v5930 = vrcp.pop %v5928
      %v5931 = vmul.f32 %v5926, %v5930
      %v5932 = vrcp.pop %v5929
      %v5933 = vmul.f32 %v5927, %v5932
      %v5934 = vpack.c.bf16 %v5931, %v5933
      %v5935 = vunpack.c.h.bf16 %v5895
      %v5936 = vunpack.c.l.bf16 %v5895
      %v5937 = vrcp.pop %v5935
      %v5938 = vmul.f32 %v5926, %v5937
      %v5939 = vrcp.pop %v5936
      %v5940 = vmul.f32 %v5927, %v5939
      %v5941 = vpack.c.bf16 %v5938, %v5940
      %v5942 = vunpack.c.h.bf16 %v5896
      %v5943 = vunpack.c.l.bf16 %v5896
      %v5944 = vrcp.pop %v5942
      %v5945 = vmul.f32 %v5926, %v5944
      %v5946 = vrcp.pop %v5943
      %v5947 = vmul.f32 %v5927, %v5946
      %v5948 = vpack.c.bf16 %v5945, %v5947
      %v5949 = vunpack.c.h.bf16 %v5897
      %v5950 = vunpack.c.l.bf16 %v5897
      %v5951 = vrcp.pop %v5949
      %v5952 = vmul.f32 %v5926, %v5951
      %v5953 = vrcp.pop %v5950
      %v5954 = vmul.f32 %v5927, %v5953
      %v5955 = vpack.c.bf16 %v5952, %v5954
      %v5956 = vunpack.c.h.bf16 %v5898
      %v5957 = vunpack.c.l.bf16 %v5898
      %v5958 = vrcp.pop %v5956
      %v5959 = vmul.f32 %v5926, %v5958
      %v5960 = vrcp.pop %v5957
      %v5961 = vmul.f32 %v5927, %v5960
      %v5962 = vpack.c.bf16 %v5959, %v5961
      %v5963 = vunpack.c.h.bf16 %v5899
      %v5964 = vunpack.c.l.bf16 %v5899
      %v5965 = vrcp.pop %v5963
      %v5966 = vmul.f32 %v5926, %v5965
      %v5967 = vrcp.pop %v5964
      %v5968 = vmul.f32 %v5927, %v5967
      %v5969 = vpack.c.bf16 %v5966, %v5968
      %v5970 = vunpack.c.h.bf16 %v5900
      %v5971 = vunpack.c.l.bf16 %v5900
      %v5972 = vrcp.pop %v5970
      %v5973 = vmul.f32 %v5926, %v5972
      %v5974 = vrcp.pop %v5971
      %v5975 = vmul.f32 %v5927, %v5974
      %v5976 = vpack.c.bf16 %v5973, %v5975
      %v5977 = vunpack.c.h.bf16 %v5901
      %v5978 = vunpack.c.l.bf16 %v5901
      %v5979 = vrcp.pop %v5977
      %v5980 = vmul.f32 %v5926, %v5979
      %v5981 = vrcp.pop %v5978
      %v5982 = vmul.f32 %v5927, %v5981
      %v5983 = vpack.c.bf16 %v5980, %v5982
      %v5984 = vunpack.c.h.bf16 %v5902
      %v5985 = vunpack.c.l.bf16 %v5902
      %v5986 = vrcp.pop %v5984
      %v5987 = vmul.f32 %v5926, %v5986
      %v5988 = vrcp.pop %v5985
      %v5989 = vmul.f32 %v5927, %v5988
      %v5990 = vpack.c.bf16 %v5987, %v5989
      %v5991 = vunpack.c.h.bf16 %v5903
      %v5992 = vunpack.c.l.bf16 %v5903
      %v5993 = vrcp.pop %v5991
      %v5994 = vmul.f32 %v5926, %v5993
      %v5995 = vrcp.pop %v5992
      %v5996 = vmul.f32 %v5927, %v5995
      %v5997 = vpack.c.bf16 %v5994, %v5996
      %v5998 = vunpack.c.h.bf16 %v5904
      %v5999 = vunpack.c.l.bf16 %v5904
      %v6000 = vrcp.pop %v5998
      %v6001 = vmul.f32 %v5926, %v6000
      %v6002 = vrcp.pop %v5999
      %v6003 = vmul.f32 %v5927, %v6002
      %v6004 = vpack.c.bf16 %v6001, %v6003
      %v6005 = vunpack.c.h.bf16 %v5905
      %v6006 = vunpack.c.l.bf16 %v5905
      %v6007 = vrcp.pop %v6005
      %v6008 = vmul.f32 %v5926, %v6007
      %v6009 = vrcp.pop %v6006
      %v6010 = vmul.f32 %v5927, %v6009
      %v6011 = vpack.c.bf16 %v6008, %v6010
      %v6012 = vunpack.c.h.bf16 %v5906
      %v6013 = vunpack.c.l.bf16 %v5906
      %v6014 = vrcp.pop %v6012
      %v6015 = vmul.f32 %v5926, %v6014
      %v6016 = vrcp.pop %v6013
      %v6017 = vmul.f32 %v5927, %v6016
      %v6018 = vpack.c.bf16 %v6015, %v6017
      %v6019 = vunpack.c.h.bf16 %v5907
      %v6020 = vunpack.c.l.bf16 %v5907
      %v6021 = vrcp.pop %v6019
      %v6022 = vmul.f32 %v5926, %v6021
      %v6023 = vrcp.pop %v6020
      %v6024 = vmul.f32 %v5927, %v6023
      %v6025 = vpack.c.bf16 %v6022, %v6024
      %v6026 = vunpack.c.h.bf16 %v5908
      %v6027 = vunpack.c.l.bf16 %v5908
      %v6028 = vrcp.pop %v6026
      %v6029 = vmul.f32 %v5926, %v6028
      %v6030 = vrcp.pop %v6027
      %v6031 = vmul.f32 %v5927, %v6030
      %v6032 = vpack.c.bf16 %v6029, %v6031
      %v6033 = vunpack.c.h.bf16 %v5909
      %v6034 = vunpack.c.l.bf16 %v5909
      %v6035 = vrcp.pop %v6033
      %v6036 = vmul.f32 %v5926, %v6035
      %v6037 = vrcp.pop %v6034
      %v6038 = vmul.f32 %v5927, %v6037
      %v6039 = vpack.c.bf16 %v6036, %v6038
      %v6040 = vunpack.c.h.bf16 %v5910
      %v6041 = vunpack.c.l.bf16 %v5910
      %v6042 = vrcp.pop %v6040
      %v6043 = vmul.f32 %v5926, %v6042
      %v6044 = vrcp.pop %v6041
      %v6045 = vmul.f32 %v5927, %v6044
      %v6046 = vpack.c.bf16 %v6043, %v6045
      %v6047 = vunpack.c.h.bf16 %v5911
      %v6048 = vunpack.c.l.bf16 %v5911
      %v6049 = vrcp.pop %v6047
      %v6050 = vmul.f32 %v5926, %v6049
      %v6051 = vrcp.pop %v6048
      %v6052 = vmul.f32 %v5927, %v6051
      %v6053 = vpack.c.bf16 %v6050, %v6052
      %v6054 = vunpack.c.h.bf16 %v5912
      %v6055 = vunpack.c.l.bf16 %v5912
      %v6056 = vrcp.pop %v6054
      %v6057 = vmul.f32 %v5926, %v6056
      %v6058 = vrcp.pop %v6055
      %v6059 = vmul.f32 %v5927, %v6058
      %v6060 = vpack.c.bf16 %v6057, %v6059
      %v6061 = vunpack.c.h.bf16 %v5913
      %v6062 = vunpack.c.l.bf16 %v5913
      %v6063 = vrcp.pop %v6061
      %v6064 = vmul.f32 %v5926, %v6063
      %v6065 = vrcp.pop %v6062
      %v6066 = vmul.f32 %v5927, %v6065
      %v6067 = vpack.c.bf16 %v6064, %v6066
      %v6068 = vunpack.c.h.bf16 %v5914
      %v6069 = vunpack.c.l.bf16 %v5914
      %v6070 = vrcp.pop %v6068
      %v6071 = vmul.f32 %v5926, %v6070
      %v6072 = vrcp.pop %v6069
      %v6073 = vmul.f32 %v5927, %v6072
      %v6074 = vpack.c.bf16 %v6071, %v6073
      %v6075 = vunpack.c.h.bf16 %v5915
      %v6076 = vunpack.c.l.bf16 %v5915
      %v6077 = vrcp.pop %v6075
      %v6078 = vmul.f32 %v5926, %v6077
      %v6079 = vrcp.pop %v6076
      %v6080 = vmul.f32 %v5927, %v6079
      %v6081 = vpack.c.bf16 %v6078, %v6080
      %v6082 = vunpack.c.h.bf16 %v5916
      %v6083 = vunpack.c.l.bf16 %v5916
      %v6084 = vrcp.pop %v6082
      %v6085 = vmul.f32 %v5926, %v6084
      %v6086 = vrcp.pop %v6083
      %v6087 = vmul.f32 %v5927, %v6086
      %v6088 = vpack.c.bf16 %v6085, %v6087
      %v6089 = vunpack.c.h.bf16 %v5917
      %v6090 = vunpack.c.l.bf16 %v5917
      %v6091 = vrcp.pop %v6089
      %v6092 = vmul.f32 %v5926, %v6091
      %v6093 = vrcp.pop %v6090
      %v6094 = vmul.f32 %v5927, %v6093
      %v6095 = vpack.c.bf16 %v6092, %v6094
      %v6096 = vunpack.c.h.bf16 %v5918
      %v6097 = vunpack.c.l.bf16 %v5918
      %v6098 = vrcp.pop %v6096
      %v6099 = vmul.f32 %v5926, %v6098
      %v6100 = vrcp.pop %v6097
      %v6101 = vmul.f32 %v5927, %v6100
      %v6102 = vpack.c.bf16 %v6099, %v6101
      %v6103 = vunpack.c.h.bf16 %v5919
      %v6104 = vunpack.c.l.bf16 %v5919
      %v6105 = vrcp.pop %v6103
      %v6106 = vmul.f32 %v5926, %v6105
      %v6107 = vrcp.pop %v6104
      %v6108 = vmul.f32 %v5927, %v6107
      %v6109 = vpack.c.bf16 %v6106, %v6108
      %v6110 = vunpack.c.h.bf16 %v5920
      %v6111 = vunpack.c.l.bf16 %v5920
      %v6112 = vrcp.pop %v6110
      %v6113 = vmul.f32 %v5926, %v6112
      %v6114 = vrcp.pop %v6111
      %v6115 = vmul.f32 %v5927, %v6114
      %v6116 = vpack.c.bf16 %v6113, %v6115
      %v6117 = vunpack.c.h.bf16 %v5921
      %v6118 = vunpack.c.l.bf16 %v5921
      %v6119 = vrcp.pop %v6117
      %v6120 = vmul.f32 %v5926, %v6119
      %v6121 = vrcp.pop %v6118
      %v6122 = vmul.f32 %v5927, %v6121
      %v6123 = vpack.c.bf16 %v6120, %v6122
      %v6124 = vunpack.c.h.bf16 %v5922
      %v6125 = vunpack.c.l.bf16 %v5922
      %v6126 = vrcp.pop %v6124
      %v6127 = vmul.f32 %v5926, %v6126
      %v6128 = vrcp.pop %v6125
      %v6129 = vmul.f32 %v5927, %v6128
      %v6130 = vpack.c.bf16 %v6127, %v6129
      %v6131 = vunpack.c.h.bf16 %v5923
      %v6132 = vunpack.c.l.bf16 %v5923
      %v6133 = vrcp.pop %v6131
      %v6134 = vmul.f32 %v5926, %v6133
      %v6135 = vrcp.pop %v6132
      %v6136 = vmul.f32 %v5927, %v6135
      %v6137 = vpack.c.bf16 %v6134, %v6136
      %v6138 = vunpack.c.h.bf16 %v5924
      %v6139 = vunpack.c.l.bf16 %v5924
      %v6140 = vrcp.pop %v6138
      %v6141 = vmul.f32 %v5926, %v6140
      %v6142 = vrcp.pop %v6139
      %v6143 = vmul.f32 %v5927, %v6142
      %v6144 = vpack.c.bf16 %v6141, %v6143
      %v6145 = vunpack.c.h.bf16 %v5925
      %v6146 = vunpack.c.l.bf16 %v5925
      %v6147 = vrcp.pop %v6145
      %v6148 = vmul.f32 %v5926, %v6147
      %v6149 = vrcp.pop %v6146
      %v6150 = vmul.f32 %v5927, %v6149
      %v6151 = vpack.c.bf16 %v6148, %v6150
      %vm6152 = vmpackc.low %vm5509, %vm5509
      %v6153 = vsel %vm6152, %v5638, %v5934
      %v6154 = vsel %vm6152, %v5639, %v5941
      %v6155 = vsel %vm6152, %v5640, %v5948
      %v6156 = vsel %vm6152, %v5641, %v5955
      %v6157 = vsel %vm6152, %v5642, %v5962
      %v6158 = vsel %vm6152, %v5643, %v5969
      %v6159 = vsel %vm6152, %v5644, %v5976
      %v6160 = vsel %vm6152, %v5645, %v5983
      %v6161 = vsel %vm6152, %v5646, %v5990
      %v6162 = vsel %vm6152, %v5647, %v5997
      %v6163 = vsel %vm6152, %v5648, %v6004
      %v6164 = vsel %vm6152, %v5649, %v6011
      %v6165 = vsel %vm6152, %v5650, %v6018
      %v6166 = vsel %vm6152, %v5651, %v6025
      %v6167 = vsel %vm6152, %v5652, %v6032
      %v6168 = vsel %vm6152, %v5653, %v6039
      %v6169 = vsel %vm6152, %v5654, %v6046
      %v6170 = vsel %vm6152, %v5655, %v6053
      %v6171 = vsel %vm6152, %v5656, %v6060
      %v6172 = vsel %vm6152, %v5657, %v6067
      %v6173 = vsel %vm6152, %v5658, %v6074
      %v6174 = vsel %vm6152, %v5659, %v6081
      %v6175 = vsel %vm6152, %v5660, %v6088
      %v6176 = vsel %vm6152, %v5661, %v6095
      %v6177 = vsel %vm6152, %v5662, %v6102
      %v6178 = vsel %vm6152, %v5663, %v6109
      %v6179 = vsel %vm6152, %v5664, %v6116
      %v6180 = vsel %vm6152, %v5665, %v6123
      %v6181 = vsel %vm6152, %v5666, %v6130
      %v6182 = vsel %vm6152, %v5667, %v6137
      %v6183 = vsel %vm6152, %v5668, %v6144
      %v6184 = vsel %vm6152, %v5669, %v6151
      %6185 = vst [vmem:[%s334] sm:$0xf] %v6153
      %6186 = vst [vmem:[%s334 + $0x4] sm:$0xf] %v6154
      %6187 = vst [vmem:[%s334 + $0x8] sm:$0xf] %v6155
      %6188 = vst [vmem:[%s334 + $0xc] sm:$0xf] %v6156
      %6189 = vst [vmem:[%s334 + $0x10] sm:$0xf] %v6157
      %6190 = vst [vmem:[%s334 + $0x14] sm:$0xf] %v6158
      %6191 = vst [vmem:[%s334 + $0x18] sm:$0xf] %v6159
      %6192 = vst [vmem:[%s334 + $0x1c] sm:$0xf] %v6160
      %6193 = vst [vmem:[%s334 + $0x20] sm:$0xf] %v6161
      %6194 = vst [vmem:[%s334 + $0x24] sm:$0xf] %v6162
      %6195 = vst [vmem:[%s334 + $0x28] sm:$0xf] %v6163
      %6196 = vst [vmem:[%s334 + $0x2c] sm:$0xf] %v6164
      %6197 = vst [vmem:[%s334 + $0x30] sm:$0xf] %v6165
      %6198 = vst [vmem:[%s334 + $0x34] sm:$0xf] %v6166
      %6199 = vst [vmem:[%s334 + $0x38] sm:$0xf] %v6167
      %6200 = vst [vmem:[%s334 + $0x3c] sm:$0xf] %v6168
      %6201 = vst [vmem:[%s334 + $0x40] sm:$0xf] %v6169
      %6202 = vst [vmem:[%s334 + $0x44] sm:$0xf] %v6170
      %6203 = vst [vmem:[%s334 + $0x48] sm:$0xf] %v6171
      %6204 = vst [vmem:[%s334 + $0x4c] sm:$0xf] %v6172
      %6205 = vst [vmem:[%s334 + $0x50] sm:$0xf] %v6173
      %6206 = vst [vmem:[%s334 + $0x54] sm:$0xf] %v6174
      %6207 = vst [vmem:[%s334 + $0x58] sm:$0xf] %v6175
      %6208 = vst [vmem:[%s334 + $0x5c] sm:$0xf] %v6176
      %6209 = vst [vmem:[%s334 + $0x60] sm:$0xf] %v6177
      %6210 = vst [vmem:[%s334 + $0x64] sm:$0xf] %v6178
      %6211 = vst [vmem:[%s334 + $0x68] sm:$0xf] %v6179
      %6212 = vst [vmem:[%s334 + $0x6c] sm:$0xf] %v6180
      %6213 = vst [vmem:[%s334 + $0x70] sm:$0xf] %v6181
      %6214 = vst [vmem:[%s334 + $0x74] sm:$0xf] %v6182
      %6215 = vst [vmem:[%s334 + $0x78] sm:$0xf] %v6183
      %6216 = vst [vmem:[%s334 + $0x7c] sm:$0xf] %v6184
      %s6217 = smul.u32 32, %s20
      %p6218 = scmp.lt.s32.totalorder %s6217, 255
      %s6219 = scalar_select %p6218, %s6217, 255
      %s6220 = smul.addr %s6219, 4
      %s6221 = scalar_lea.vmem %s9, %s6220
      // Predicated region
      $region57: #{nerf_forward.1} parent=55 // pred_check
        %p6222 = pneg %p232
      $region58: #{nerf_forward.1} parent=55 // pred_check_branch
        %6224 = sbr.rel (%p6222) target = $region60
      $region59: #{nerf_forward.1} parent=55 // pred_region
        %s6225 = smul.u32 32, %s20
      $region60: #{nerf_forward.1} parent=55 // pred_fallthru
        _
    $region56: #{nerf_forward.1} parent=5 // pred_fallthru
      _
    %p6226 = scmp.le.s32.totalorder 2, %s15
    // Predicated region
    $region61: #{nerf_forward.1} parent=5 // pred_check
      %p6227 = pneg %p6226
    $region62: #{nerf_forward.1} parent=5 // pred_check_branch
      %6229 = sbr.rel (%p6227) target = $region64
    $region63: #{nerf_forward.1} parent=5 // pred_region
      %s6230 = ssub.s32 %s15, 2
      // Predicated region
      $region65: #{nerf_forward.1} parent=63 // pred_check
        %p6231 = pneg %p238
      $region66: #{nerf_forward.1} parent=63 // pred_check_branch
        %6233 = sbr.rel (%p6231) target = $region68
      $region67: #{nerf_forward.1} parent=63 // pred_region
        %s6234 = smul.u32 32, %s21
        %p6235 = scmp.lt.s32.totalorder %s6234, 255
        %s6236 = scalar_select %p6235, %s6234, 255
        %s6237 = smul.addr %s6236, 4
        %s6238 = scalar_lea.vmem %s9, %s6237
      $region68: #{nerf_forward.1} parent=63 // pred_fallthru
        _
    $region64: #{nerf_forward.1} parent=5 // pred_fallthru
      _
  $region6: #{nerf_forward.1} parent=0 // loop_footer
    %s19 = sadd.s32 1, %s15
  $region7: #{nerf_forward.1} parent=0 // loop_footer_branch
    %14 = sbr.rel target = $region3
  $region8: #{nerf_forward.1} parent=0 // loop_exit
    _

</llo_original>
